<compile_context>
chip_gen: v5e
topology: v5e:2x2
jax: 0.10.0
libtpu: 0.0.40
codegen_flags: <defaults>
</compile_context>

<pallas_src>
import functools

import numpy as np

import jax
import jax.numpy as jnp
from jax.experimental import pallas as pl
from jax.experimental.pallas import tpu as pltpu


# ---------------------------------------------------------------------------
# Fused Pallas kernel: conv1+pool -> conv2+pool -> fc1 -> (fc2)
# ---------------------------------------------------------------------------
def fused_cnn_kernel(p1_ref, mask_ref, w1m_ref, b1_ref, w2t_ref, b2_ref,
                     w1p_ref, bf1_ref, wf2_ref, bf2_ref, o_ref,
                     h1_ref, h2_ref, *, B, PW, H2, W2, E, feature):
    f32 = jnp.float32

    # ---- conv1: one matmul per 2x2 pool offset, pooled by elementwise max --
    # p1_ref[o] rows are already laid out in the zero-padded parity-decomposed
    # flat layout that conv2 consumes (see _row_maps / cnn_forward).
    w1m = w1m_ref[...]
    m = jnp.dot(p1_ref[0], w1m, preferred_element_type=f32)
    for o in range(1, 4):
        m = jnp.maximum(m, jnp.dot(p1_ref[o], w1m, preferred_element_type=f32))
    # bias + ReLU once, after the pooling max (bias identical across offsets);
    # mask re-zeroes the padding rows of the layout.
    h1_ref[...] = jnp.maximum(m + b1_ref[...], 0.0) * mask_ref[...]

    blk_rows = h1_ref.shape[0] // 4          # rows per parity block

    # ---- conv2 + 2x2 max-pool: 4 offsets x 9 taps as row-shifted matmuls ---
    h2m = None
    for a in range(2):                        # pool offset (rows)
        for c in range(2):                    # pool offset (cols)
            acc = None
            for dh in range(3):
                for dw in range(3):
                    pp = (a + dh) % 2
                    qq = (c + dw) % 2
                    i0 = (a + dh) // 2
                    j0 = (c + dw) // 2
                    start = (pp * 2 + qq) * blk_rows + (i0 * PW + j0) * B
                    tap = h1_ref[start:start + E, :]               # (E, C1)
                    t = jnp.dot(tap, w2t_ref[dh * 3 + dw],
                                preferred_element_type=f32)        # (E, C2)
                    acc = t if acc is None else acc + t
            h2m = acc if h2m is None else jnp.maximum(h2m, acc)
    h2_ref[...] = jnp.maximum(h2m + b2_ref[...], 0.0)

    # ---- fc1: sum over the H2*W2 positions (NCHW flatten folded into w1p) --
    acc1 = None
    for ho in range(H2):
        for wo in range(W2):
            s = (ho * PW + wo) * B
            xb = h2_ref[s:s + B, :]                                # (B, C2)
            t = jnp.dot(xb, w1p_ref[ho * W2 + wo],
                        preferred_element_type=f32)                # (B, 512)
            acc1 = t if acc1 is None else acc1 + t
    f1 = jnp.maximum(acc1 + bf1_ref[...], 0.0)

    if feature:
        o_ref[...] = f1
    else:
        o_ref[...] = (jnp.dot(f1, wf2_ref[...], preferred_element_type=f32)
                      + bf2_ref[...])


def fused_cnn_call(patches, mask, pp, *, B, H, W, feature):
    H1, W1 = H // 2, W // 2
    H2, W2 = H1 // 2, W1 // 2
    PH, PW = H1 // 2 + 1, W1 // 2 + 1
    R = 4 * PH * PW * B                       # padded parity-layout rows
    E = ((H2 - 1) * PW + W2) * B              # extended rows of conv2 output
    C1 = pp["wmat1"].shape[1]
    C2 = pp["w2taps"].shape[2]
    out_dim = pp["w1p"].shape[2] if feature else pp["wf2t"].shape[1]

    kern = functools.partial(fused_cnn_kernel, B=B, PW=PW, H2=H2, W2=W2,
                             E=E, feature=feature)
    vmem = pl.BlockSpec(memory_space=pltpu.MemorySpace.VMEM)
    return pl.pallas_call(
        kern,
        out_shape=jax.ShapeDtypeStruct((B, out_dim), jnp.float32),
        in_specs=[vmem] * 10,
        out_specs=vmem,
        scratch_shapes=[pltpu.VMEM((R, C1), jnp.float32),   # h1 (padded layout)
                        pltpu.VMEM((E, C2), jnp.float32)],  # h2 (extended rows)
    )(patches, mask, pp["wmat1"], pp["b1"], pp["w2taps"], pp["b2"],
      pp["w1p"], pp["bf1"], pp["wf2t"], pp["bf2"])


# ---------------------------------------------------------------------------
# One-time parameter preparation (all transposes / permutations hoisted here)
# ---------------------------------------------------------------------------
def prepare_params(params):
    w1, b1, w2, b2, fw1, fb1, fw2, fb2 = params
    C1 = w1.shape[0]                                   # 32
    C2 = w2.shape[0]                                   # 64
    wmat1 = jnp.transpose(w1.reshape(C1, -1))          # (Cin*9, C1)
    w2taps = jnp.transpose(w2, (2, 3, 1, 0)).reshape(9, w2.shape[1], C2)
    # fc1: torch flattens NCHW -> idx = c*(H2*W2) + (ho*W2 + wo)
    P = fw1.shape[1] // C2                             # H2*W2 positions
    w1p = jnp.transpose(fw1.reshape(fw1.shape[0], C2, P), (2, 1, 0))  # (P,C2,512)
    wf2t = jnp.transpose(fw2)                          # (512, num_classes)
    return dict(wmat1=wmat1, b1=b1.reshape(1, -1),
                w2taps=w2taps, b2=b2.reshape(1, -1),
                w1p=w1p, bf1=fb1.reshape(1, -1),
                wf2t=wf2t, bf2=fb2.reshape(1, -1))


# ---------------------------------------------------------------------------
# Static row maps for the zero-padded, parity-decomposed flat h1 layout.
# row = blk*PH*PW*B + (i*PW + j)*B + b ,  blk = parity(rr)*2 + parity(cc),
# (rr, cc) = (2i+p, 2j+q) index the zero-padded pooled conv1 output.
# ---------------------------------------------------------------------------
@functools.lru_cache(maxsize=None)
def _row_maps(B, H, W):
    H1, W1 = H // 2, W // 2
    PH, PW = H1 // 2 + 1, W1 // 2 + 1
    R = 4 * PH * PW * B
    b_idx = np.zeros(R, np.int32)
    h_idx = np.zeros(R, np.int32)
    w_idx = np.zeros(R, np.int32)
    mask = np.zeros((R, 1), np.float32)
    for p in range(2):
        for q in range(2):
            base = (p * 2 + q) * PH * PW * B
            for i in range(PH):
                for j in range(PW):
                    for b in range(B):
                        row = base + (i * PW + j) * B + b
                        rr, cc = 2 * i + p, 2 * j + q
                        if 1 <= rr <= H1 and 1 <= cc <= W1:
                            b_idx[row] = b
                            h_idx[row] = rr - 1
                            w_idx[row] = cc - 1
                            mask[row, 0] = 1.0
    return b_idx, h_idx, w_idx, mask


# ---------------------------------------------------------------------------
# Forward pass: tiny XLA glue (im2col of the input) + one fused Pallas kernel
# ---------------------------------------------------------------------------
def cnn_forward(x_nchw, pp, feature=False):
    B, Cin, H, W = x_nchw.shape
    assert H % 4 == 0 and W % 4 == 0, "spatial dims must be multiples of 4"
    H1, W1 = H // 2, W // 2

    x_nhwc = jnp.transpose(x_nchw, (0, 2, 3, 1))
    xp = jnp.pad(x_nhwc, ((0, 0), (1, 1), (1, 1), (0, 0)))

    # conv1 im2col at the pooled output positions, one tensor per pool offset
    offs = []
    for a in range(2):
        for c in range(2):
            taps = [xp[:, a + dh: a + dh + H: 2, c + dw: c + dw + W: 2, :]
                    for dh in range(3) for dw in range(3)]
            st = jnp.stack(taps, axis=-1)                 # (B,H1,W1,Cin,9)
            offs.append(st.reshape(B, H1, W1, -1))        # (B,H1,W1,Cin*9)
    pat = jnp.stack(offs, axis=0)                         # (4,B,H1,W1,Cin*9)

    # rearrange rows into the padded parity-decomposed flat layout
    b_idx, h_idx, w_idx, mask_np = _row_maps(B, H, W)
    patches = pat[:, b_idx, h_idx, w_idx, :]              # (4, R, Cin*9)
    mask = jnp.asarray(mask_np)

    return fused_cnn_call(patches, mask, pp, B=B, H=H, W=W, feature=feature)


# ---------------------------------------------------------------------------
# Pure-JAX reference (mirrors the PyTorch module) for validation
# ---------------------------------------------------------------------------
def reference_forward(x_nchw, params):
    (w1, b1, w2, b2, fw1, fb1, fw2, fb2) = params

    def conv(x, w, b):
        y = jax.lax.conv_general_dilated(
            x, w, (1, 1), ((1, 1), (1, 1)),
            dimension_numbers=("NCHW", "OIHW", "NCHW"))
        return y + b[None, :, None, None]

    def pool(x):
        B, C, H, W = x.shape
        return x.reshape(B, C, H // 2, 2, W // 2, 2).max(axis=(3, 5))

    y = pool(jnp.maximum(conv(x_nchw, w1, b1), 0.0))
    y = pool(jnp.maximum(conv(y, w2, b2), 0.0))
    y = y.reshape(y.shape[0], -1)
    y = jnp.maximum(y @ fw1.T + fb1, 0.0)
    return y @ fw2.T + fb2


# ---------------------------------------------------------------------------
if __name__ == "__main__":
    B, Cin, H, W, num_classes = 2, 1, 16, 16, 25
    fc1_in = 64 * (H // 4) * (W // 4)                     # 1024

    key = jax.random.PRNGKey(0)
    ks = jax.random.split(key, 9)
    params = (
        jax.random.normal(ks[0], (32, Cin, 3, 3), jnp.float32) * 0.1,      # conv1.w
        jax.random.normal(ks[1], (32,), jnp.float32) * 0.1,                # conv1.b
        jax.random.normal(ks[2], (64, 32, 3, 3), jnp.float32) * 0.1,       # conv2.w
        jax.random.normal(ks[3], (64,), jnp.float32) * 0.1,                # conv2.b
        jax.random.normal(ks[4], (512, fc1_in), jnp.float32) * 0.05,       # fc1.w
        jax.random.normal(ks[5], (512,), jnp.float32) * 0.05,              # fc1.b
        jax.random.normal(ks[6], (num_classes, 512), jnp.float32) * 0.05,  # fc2.w
        jax.random.normal(ks[7], (num_classes,), jnp.float32) * 0.05,      # fc2.b
    )
    x = jax.random.normal(ks[8], (B, Cin, H, W), jnp.float32)

    pp = prepare_params(params)                     # one-time weight prep
    fwd = jax.jit(functools.partial(cnn_forward, feature=False))
    out = jax.block_until_ready(fwd(x, pp))
    assert out.shape == (B, num_classes)

    ref = jax.block_until_ready(reference_forward(x, params))
    if not jnp.allclose(out, ref, rtol=5e-3, atol=5e-3):
        raise AssertionError(
            f"mismatch vs reference, max abs diff = {jnp.max(jnp.abs(out - ref))}")

    print("KERNEL_OK")
</pallas_src>

<mosaic_0001>
module attributes {stable_mosaic.version = 11 : i64} {
  func.func @fused_cnn_kernel(%arg0: memref<4x200x9xf32, #tpu.memory_space<vmem>>, %arg1: memref<200x1xf32, #tpu.memory_space<vmem>>, %arg2: memref<9x32xf32, #tpu.memory_space<vmem>>, %arg3: memref<1x32xf32, #tpu.memory_space<vmem>>, %arg4: memref<9x32x64xf32, #tpu.memory_space<vmem>>, %arg5: memref<1x64xf32, #tpu.memory_space<vmem>>, %arg6: memref<16x64x512xf32, #tpu.memory_space<vmem>>, %arg7: memref<1x512xf32, #tpu.memory_space<vmem>>, %arg8: memref<512x25xf32, #tpu.memory_space<vmem>>, %arg9: memref<1x25xf32, #tpu.memory_space<vmem>>, %arg10: memref<2x25xf32, #tpu.memory_space<vmem>>, %arg11: memref<200x32xf32, #tpu.memory_space<vmem>>, %arg12: memref<38x64xf32, #tpu.memory_space<vmem>>) attributes {dimension_semantics = [], scalar_prefetch = 0 : i64, scratch_operands = 2 : i64, tpu.core_type = #tpu.core_type<tc>} {
    %c0 = arith.constant 0 : index
    %c0_0 = arith.constant 0 : index
    %0 = vector.load %arg2[%c0, %c0_0] : memref<9x32xf32, #tpu.memory_space<vmem>>, vector<9x32xf32>
    %c0_1 = arith.constant 0 : index
    %c0_2 = arith.constant 0 : index
    %c0_3 = arith.constant 0 : index
    %1 = vector.load %arg0[%c0_1, %c0_2, %c0_3] : memref<4x200x9xf32, #tpu.memory_space<vmem>>, vector<1x200x9xf32>
    %2 = vector.shape_cast %1 : vector<1x200x9xf32> to vector<200x9xf32>
    %cst = arith.constant dense<0.000000e+00> : vector<200x32xf32>
    %3 = tpu.matmul %2, %0, %cst {dimension_numbers = #tpu.dot_dimension_numbers<[1], [0], [0], [1], [0, 0, 1, 1], [], []>} : vector<200x9xf32>, vector<9x32xf32>, vector<200x32xf32> -> vector<200x32xf32>
    %c1 = arith.constant 1 : index
    %c0_4 = arith.constant 0 : index
    %c0_5 = arith.constant 0 : index
    %4 = vector.load %arg0[%c1, %c0_4, %c0_5] : memref<4x200x9xf32, #tpu.memory_space<vmem>>, vector<1x200x9xf32>
    %5 = vector.shape_cast %4 : vector<1x200x9xf32> to vector<200x9xf32>
    %cst_6 = arith.constant dense<0.000000e+00> : vector<200x32xf32>
    %6 = tpu.matmul %5, %0, %cst_6 {dimension_numbers = #tpu.dot_dimension_numbers<[1], [0], [0], [1], [0, 0, 1, 1], [], []>} : vector<200x9xf32>, vector<9x32xf32>, vector<200x32xf32> -> vector<200x32xf32>
    %7 = arith.maximumf %3, %6 : vector<200x32xf32>
    %c2 = arith.constant 2 : index
    %c0_7 = arith.constant 0 : index
    %c0_8 = arith.constant 0 : index
    %8 = vector.load %arg0[%c2, %c0_7, %c0_8] : memref<4x200x9xf32, #tpu.memory_space<vmem>>, vector<1x200x9xf32>
    %9 = vector.shape_cast %8 : vector<1x200x9xf32> to vector<200x9xf32>
    %cst_9 = arith.constant dense<0.000000e+00> : vector<200x32xf32>
    %10 = tpu.matmul %9, %0, %cst_9 {dimension_numbers = #tpu.dot_dimension_numbers<[1], [0], [0], [1], [0, 0, 1, 1], [], []>} : vector<200x9xf32>, vector<9x32xf32>, vector<200x32xf32> -> vector<200x32xf32>
    %11 = arith.maximumf %7, %10 : vector<200x32xf32>
    %c3 = arith.constant 3 : index
    %c0_10 = arith.constant 0 : index
    %c0_11 = arith.constant 0 : index
    %12 = vector.load %arg0[%c3, %c0_10, %c0_11] : memref<4x200x9xf32, #tpu.memory_space<vmem>>, vector<1x200x9xf32>
    %13 = vector.shape_cast %12 : vector<1x200x9xf32> to vector<200x9xf32>
    %cst_12 = arith.constant dense<0.000000e+00> : vector<200x32xf32>
    %14 = tpu.matmul %13, %0, %cst_12 {dimension_numbers = #tpu.dot_dimension_numbers<[1], [0], [0], [1], [0, 0, 1, 1], [], []>} : vector<200x9xf32>, vector<9x32xf32>, vector<200x32xf32> -> vector<200x32xf32>
    %15 = arith.maximumf %11, %14 : vector<200x32xf32>
    %c0_13 = arith.constant 0 : index
    %c0_14 = arith.constant 0 : index
    %16 = vector.load %arg3[%c0_13, %c0_14] : memref<1x32xf32, #tpu.memory_space<vmem>>, vector<1x32xf32>
    %17 = vector.broadcast %16 : vector<1x32xf32> to vector<200x32xf32>
    %18 = arith.addf %15, %17 : vector<200x32xf32>
    %cst_15 = arith.constant 0.000000e+00 : f32
    %19 = vector.broadcast %cst_15 : f32 to vector<200x32xf32>
    %20 = arith.maximumf %18, %19 : vector<200x32xf32>
    %c0_16 = arith.constant 0 : index
    %c0_17 = arith.constant 0 : index
    %21 = vector.load %arg1[%c0_16, %c0_17] : memref<200x1xf32, #tpu.memory_space<vmem>>, vector<200x1xf32>
    %22 = vector.broadcast %21 : vector<200x1xf32> to vector<200x32xf32>
    %23 = arith.mulf %20, %22 : vector<200x32xf32>
    %c0_18 = arith.constant 0 : index
    %c0_19 = arith.constant 0 : index
    %24 = vector.load %arg11[%c0_18, %c0_19] : memref<200x32xf32, #tpu.memory_space<vmem>>, vector<200x32xf32>
    tpu.vector_store %arg11[%c0_18, %c0_19], %23 {strides = array<i32>} : memref<200x32xf32, #tpu.memory_space<vmem>>, vector<200x32xf32>,
    %c0_20 = arith.constant 0 : index
    %c0_21 = arith.constant 0 : index
    %25 = vector.load %arg11[%c0_20, %c0_21] : memref<200x32xf32, #tpu.memory_space<vmem>>, vector<38x32xf32>
    %c0_22 = arith.constant 0 : index
    %c0_23 = arith.constant 0 : index
    %c0_24 = arith.constant 0 : index
    %26 = vector.load %arg4[%c0_22, %c0_23, %c0_24] : memref<9x32x64xf32, #tpu.memory_space<vmem>>, vector<1x32x64xf32>
    %27 = vector.shape_cast %26 : vector<1x32x64xf32> to vector<32x64xf32>
    %cst_25 = arith.constant dense<0.000000e+00> : vector<38x64xf32>
    %28 = tpu.matmul %25, %27, %cst_25 {dimension_numbers = #tpu.dot_dimension_numbers<[1], [0], [0], [1], [0, 0, 1, 1], [], []>} : vector<38x32xf32>, vector<32x64xf32>, vector<38x64xf32> -> vector<38x64xf32>
    %c50 = arith.constant 50 : index
    %c0_26 = arith.constant 0 : index
    %29 = vector.load %arg11[%c50, %c0_26] : memref<200x32xf32, #tpu.memory_space<vmem>>, vector<38x32xf32>
    %c1_27 = arith.constant 1 : index
    %c0_28 = arith.constant 0 : index
    %c0_29 = arith.constant 0 : index
    %30 = vector.load %arg4[%c1_27, %c0_28, %c0_29] : memref<9x32x64xf32, #tpu.memory_space<vmem>>, vector<1x32x64xf32>
    %31 = vector.shape_cast %30 : vector<1x32x64xf32> to vector<32x64xf32>
    %cst_30 = arith.constant dense<0.000000e+00> : vector<38x64xf32>
    %32 = tpu.matmul %29, %31, %cst_30 {dimension_numbers = #tpu.dot_dimension_numbers<[1], [0], [0], [1], [0, 0, 1, 1], [], []>} : vector<38x32xf32>, vector<32x64xf32>, vector<38x64xf32> -> vector<38x64xf32>
    %33 = arith.addf %28, %32 : vector<38x64xf32>
    %c2_31 = arith.constant 2 : index
    %c0_32 = arith.constant 0 : index
    %34 = vector.load %arg11[%c2_31, %c0_32] : memref<200x32xf32, #tpu.memory_space<vmem>>, vector<38x32xf32>
    %c2_33 = arith.constant 2 : index
    %c0_34 = arith.constant 0 : index
    %c0_35 = arith.constant 0 : index
    %35 = vector.load %arg4[%c2_33, %c0_34, %c0_35] : memref<9x32x64xf32, #tpu.memory_space<vmem>>, vector<1x32x64xf32>
    %36 = vector.shape_cast %35 : vector<1x32x64xf32> to vector<32x64xf32>
    %cst_36 = arith.constant dense<0.000000e+00> : vector<38x64xf32>
    %37 = tpu.matmul %34, %36, %cst_36 {dimension_numbers = #tpu.dot_dimension_numbers<[1], [0], [0], [1], [0, 0, 1, 1], [], []>} : vector<38x32xf32>, vector<32x64xf32>, vector<38x64xf32> -> vector<38x64xf32>
    %38 = arith.addf %33, %37 : vector<38x64xf32>
    %c100 = arith.constant 100 : index
    %c0_37 = arith.constant 0 : index
    %39 = vector.load %arg11[%c100, %c0_37] : memref<200x32xf32, #tpu.memory_space<vmem>>, vector<38x32xf32>
    %c3_38 = arith.constant 3 : index
    %c0_39 = arith.constant 0 : index
    %c0_40 = arith.constant 0 : index
    %40 = vector.load %arg4[%c3_38, %c0_39, %c0_40] : memref<9x32x64xf32, #tpu.memory_space<vmem>>, vector<1x32x64xf32>
    %41 = vector.shape_cast %40 : vector<1x32x64xf32> to vector<32x64xf32>
    %cst_41 = arith.constant dense<0.000000e+00> : vector<38x64xf32>
    %42 = tpu.matmul %39, %41, %cst_41 {dimension_numbers = #tpu.dot_dimension_numbers<[1], [0], [0], [1], [0, 0, 1, 1], [], []>} : vector<38x32xf32>, vector<32x64xf32>, vector<38x64xf32> -> vector<38x64xf32>
    %43 = arith.addf %38, %42 : vector<38x64xf32>
    %c150 = arith.constant 150 : index
    %c0_42 = arith.constant 0 : index
    %44 = vector.load %arg11[%c150, %c0_42] : memref<200x32xf32, #tpu.memory_space<vmem>>, vector<38x32xf32>
    %c4 = arith.constant 4 : index
    %c0_43 = arith.constant 0 : index
    %c0_44 = arith.constant 0 : index
    %45 = vector.load %arg4[%c4, %c0_43, %c0_44] : memref<9x32x64xf32, #tpu.memory_space<vmem>>, vector<1x32x64xf32>
    %46 = vector.shape_cast %45 : vector<1x32x64xf32> to vector<32x64xf32>
    %cst_45 = arith.constant dense<0.000000e+00> : vector<38x64xf32>
    %47 = tpu.matmul %44, %46, %cst_45 {dimension_numbers = #tpu.dot_dimension_numbers<[1], [0], [0], [1], [0, 0, 1, 1], [], []>} : vector<38x32xf32>, vector<32x64xf32>, vector<38x64xf32> -> vector<38x64xf32>
    %48 = arith.addf %43, %47 : vector<38x64xf32>
    %c102 = arith.constant 102 : index
    %c0_46 = arith.constant 0 : index
    %49 = vector.load %arg11[%c102, %c0_46] : memref<200x32xf32, #tpu.memory_space<vmem>>, vector<38x32xf32>
    %c5 = arith.constant 5 : index
    %c0_47 = arith.constant 0 : index
    %c0_48 = arith.constant 0 : index
    %50 = vector.load %arg4[%c5, %c0_47, %c0_48] : memref<9x32x64xf32, #tpu.memory_space<vmem>>, vector<1x32x64xf32>
    %51 = vector.shape_cast %50 : vector<1x32x64xf32> to vector<32x64xf32>
    %cst_49 = arith.constant dense<0.000000e+00> : vector<38x64xf32>
    %52 = tpu.matmul %49, %51, %cst_49 {dimension_numbers = #tpu.dot_dimension_numbers<[1], [0], [0], [1], [0, 0, 1, 1], [], []>} : vector<38x32xf32>, vector<32x64xf32>, vector<38x64xf32> -> vector<38x64xf32>
    %53 = arith.addf %48, %52 : vector<38x64xf32>
    %c10 = arith.constant 10 : index
    %c0_50 = arith.constant 0 : index
    %54 = vector.load %arg11[%c10, %c0_50] : memref<200x32xf32, #tpu.memory_space<vmem>>, vector<38x32xf32>
    %c6 = arith.constant 6 : index
    %c0_51 = arith.constant 0 : index
    %c0_52 = arith.constant 0 : index
    %55 = vector.load %arg4[%c6, %c0_51, %c0_52] : memref<9x32x64xf32, #tpu.memory_space<vmem>>, vector<1x32x64xf32>
    %56 = vector.shape_cast %55 : vector<1x32x64xf32> to vector<32x64xf32>
    %cst_53 = arith.constant dense<0.000000e+00> : vector<38x64xf32>
    %57 = tpu.matmul %54, %56, %cst_53 {dimension_numbers = #tpu.dot_dimension_numbers<[1], [0], [0], [1], [0, 0, 1, 1], [], []>} : vector<38x32xf32>, vector<32x64xf32>, vector<38x64xf32> -> vector<38x64xf32>
    %58 = arith.addf %53, %57 : vector<38x64xf32>
    %c60 = arith.constant 60 : index
    %c0_54 = arith.constant 0 : index
    %59 = vector.load %arg11[%c60, %c0_54] : memref<200x32xf32, #tpu.memory_space<vmem>>, vector<38x32xf32>
    %c7 = arith.constant 7 : index
    %c0_55 = arith.constant 0 : index
    %c0_56 = arith.constant 0 : index
    %60 = vector.load %arg4[%c7, %c0_55, %c0_56] : memref<9x32x64xf32, #tpu.memory_space<vmem>>, vector<1x32x64xf32>
    %61 = vector.shape_cast %60 : vector<1x32x64xf32> to vector<32x64xf32>
    %cst_57 = arith.constant dense<0.000000e+00> : vector<38x64xf32>
    %62 = tpu.matmul %59, %61, %cst_57 {dimension_numbers = #tpu.dot_dimension_numbers<[1], [0], [0], [1], [0, 0, 1, 1], [], []>} : vector<38x32xf32>, vector<32x64xf32>, vector<38x64xf32> -> vector<38x64xf32>
    %63 = arith.addf %58, %62 : vector<38x64xf32>
    %c12 = arith.constant 12 : index
    %c0_58 = arith.constant 0 : index
    %64 = vector.load %arg11[%c12, %c0_58] : memref<200x32xf32, #tpu.memory_space<vmem>>, vector<38x32xf32>
    %c8 = arith.constant 8 : index
    %c0_59 = arith.constant 0 : index
    %c0_60 = arith.constant 0 : index
    %65 = vector.load %arg4[%c8, %c0_59, %c0_60] : memref<9x32x64xf32, #tpu.memory_space<vmem>>, vector<1x32x64xf32>
    %66 = vector.shape_cast %65 : vector<1x32x64xf32> to vector<32x64xf32>
    %cst_61 = arith.constant dense<0.000000e+00> : vector<38x64xf32>
    %67 = tpu.matmul %64, %66, %cst_61 {dimension_numbers = #tpu.dot_dimension_numbers<[1], [0], [0], [1], [0, 0, 1, 1], [], []>} : vector<38x32xf32>, vector<32x64xf32>, vector<38x64xf32> -> vector<38x64xf32>
    %68 = arith.addf %63, %67 : vector<38x64xf32>
    %c50_62 = arith.constant 50 : index
    %c0_63 = arith.constant 0 : index
    %69 = vector.load %arg11[%c50_62, %c0_63] : memref<200x32xf32, #tpu.memory_space<vmem>>, vector<38x32xf32>
    %c0_64 = arith.constant 0 : index
    %c0_65 = arith.constant 0 : index
    %c0_66 = arith.constant 0 : index
    %70 = vector.load %arg4[%c0_64, %c0_65, %c0_66] : memref<9x32x64xf32, #tpu.memory_space<vmem>>, vector<1x32x64xf32>
    %71 = vector.shape_cast %70 : vector<1x32x64xf32> to vector<32x64xf32>
    %cst_67 = arith.constant dense<0.000000e+00> : vector<38x64xf32>
    %72 = tpu.matmul %69, %71, %cst_67 {dimension_numbers = #tpu.dot_dimension_numbers<[1], [0], [0], [1], [0, 0, 1, 1], [], []>} : vector<38x32xf32>, vector<32x64xf32>, vector<38x64xf32> -> vector<38x64xf32>
    %c2_68 = arith.constant 2 : index
    %c0_69 = arith.constant 0 : index
    %73 = vector.load %arg11[%c2_68, %c0_69] : memref<200x32xf32, #tpu.memory_space<vmem>>, vector<38x32xf32>
    %c1_70 = arith.constant 1 : index
    %c0_71 = arith.constant 0 : index
    %c0_72 = arith.constant 0 : index
    %74 = vector.load %arg4[%c1_70, %c0_71, %c0_72] : memref<9x32x64xf32, #tpu.memory_space<vmem>>, vector<1x32x64xf32>
    %75 = vector.shape_cast %74 : vector<1x32x64xf32> to vector<32x64xf32>
    %cst_73 = arith.constant dense<0.000000e+00> : vector<38x64xf32>
    %76 = tpu.matmul %73, %75, %cst_73 {dimension_numbers = #tpu.dot_dimension_numbers<[1], [0], [0], [1], [0, 0, 1, 1], [], []>} : vector<38x32xf32>, vector<32x64xf32>, vector<38x64xf32> -> vector<38x64xf32>
    %77 = arith.addf %72, %76 : vector<38x64xf32>
    %c52 = arith.constant 52 : index
    %c0_74 = arith.constant 0 : index
    %78 = vector.load %arg11[%c52, %c0_74] : memref<200x32xf32, #tpu.memory_space<vmem>>, vector<38x32xf32>
    %c2_75 = arith.constant 2 : index
    %c0_76 = arith.constant 0 : index
    %c0_77 = arith.constant 0 : index
    %79 = vector.load %arg4[%c2_75, %c0_76, %c0_77] : memref<9x32x64xf32, #tpu.memory_space<vmem>>, vector<1x32x64xf32>
    %80 = vector.shape_cast %79 : vector<1x32x64xf32> to vector<32x64xf32>
    %cst_78 = arith.constant dense<0.000000e+00> : vector<38x64xf32>
    %81 = tpu.matmul %78, %80, %cst_78 {dimension_numbers = #tpu.dot_dimension_numbers<[1], [0], [0], [1], [0, 0, 1, 1], [], []>} : vector<38x32xf32>, vector<32x64xf32>, vector<38x64xf32> -> vector<38x64xf32>
    %82 = arith.addf %77, %81 : vector<38x64xf32>
    %c150_79 = arith.constant 150 : index
    %c0_80 = arith.constant 0 : index
    %83 = vector.load %arg11[%c150_79, %c0_80] : memref<200x32xf32, #tpu.memory_space<vmem>>, vector<38x32xf32>
    %c3_81 = arith.constant 3 : index
    %c0_82 = arith.constant 0 : index
    %c0_83 = arith.constant 0 : index
    %84 = vector.load %arg4[%c3_81, %c0_82, %c0_83] : memref<9x32x64xf32, #tpu.memory_space<vmem>>, vector<1x32x64xf32>
    %85 = vector.shape_cast %84 : vector<1x32x64xf32> to vector<32x64xf32>
    %cst_84 = arith.constant dense<0.000000e+00> : vector<38x64xf32>
    %86 = tpu.matmul %83, %85, %cst_84 {dimension_numbers = #tpu.dot_dimension_numbers<[1], [0], [0], [1], [0, 0, 1, 1], [], []>} : vector<38x32xf32>, vector<32x64xf32>, vector<38x64xf32> -> vector<38x64xf32>
    %87 = arith.addf %82, %86 : vector<38x64xf32>
    %c102_85 = arith.constant 102 : index
    %c0_86 = arith.constant 0 : index
    %88 = vector.load %arg11[%c102_85, %c0_86] : memref<200x32xf32, #tpu.memory_space<vmem>>, vector<38x32xf32>
    %c4_87 = arith.constant 4 : index
    %c0_88 = arith.constant 0 : index
    %c0_89 = arith.constant 0 : index
    %89 = vector.load %arg4[%c4_87, %c0_88, %c0_89] : memref<9x32x64xf32, #tpu.memory_space<vmem>>, vector<1x32x64xf32>
    %90 = vector.shape_cast %89 : vector<1x32x64xf32> to vector<32x64xf32>
    %cst_90 = arith.constant dense<0.000000e+00> : vector<38x64xf32>
    %91 = tpu.matmul %88, %90, %cst_90 {dimension_numbers = #tpu.dot_dimension_numbers<[1], [0], [0], [1], [0, 0, 1, 1], [], []>} : vector<38x32xf32>, vector<32x64xf32>, vector<38x64xf32> -> vector<38x64xf32>
    %92 = arith.addf %87, %91 : vector<38x64xf32>
    %c152 = arith.constant 152 : index
    %c0_91 = arith.constant 0 : index
    %93 = vector.load %arg11[%c152, %c0_91] : memref<200x32xf32, #tpu.memory_space<vmem>>, vector<38x32xf32>
    %c5_92 = arith.constant 5 : index
    %c0_93 = arith.constant 0 : index
    %c0_94 = arith.constant 0 : index
    %94 = vector.load %arg4[%c5_92, %c0_93, %c0_94] : memref<9x32x64xf32, #tpu.memory_space<vmem>>, vector<1x32x64xf32>
    %95 = vector.shape_cast %94 : vector<1x32x64xf32> to vector<32x64xf32>
    %cst_95 = arith.constant dense<0.000000e+00> : vector<38x64xf32>
    %96 = tpu.matmul %93, %95, %cst_95 {dimension_numbers = #tpu.dot_dimension_numbers<[1], [0], [0], [1], [0, 0, 1, 1], [], []>} : vector<38x32xf32>, vector<32x64xf32>, vector<38x64xf32> -> vector<38x64xf32>
    %97 = arith.addf %92, %96 : vector<38x64xf32>
    %c60_96 = arith.constant 60 : index
    %c0_97 = arith.constant 0 : index
    %98 = vector.load %arg11[%c60_96, %c0_97] : memref<200x32xf32, #tpu.memory_space<vmem>>, vector<38x32xf32>
    %c6_98 = arith.constant 6 : index
    %c0_99 = arith.constant 0 : index
    %c0_100 = arith.constant 0 : index
    %99 = vector.load %arg4[%c6_98, %c0_99, %c0_100] : memref<9x32x64xf32, #tpu.memory_space<vmem>>, vector<1x32x64xf32>
    %100 = vector.shape_cast %99 : vector<1x32x64xf32> to vector<32x64xf32>
    %cst_101 = arith.constant dense<0.000000e+00> : vector<38x64xf32>
    %101 = tpu.matmul %98, %100, %cst_101 {dimension_numbers = #tpu.dot_dimension_numbers<[1], [0], [0], [1], [0, 0, 1, 1], [], []>} : vector<38x32xf32>, vector<32x64xf32>, vector<38x64xf32> -> vector<38x64xf32>
    %102 = arith.addf %97, %101 : vector<38x64xf32>
    %c12_102 = arith.constant 12 : index
    %c0_103 = arith.constant 0 : index
    %103 = vector.load %arg11[%c12_102, %c0_103] : memref<200x32xf32, #tpu.memory_space<vmem>>, vector<38x32xf32>
    %c7_104 = arith.constant 7 : index
    %c0_105 = arith.constant 0 : index
    %c0_106 = arith.constant 0 : index
    %104 = vector.load %arg4[%c7_104, %c0_105, %c0_106] : memref<9x32x64xf32, #tpu.memory_space<vmem>>, vector<1x32x64xf32>
    %105 = vector.shape_cast %104 : vector<1x32x64xf32> to vector<32x64xf32>
    %cst_107 = arith.constant dense<0.000000e+00> : vector<38x64xf32>
    %106 = tpu.matmul %103, %105, %cst_107 {dimension_numbers = #tpu.dot_dimension_numbers<[1], [0], [0], [1], [0, 0, 1, 1], [], []>} : vector<38x32xf32>, vector<32x64xf32>, vector<38x64xf32> -> vector<38x64xf32>
    %107 = arith.addf %102, %106 : vector<38x64xf32>
    %c62 = arith.constant 62 : index
    %c0_108 = arith.constant 0 : index
    %108 = vector.load %arg11[%c62, %c0_108] : memref<200x32xf32, #tpu.memory_space<vmem>>, vector<38x32xf32>
    %c8_109 = arith.constant 8 : index
    %c0_110 = arith.constant 0 : index
    %c0_111 = arith.constant 0 : index
    %109 = vector.load %arg4[%c8_109, %c0_110, %c0_111] : memref<9x32x64xf32, #tpu.memory_space<vmem>>, vector<1x32x64xf32>
    %110 = vector.shape_cast %109 : vector<1x32x64xf32> to vector<32x64xf32>
    %cst_112 = arith.constant dense<0.000000e+00> : vector<38x64xf32>
    %111 = tpu.matmul %108, %110, %cst_112 {dimension_numbers = #tpu.dot_dimension_numbers<[1], [0], [0], [1], [0, 0, 1, 1], [], []>} : vector<38x32xf32>, vector<32x64xf32>, vector<38x64xf32> -> vector<38x64xf32>
    %112 = arith.addf %107, %111 : vector<38x64xf32>
    %113 = arith.maximumf %68, %112 : vector<38x64xf32>
    %c100_113 = arith.constant 100 : index
    %c0_114 = arith.constant 0 : index
    %114 = vector.load %arg11[%c100_113, %c0_114] : memref<200x32xf32, #tpu.memory_space<vmem>>, vector<38x32xf32>
    %c0_115 = arith.constant 0 : index
    %c0_116 = arith.constant 0 : index
    %c0_117 = arith.constant 0 : index
    %115 = vector.load %arg4[%c0_115, %c0_116, %c0_117] : memref<9x32x64xf32, #tpu.memory_space<vmem>>, vector<1x32x64xf32>
    %116 = vector.shape_cast %115 : vector<1x32x64xf32> to vector<32x64xf32>
    %cst_118 = arith.constant dense<0.000000e+00> : vector<38x64xf32>
    %117 = tpu.matmul %114, %116, %cst_118 {dimension_numbers = #tpu.dot_dimension_numbers<[1], [0], [0], [1], [0, 0, 1, 1], [], []>} : vector<38x32xf32>, vector<32x64xf32>, vector<38x64xf32> -> vector<38x64xf32>
    %c150_119 = arith.constant 150 : index
    %c0_120 = arith.constant 0 : index
    %118 = vector.load %arg11[%c150_119, %c0_120] : memref<200x32xf32, #tpu.memory_space<vmem>>, vector<38x32xf32>
    %c1_121 = arith.constant 1 : index
    %c0_122 = arith.constant 0 : index
    %c0_123 = arith.constant 0 : index
    %119 = vector.load %arg4[%c1_121, %c0_122, %c0_123] : memref<9x32x64xf32, #tpu.memory_space<vmem>>, vector<1x32x64xf32>
    %120 = vector.shape_cast %119 : vector<1x32x64xf32> to vector<32x64xf32>
    %cst_124 = arith.constant dense<0.000000e+00> : vector<38x64xf32>
    %121 = tpu.matmul %118, %120, %cst_124 {dimension_numbers = #tpu.dot_dimension_numbers<[1], [0], [0], [1], [0, 0, 1, 1], [], []>} : vector<38x32xf32>, vector<32x64xf32>, vector<38x64xf32> -> vector<38x64xf32>
    %122 = arith.addf %117, %121 : vector<38x64xf32>
    %c102_125 = arith.constant 102 : index
    %c0_126 = arith.constant 0 : index
    %123 = vector.load %arg11[%c102_125, %c0_126] : memref<200x32xf32, #tpu.memory_space<vmem>>, vector<38x32xf32>
    %c2_127 = arith.constant 2 : index
    %c0_128 = arith.constant 0 : index
    %c0_129 = arith.constant 0 : index
    %124 = vector.load %arg4[%c2_127, %c0_128, %c0_129] : memref<9x32x64xf32, #tpu.memory_space<vmem>>, vector<1x32x64xf32>
    %125 = vector.shape_cast %124 : vector<1x32x64xf32> to vector<32x64xf32>
    %cst_130 = arith.constant dense<0.000000e+00> : vector<38x64xf32>
    %126 = tpu.matmul %123, %125, %cst_130 {dimension_numbers = #tpu.dot_dimension_numbers<[1], [0], [0], [1], [0, 0, 1, 1], [], []>} : vector<38x32xf32>, vector<32x64xf32>, vector<38x64xf32> -> vector<38x64xf32>
    %127 = arith.addf %122, %126 : vector<38x64xf32>
    %c10_131 = arith.constant 10 : index
    %c0_132 = arith.constant 0 : index
    %128 = vector.load %arg11[%c10_131, %c0_132] : memref<200x32xf32, #tpu.memory_space<vmem>>, vector<38x32xf32>
    %c3_133 = arith.constant 3 : index
    %c0_134 = arith.constant 0 : index
    %c0_135 = arith.constant 0 : index
    %129 = vector.load %arg4[%c3_133, %c0_134, %c0_135] : memref<9x32x64xf32, #tpu.memory_space<vmem>>, vector<1x32x64xf32>
    %130 = vector.shape_cast %129 : vector<1x32x64xf32> to vector<32x64xf32>
    %cst_136 = arith.constant dense<0.000000e+00> : vector<38x64xf32>
    %131 = tpu.matmul %128, %130, %cst_136 {dimension_numbers = #tpu.dot_dimension_numbers<[1], [0], [0], [1], [0, 0, 1, 1], [], []>} : vector<38x32xf32>, vector<32x64xf32>, vector<38x64xf32> -> vector<38x64xf32>
    %132 = arith.addf %127, %131 : vector<38x64xf32>
    %c60_137 = arith.constant 60 : index
    %c0_138 = arith.constant 0 : index
    %133 = vector.load %arg11[%c60_137, %c0_138] : memref<200x32xf32, #tpu.memory_space<vmem>>, vector<38x32xf32>
    %c4_139 = arith.constant 4 : index
    %c0_140 = arith.constant 0 : index
    %c0_141 = arith.constant 0 : index
    %134 = vector.load %arg4[%c4_139, %c0_140, %c0_141] : memref<9x32x64xf32, #tpu.memory_space<vmem>>, vector<1x32x64xf32>
    %135 = vector.shape_cast %134 : vector<1x32x64xf32> to vector<32x64xf32>
    %cst_142 = arith.constant dense<0.000000e+00> : vector<38x64xf32>
    %136 = tpu.matmul %133, %135, %cst_142 {dimension_numbers = #tpu.dot_dimension_numbers<[1], [0], [0], [1], [0, 0, 1, 1], [], []>} : vector<38x32xf32>, vector<32x64xf32>, vector<38x64xf32> -> vector<38x64xf32>
    %137 = arith.addf %132, %136 : vector<38x64xf32>
    %c12_143 = arith.constant 12 : index
    %c0_144 = arith.constant 0 : index
    %138 = vector.load %arg11[%c12_143, %c0_144] : memref<200x32xf32, #tpu.memory_space<vmem>>, vector<38x32xf32>
    %c5_145 = arith.constant 5 : index
    %c0_146 = arith.constant 0 : index
    %c0_147 = arith.constant 0 : index
    %139 = vector.load %arg4[%c5_145, %c0_146, %c0_147] : memref<9x32x64xf32, #tpu.memory_space<vmem>>, vector<1x32x64xf32>
    %140 = vector.shape_cast %139 : vector<1x32x64xf32> to vector<32x64xf32>
    %cst_148 = arith.constant dense<0.000000e+00> : vector<38x64xf32>
    %141 = tpu.matmul %138, %140, %cst_148 {dimension_numbers = #tpu.dot_dimension_numbers<[1], [0], [0], [1], [0, 0, 1, 1], [], []>} : vector<38x32xf32>, vector<32x64xf32>, vector<38x64xf32> -> vector<38x64xf32>
    %142 = arith.addf %137, %141 : vector<38x64xf32>
    %c110 = arith.constant 110 : index
    %c0_149 = arith.constant 0 : index
    %143 = vector.load %arg11[%c110, %c0_149] : memref<200x32xf32, #tpu.memory_space<vmem>>, vector<38x32xf32>
    %c6_150 = arith.constant 6 : index
    %c0_151 = arith.constant 0 : index
    %c0_152 = arith.constant 0 : index
    %144 = vector.load %arg4[%c6_150, %c0_151, %c0_152] : memref<9x32x64xf32, #tpu.memory_space<vmem>>, vector<1x32x64xf32>
    %145 = vector.shape_cast %144 : vector<1x32x64xf32> to vector<32x64xf32>
    %cst_153 = arith.constant dense<0.000000e+00> : vector<38x64xf32>
    %146 = tpu.matmul %143, %145, %cst_153 {dimension_numbers = #tpu.dot_dimension_numbers<[1], [0], [0], [1], [0, 0, 1, 1], [], []>} : vector<38x32xf32>, vector<32x64xf32>, vector<38x64xf32> -> vector<38x64xf32>
    %147 = arith.addf %142, %146 : vector<38x64xf32>
    %c160 = arith.constant 160 : index
    %c0_154 = arith.constant 0 : index
    %148 = vector.load %arg11[%c160, %c0_154] : memref<200x32xf32, #tpu.memory_space<vmem>>, vector<38x32xf32>
    %c7_155 = arith.constant 7 : index
    %c0_156 = arith.constant 0 : index
    %c0_157 = arith.constant 0 : index
    %149 = vector.load %arg4[%c7_155, %c0_156, %c0_157] : memref<9x32x64xf32, #tpu.memory_space<vmem>>, vector<1x32x64xf32>
    %150 = vector.shape_cast %149 : vector<1x32x64xf32> to vector<32x64xf32>
    %cst_158 = arith.constant dense<0.000000e+00> : vector<38x64xf32>
    %151 = tpu.matmul %148, %150, %cst_158 {dimension_numbers = #tpu.dot_dimension_numbers<[1], [0], [0], [1], [0, 0, 1, 1], [], []>} : vector<38x32xf32>, vector<32x64xf32>, vector<38x64xf32> -> vector<38x64xf32>
    %152 = arith.addf %147, %151 : vector<38x64xf32>
    %c112 = arith.constant 112 : index
    %c0_159 = arith.constant 0 : index
    %153 = vector.load %arg11[%c112, %c0_159] : memref<200x32xf32, #tpu.memory_space<vmem>>, vector<38x32xf32>
    %c8_160 = arith.constant 8 : index
    %c0_161 = arith.constant 0 : index
    %c0_162 = arith.constant 0 : index
    %154 = vector.load %arg4[%c8_160, %c0_161, %c0_162] : memref<9x32x64xf32, #tpu.memory_space<vmem>>, vector<1x32x64xf32>
    %155 = vector.shape_cast %154 : vector<1x32x64xf32> to vector<32x64xf32>
    %cst_163 = arith.constant dense<0.000000e+00> : vector<38x64xf32>
    %156 = tpu.matmul %153, %155, %cst_163 {dimension_numbers = #tpu.dot_dimension_numbers<[1], [0], [0], [1], [0, 0, 1, 1], [], []>} : vector<38x32xf32>, vector<32x64xf32>, vector<38x64xf32> -> vector<38x64xf32>
    %157 = arith.addf %152, %156 : vector<38x64xf32>
    %158 = arith.maximumf %113, %157 : vector<38x64xf32>
    %c150_164 = arith.constant 150 : index
    %c0_165 = arith.constant 0 : index
    %159 = vector.load %arg11[%c150_164, %c0_165] : memref<200x32xf32, #tpu.memory_space<vmem>>, vector<38x32xf32>
    %c0_166 = arith.constant 0 : index
    %c0_167 = arith.constant 0 : index
    %c0_168 = arith.constant 0 : index
    %160 = vector.load %arg4[%c0_166, %c0_167, %c0_168] : memref<9x32x64xf32, #tpu.memory_space<vmem>>, vector<1x32x64xf32>
    %161 = vector.shape_cast %160 : vector<1x32x64xf32> to vector<32x64xf32>
    %cst_169 = arith.constant dense<0.000000e+00> : vector<38x64xf32>
    %162 = tpu.matmul %159, %161, %cst_169 {dimension_numbers = #tpu.dot_dimension_numbers<[1], [0], [0], [1], [0, 0, 1, 1], [], []>} : vector<38x32xf32>, vector<32x64xf32>, vector<38x64xf32> -> vector<38x64xf32>
    %c102_170 = arith.constant 102 : index
    %c0_171 = arith.constant 0 : index
    %163 = vector.load %arg11[%c102_170, %c0_171] : memref<200x32xf32, #tpu.memory_space<vmem>>, vector<38x32xf32>
    %c1_172 = arith.constant 1 : index
    %c0_173 = arith.constant 0 : index
    %c0_174 = arith.constant 0 : index
    %164 = vector.load %arg4[%c1_172, %c0_173, %c0_174] : memref<9x32x64xf32, #tpu.memory_space<vmem>>, vector<1x32x64xf32>
    %165 = vector.shape_cast %164 : vector<1x32x64xf32> to vector<32x64xf32>
    %cst_175 = arith.constant dense<0.000000e+00> : vector<38x64xf32>
    %166 = tpu.matmul %163, %165, %cst_175 {dimension_numbers = #tpu.dot_dimension_numbers<[1], [0], [0], [1], [0, 0, 1, 1], [], []>} : vector<38x32xf32>, vector<32x64xf32>, vector<38x64xf32> -> vector<38x64xf32>
    %167 = arith.addf %162, %166 : vector<38x64xf32>
    %c152_176 = arith.constant 152 : index
    %c0_177 = arith.constant 0 : index
    %168 = vector.load %arg11[%c152_176, %c0_177] : memref<200x32xf32, #tpu.memory_space<vmem>>, vector<38x32xf32>
    %c2_178 = arith.constant 2 : index
    %c0_179 = arith.constant 0 : index
    %c0_180 = arith.constant 0 : index
    %169 = vector.load %arg4[%c2_178, %c0_179, %c0_180] : memref<9x32x64xf32, #tpu.memory_space<vmem>>, vector<1x32x64xf32>
    %170 = vector.shape_cast %169 : vector<1x32x64xf32> to vector<32x64xf32>
    %cst_181 = arith.constant dense<0.000000e+00> : vector<38x64xf32>
    %171 = tpu.matmul %168, %170, %cst_181 {dimension_numbers = #tpu.dot_dimension_numbers<[1], [0], [0], [1], [0, 0, 1, 1], [], []>} : vector<38x32xf32>, vector<32x64xf32>, vector<38x64xf32> -> vector<38x64xf32>
    %172 = arith.addf %167, %171 : vector<38x64xf32>
    %c60_182 = arith.constant 60 : index
    %c0_183 = arith.constant 0 : index
    %173 = vector.load %arg11[%c60_182, %c0_183] : memref<200x32xf32, #tpu.memory_space<vmem>>, vector<38x32xf32>
    %c3_184 = arith.constant 3 : index
    %c0_185 = arith.constant 0 : index
    %c0_186 = arith.constant 0 : index
    %174 = vector.load %arg4[%c3_184, %c0_185, %c0_186] : memref<9x32x64xf32, #tpu.memory_space<vmem>>, vector<1x32x64xf32>
    %175 = vector.shape_cast %174 : vector<1x32x64xf32> to vector<32x64xf32>
    %cst_187 = arith.constant dense<0.000000e+00> : vector<38x64xf32>
    %176 = tpu.matmul %173, %175, %cst_187 {dimension_numbers = #tpu.dot_dimension_numbers<[1], [0], [0], [1], [0, 0, 1, 1], [], []>} : vector<38x32xf32>, vector<32x64xf32>, vector<38x64xf32> -> vector<38x64xf32>
    %177 = arith.addf %172, %176 : vector<38x64xf32>
    %c12_188 = arith.constant 12 : index
    %c0_189 = arith.constant 0 : index
    %178 = vector.load %arg11[%c12_188, %c0_189] : memref<200x32xf32, #tpu.memory_space<vmem>>, vector<38x32xf32>
    %c4_190 = arith.constant 4 : index
    %c0_191 = arith.constant 0 : index
    %c0_192 = arith.constant 0 : index
    %179 = vector.load %arg4[%c4_190, %c0_191, %c0_192] : memref<9x32x64xf32, #tpu.memory_space<vmem>>, vector<1x32x64xf32>
    %180 = vector.shape_cast %179 : vector<1x32x64xf32> to vector<32x64xf32>
    %cst_193 = arith.constant dense<0.000000e+00> : vector<38x64xf32>
    %181 = tpu.matmul %178, %180, %cst_193 {dimension_numbers = #tpu.dot_dimension_numbers<[1], [0], [0], [1], [0, 0, 1, 1], [], []>} : vector<38x32xf32>, vector<32x64xf32>, vector<38x64xf32> -> vector<38x64xf32>
    %182 = arith.addf %177, %181 : vector<38x64xf32>
    %c62_194 = arith.constant 62 : index
    %c0_195 = arith.constant 0 : index
    %183 = vector.load %arg11[%c62_194, %c0_195] : memref<200x32xf32, #tpu.memory_space<vmem>>, vector<38x32xf32>
    %c5_196 = arith.constant 5 : index
    %c0_197 = arith.constant 0 : index
    %c0_198 = arith.constant 0 : index
    %184 = vector.load %arg4[%c5_196, %c0_197, %c0_198] : memref<9x32x64xf32, #tpu.memory_space<vmem>>, vector<1x32x64xf32>
    %185 = vector.shape_cast %184 : vector<1x32x64xf32> to vector<32x64xf32>
    %cst_199 = arith.constant dense<0.000000e+00> : vector<38x64xf32>
    %186 = tpu.matmul %183, %185, %cst_199 {dimension_numbers = #tpu.dot_dimension_numbers<[1], [0], [0], [1], [0, 0, 1, 1], [], []>} : vector<38x32xf32>, vector<32x64xf32>, vector<38x64xf32> -> vector<38x64xf32>
    %187 = arith.addf %182, %186 : vector<38x64xf32>
    %c160_200 = arith.constant 160 : index
    %c0_201 = arith.constant 0 : index
    %188 = vector.load %arg11[%c160_200, %c0_201] : memref<200x32xf32, #tpu.memory_space<vmem>>, vector<38x32xf32>
    %c6_202 = arith.constant 6 : index
    %c0_203 = arith.constant 0 : index
    %c0_204 = arith.constant 0 : index
    %189 = vector.load %arg4[%c6_202, %c0_203, %c0_204] : memref<9x32x64xf32, #tpu.memory_space<vmem>>, vector<1x32x64xf32>
    %190 = vector.shape_cast %189 : vector<1x32x64xf32> to vector<32x64xf32>
    %cst_205 = arith.constant dense<0.000000e+00> : vector<38x64xf32>
    %191 = tpu.matmul %188, %190, %cst_205 {dimension_numbers = #tpu.dot_dimension_numbers<[1], [0], [0], [1], [0, 0, 1, 1], [], []>} : vector<38x32xf32>, vector<32x64xf32>, vector<38x64xf32> -> vector<38x64xf32>
    %192 = arith.addf %187, %191 : vector<38x64xf32>
    %c112_206 = arith.constant 112 : index
    %c0_207 = arith.constant 0 : index
    %193 = vector.load %arg11[%c112_206, %c0_207] : memref<200x32xf32, #tpu.memory_space<vmem>>, vector<38x32xf32>
    %c7_208 = arith.constant 7 : index
    %c0_209 = arith.constant 0 : index
    %c0_210 = arith.constant 0 : index
    %194 = vector.load %arg4[%c7_208, %c0_209, %c0_210] : memref<9x32x64xf32, #tpu.memory_space<vmem>>, vector<1x32x64xf32>
    %195 = vector.shape_cast %194 : vector<1x32x64xf32> to vector<32x64xf32>
    %cst_211 = arith.constant dense<0.000000e+00> : vector<38x64xf32>
    %196 = tpu.matmul %193, %195, %cst_211 {dimension_numbers = #tpu.dot_dimension_numbers<[1], [0], [0], [1], [0, 0, 1, 1], [], []>} : vector<38x32xf32>, vector<32x64xf32>, vector<38x64xf32> -> vector<38x64xf32>
    %197 = arith.addf %192, %196 : vector<38x64xf32>
    %c162 = arith.constant 162 : index
    %c0_212 = arith.constant 0 : index
    %198 = vector.load %arg11[%c162, %c0_212] : memref<200x32xf32, #tpu.memory_space<vmem>>, vector<38x32xf32>
    %c8_213 = arith.constant 8 : index
    %c0_214 = arith.constant 0 : index
    %c0_215 = arith.constant 0 : index
    %199 = vector.load %arg4[%c8_213, %c0_214, %c0_215] : memref<9x32x64xf32, #tpu.memory_space<vmem>>, vector<1x32x64xf32>
    %200 = vector.shape_cast %199 : vector<1x32x64xf32> to vector<32x64xf32>
    %cst_216 = arith.constant dense<0.000000e+00> : vector<38x64xf32>
    %201 = tpu.matmul %198, %200, %cst_216 {dimension_numbers = #tpu.dot_dimension_numbers<[1], [0], [0], [1], [0, 0, 1, 1], [], []>} : vector<38x32xf32>, vector<32x64xf32>, vector<38x64xf32> -> vector<38x64xf32>
    %202 = arith.addf %197, %201 : vector<38x64xf32>
    %203 = arith.maximumf %158, %202 : vector<38x64xf32>
    %c0_217 = arith.constant 0 : index
    %c0_218 = arith.constant 0 : index
    %204 = vector.load %arg5[%c0_217, %c0_218] : memref<1x64xf32, #tpu.memory_space<vmem>>, vector<1x64xf32>
    %205 = vector.broadcast %204 : vector<1x64xf32> to vector<38x64xf32>
    %206 = arith.addf %203, %205 : vector<38x64xf32>
    %cst_219 = arith.constant 0.000000e+00 : f32
    %207 = vector.broadcast %cst_219 : f32 to vector<38x64xf32>
    %208 = arith.maximumf %206, %207 : vector<38x64xf32>
    %c0_220 = arith.constant 0 : index
    %c0_221 = arith.constant 0 : index
    %209 = vector.load %arg12[%c0_220, %c0_221] : memref<38x64xf32, #tpu.memory_space<vmem>>, vector<38x64xf32>
    tpu.vector_store %arg12[%c0_220, %c0_221], %208 {strides = array<i32>} : memref<38x64xf32, #tpu.memory_space<vmem>>, vector<38x64xf32>,
    %c0_222 = arith.constant 0 : index
    %c0_223 = arith.constant 0 : index
    %210 = vector.load %arg12[%c0_222, %c0_223] : memref<38x64xf32, #tpu.memory_space<vmem>>, vector<2x64xf32>
    %c0_224 = arith.constant 0 : index
    %c0_225 = arith.constant 0 : index
    %c0_226 = arith.constant 0 : index
    %211 = vector.load %arg6[%c0_224, %c0_225, %c0_226] : memref<16x64x512xf32, #tpu.memory_space<vmem>>, vector<1x64x512xf32>
    %212 = vector.shape_cast %211 : vector<1x64x512xf32> to vector<64x512xf32>
    %cst_227 = arith.constant dense<0.000000e+00> : vector<2x512xf32>
    %213 = tpu.matmul %210, %212, %cst_227 {dimension_numbers = #tpu.dot_dimension_numbers<[1], [0], [0], [1], [0, 0, 1, 1], [], []>} : vector<2x64xf32>, vector<64x512xf32>, vector<2x512xf32> -> vector<2x512xf32>
    %c2_228 = arith.constant 2 : index
    %c0_229 = arith.constant 0 : index
    %214 = vector.load %arg12[%c2_228, %c0_229] : memref<38x64xf32, #tpu.memory_space<vmem>>, vector<2x64xf32>
    %c1_230 = arith.constant 1 : index
    %c0_231 = arith.constant 0 : index
    %c0_232 = arith.constant 0 : index
    %215 = vector.load %arg6[%c1_230, %c0_231, %c0_232] : memref<16x64x512xf32, #tpu.memory_space<vmem>>, vector<1x64x512xf32>
    %216 = vector.shape_cast %215 : vector<1x64x512xf32> to vector<64x512xf32>
    %cst_233 = arith.constant dense<0.000000e+00> : vector<2x512xf32>
    %217 = tpu.matmul %214, %216, %cst_233 {dimension_numbers = #tpu.dot_dimension_numbers<[1], [0], [0], [1], [0, 0, 1, 1], [], []>} : vector<2x64xf32>, vector<64x512xf32>, vector<2x512xf32> -> vector<2x512xf32>
    %218 = arith.addf %213, %217 : vector<2x512xf32>
    %c4_234 = arith.constant 4 : index
    %c0_235 = arith.constant 0 : index
    %219 = vector.load %arg12[%c4_234, %c0_235] : memref<38x64xf32, #tpu.memory_space<vmem>>, vector<2x64xf32>
    %c2_236 = arith.constant 2 : index
    %c0_237 = arith.constant 0 : index
    %c0_238 = arith.constant 0 : index
    %220 = vector.load %arg6[%c2_236, %c0_237, %c0_238] : memref<16x64x512xf32, #tpu.memory_space<vmem>>, vector<1x64x512xf32>
    %221 = vector.shape_cast %220 : vector<1x64x512xf32> to vector<64x512xf32>
    %cst_239 = arith.constant dense<0.000000e+00> : vector<2x512xf32>
    %222 = tpu.matmul %219, %221, %cst_239 {dimension_numbers = #tpu.dot_dimension_numbers<[1], [0], [0], [1], [0, 0, 1, 1], [], []>} : vector<2x64xf32>, vector<64x512xf32>, vector<2x512xf32> -> vector<2x512xf32>
    %223 = arith.addf %218, %222 : vector<2x512xf32>
    %c6_240 = arith.constant 6 : index
    %c0_241 = arith.constant 0 : index
    %224 = vector.load %arg12[%c6_240, %c0_241] : memref<38x64xf32, #tpu.memory_space<vmem>>, vector<2x64xf32>
    %c3_242 = arith.constant 3 : index
    %c0_243 = arith.constant 0 : index
    %c0_244 = arith.constant 0 : index
    %225 = vector.load %arg6[%c3_242, %c0_243, %c0_244] : memref<16x64x512xf32, #tpu.memory_space<vmem>>, vector<1x64x512xf32>
    %226 = vector.shape_cast %225 : vector<1x64x512xf32> to vector<64x512xf32>
    %cst_245 = arith.constant dense<0.000000e+00> : vector<2x512xf32>
    %227 = tpu.matmul %224, %226, %cst_245 {dimension_numbers = #tpu.dot_dimension_numbers<[1], [0], [0], [1], [0, 0, 1, 1], [], []>} : vector<2x64xf32>, vector<64x512xf32>, vector<2x512xf32> -> vector<2x512xf32>
    %228 = arith.addf %223, %227 : vector<2x512xf32>
    %c10_246 = arith.constant 10 : index
    %c0_247 = arith.constant 0 : index
    %229 = vector.load %arg12[%c10_246, %c0_247] : memref<38x64xf32, #tpu.memory_space<vmem>>, vector<2x64xf32>
    %c4_248 = arith.constant 4 : index
    %c0_249 = arith.constant 0 : index
    %c0_250 = arith.constant 0 : index
    %230 = vector.load %arg6[%c4_248, %c0_249, %c0_250] : memref<16x64x512xf32, #tpu.memory_space<vmem>>, vector<1x64x512xf32>
    %231 = vector.shape_cast %230 : vector<1x64x512xf32> to vector<64x512xf32>
    %cst_251 = arith.constant dense<0.000000e+00> : vector<2x512xf32>
    %232 = tpu.matmul %229, %231, %cst_251 {dimension_numbers = #tpu.dot_dimension_numbers<[1], [0], [0], [1], [0, 0, 1, 1], [], []>} : vector<2x64xf32>, vector<64x512xf32>, vector<2x512xf32> -> vector<2x512xf32>
    %233 = arith.addf %228, %232 : vector<2x512xf32>
    %c12_252 = arith.constant 12 : index
    %c0_253 = arith.constant 0 : index
    %234 = vector.load %arg12[%c12_252, %c0_253] : memref<38x64xf32, #tpu.memory_space<vmem>>, vector<2x64xf32>
    %c5_254 = arith.constant 5 : index
    %c0_255 = arith.constant 0 : index
    %c0_256 = arith.constant 0 : index
    %235 = vector.load %arg6[%c5_254, %c0_255, %c0_256] : memref<16x64x512xf32, #tpu.memory_space<vmem>>, vector<1x64x512xf32>
    %236 = vector.shape_cast %235 : vector<1x64x512xf32> to vector<64x512xf32>
    %cst_257 = arith.constant dense<0.000000e+00> : vector<2x512xf32>
    %237 = tpu.matmul %234, %236, %cst_257 {dimension_numbers = #tpu.dot_dimension_numbers<[1], [0], [0], [1], [0, 0, 1, 1], [], []>} : vector<2x64xf32>, vector<64x512xf32>, vector<2x512xf32> -> vector<2x512xf32>
    %238 = arith.addf %233, %237 : vector<2x512xf32>
    %c14 = arith.constant 14 : index
    %c0_258 = arith.constant 0 : index
    %239 = vector.load %arg12[%c14, %c0_258] : memref<38x64xf32, #tpu.memory_space<vmem>>, vector<2x64xf32>
    %c6_259 = arith.constant 6 : index
    %c0_260 = arith.constant 0 : index
    %c0_261 = arith.constant 0 : index
    %240 = vector.load %arg6[%c6_259, %c0_260, %c0_261] : memref<16x64x512xf32, #tpu.memory_space<vmem>>, vector<1x64x512xf32>
    %241 = vector.shape_cast %240 : vector<1x64x512xf32> to vector<64x512xf32>
    %cst_262 = arith.constant dense<0.000000e+00> : vector<2x512xf32>
    %242 = tpu.matmul %239, %241, %cst_262 {dimension_numbers = #tpu.dot_dimension_numbers<[1], [0], [0], [1], [0, 0, 1, 1], [], []>} : vector<2x64xf32>, vector<64x512xf32>, vector<2x512xf32> -> vector<2x512xf32>
    %243 = arith.addf %238, %242 : vector<2x512xf32>
    %c16 = arith.constant 16 : index
    %c0_263 = arith.constant 0 : index
    %244 = vector.load %arg12[%c16, %c0_263] : memref<38x64xf32, #tpu.memory_space<vmem>>, vector<2x64xf32>
    %c7_264 = arith.constant 7 : index
    %c0_265 = arith.constant 0 : index
    %c0_266 = arith.constant 0 : index
    %245 = vector.load %arg6[%c7_264, %c0_265, %c0_266] : memref<16x64x512xf32, #tpu.memory_space<vmem>>, vector<1x64x512xf32>
    %246 = vector.shape_cast %245 : vector<1x64x512xf32> to vector<64x512xf32>
    %cst_267 = arith.constant dense<0.000000e+00> : vector<2x512xf32>
    %247 = tpu.matmul %244, %246, %cst_267 {dimension_numbers = #tpu.dot_dimension_numbers<[1], [0], [0], [1], [0, 0, 1, 1], [], []>} : vector<2x64xf32>, vector<64x512xf32>, vector<2x512xf32> -> vector<2x512xf32>
    %248 = arith.addf %243, %247 : vector<2x512xf32>
    %c20 = arith.constant 20 : index
    %c0_268 = arith.constant 0 : index
    %249 = vector.load %arg12[%c20, %c0_268] : memref<38x64xf32, #tpu.memory_space<vmem>>, vector<2x64xf32>
    %c8_269 = arith.constant 8 : index
    %c0_270 = arith.constant 0 : index
    %c0_271 = arith.constant 0 : index
    %250 = vector.load %arg6[%c8_269, %c0_270, %c0_271] : memref<16x64x512xf32, #tpu.memory_space<vmem>>, vector<1x64x512xf32>
    %251 = vector.shape_cast %250 : vector<1x64x512xf32> to vector<64x512xf32>
    %cst_272 = arith.constant dense<0.000000e+00> : vector<2x512xf32>
    %252 = tpu.matmul %249, %251, %cst_272 {dimension_numbers = #tpu.dot_dimension_numbers<[1], [0], [0], [1], [0, 0, 1, 1], [], []>} : vector<2x64xf32>, vector<64x512xf32>, vector<2x512xf32> -> vector<2x512xf32>
    %253 = arith.addf %248, %252 : vector<2x512xf32>
    %c22 = arith.constant 22 : index
    %c0_273 = arith.constant 0 : index
    %254 = vector.load %arg12[%c22, %c0_273] : memref<38x64xf32, #tpu.memory_space<vmem>>, vector<2x64xf32>
    %c9 = arith.constant 9 : index
    %c0_274 = arith.constant 0 : index
    %c0_275 = arith.constant 0 : index
    %255 = vector.load %arg6[%c9, %c0_274, %c0_275] : memref<16x64x512xf32, #tpu.memory_space<vmem>>, vector<1x64x512xf32>
    %256 = vector.shape_cast %255 : vector<1x64x512xf32> to vector<64x512xf32>
    %cst_276 = arith.constant dense<0.000000e+00> : vector<2x512xf32>
    %257 = tpu.matmul %254, %256, %cst_276 {dimension_numbers = #tpu.dot_dimension_numbers<[1], [0], [0], [1], [0, 0, 1, 1], [], []>} : vector<2x64xf32>, vector<64x512xf32>, vector<2x512xf32> -> vector<2x512xf32>
    %258 = arith.addf %253, %257 : vector<2x512xf32>
    %c24 = arith.constant 24 : index
    %c0_277 = arith.constant 0 : index
    %259 = vector.load %arg12[%c24, %c0_277] : memref<38x64xf32, #tpu.memory_space<vmem>>, vector<2x64xf32>
    %c10_278 = arith.constant 10 : index
    %c0_279 = arith.constant 0 : index
    %c0_280 = arith.constant 0 : index
    %260 = vector.load %arg6[%c10_278, %c0_279, %c0_280] : memref<16x64x512xf32, #tpu.memory_space<vmem>>, vector<1x64x512xf32>
    %261 = vector.shape_cast %260 : vector<1x64x512xf32> to vector<64x512xf32>
    %cst_281 = arith.constant dense<0.000000e+00> : vector<2x512xf32>
    %262 = tpu.matmul %259, %261, %cst_281 {dimension_numbers = #tpu.dot_dimension_numbers<[1], [0], [0], [1], [0, 0, 1, 1], [], []>} : vector<2x64xf32>, vector<64x512xf32>, vector<2x512xf32> -> vector<2x512xf32>
    %263 = arith.addf %258, %262 : vector<2x512xf32>
    %c26 = arith.constant 26 : index
    %c0_282 = arith.constant 0 : index
    %264 = vector.load %arg12[%c26, %c0_282] : memref<38x64xf32, #tpu.memory_space<vmem>>, vector<2x64xf32>
    %c11 = arith.constant 11 : index
    %c0_283 = arith.constant 0 : index
    %c0_284 = arith.constant 0 : index
    %265 = vector.load %arg6[%c11, %c0_283, %c0_284] : memref<16x64x512xf32, #tpu.memory_space<vmem>>, vector<1x64x512xf32>
    %266 = vector.shape_cast %265 : vector<1x64x512xf32> to vector<64x512xf32>
    %cst_285 = arith.constant dense<0.000000e+00> : vector<2x512xf32>
    %267 = tpu.matmul %264, %266, %cst_285 {dimension_numbers = #tpu.dot_dimension_numbers<[1], [0], [0], [1], [0, 0, 1, 1], [], []>} : vector<2x64xf32>, vector<64x512xf32>, vector<2x512xf32> -> vector<2x512xf32>
    %268 = arith.addf %263, %267 : vector<2x512xf32>
    %c30 = arith.constant 30 : index
    %c0_286 = arith.constant 0 : index
    %269 = vector.load %arg12[%c30, %c0_286] : memref<38x64xf32, #tpu.memory_space<vmem>>, vector<2x64xf32>
    %c12_287 = arith.constant 12 : index
    %c0_288 = arith.constant 0 : index
    %c0_289 = arith.constant 0 : index
    %270 = vector.load %arg6[%c12_287, %c0_288, %c0_289] : memref<16x64x512xf32, #tpu.memory_space<vmem>>, vector<1x64x512xf32>
    %271 = vector.shape_cast %270 : vector<1x64x512xf32> to vector<64x512xf32>
    %cst_290 = arith.constant dense<0.000000e+00> : vector<2x512xf32>
    %272 = tpu.matmul %269, %271, %cst_290 {dimension_numbers = #tpu.dot_dimension_numbers<[1], [0], [0], [1], [0, 0, 1, 1], [], []>} : vector<2x64xf32>, vector<64x512xf32>, vector<2x512xf32> -> vector<2x512xf32>
    %273 = arith.addf %268, %272 : vector<2x512xf32>
    %c32 = arith.constant 32 : index
    %c0_291 = arith.constant 0 : index
    %274 = vector.load %arg12[%c32, %c0_291] : memref<38x64xf32, #tpu.memory_space<vmem>>, vector<2x64xf32>
    %c13 = arith.constant 13 : index
    %c0_292 = arith.constant 0 : index
    %c0_293 = arith.constant 0 : index
    %275 = vector.load %arg6[%c13, %c0_292, %c0_293] : memref<16x64x512xf32, #tpu.memory_space<vmem>>, vector<1x64x512xf32>
    %276 = vector.shape_cast %275 : vector<1x64x512xf32> to vector<64x512xf32>
    %cst_294 = arith.constant dense<0.000000e+00> : vector<2x512xf32>
    %277 = tpu.matmul %274, %276, %cst_294 {dimension_numbers = #tpu.dot_dimension_numbers<[1], [0], [0], [1], [0, 0, 1, 1], [], []>} : vector<2x64xf32>, vector<64x512xf32>, vector<2x512xf32> -> vector<2x512xf32>
    %278 = arith.addf %273, %277 : vector<2x512xf32>
    %c34 = arith.constant 34 : index
    %c0_295 = arith.constant 0 : index
    %279 = vector.load %arg12[%c34, %c0_295] : memref<38x64xf32, #tpu.memory_space<vmem>>, vector<2x64xf32>
    %c14_296 = arith.constant 14 : index
    %c0_297 = arith.constant 0 : index
    %c0_298 = arith.constant 0 : index
    %280 = vector.load %arg6[%c14_296, %c0_297, %c0_298] : memref<16x64x512xf32, #tpu.memory_space<vmem>>, vector<1x64x512xf32>
    %281 = vector.shape_cast %280 : vector<1x64x512xf32> to vector<64x512xf32>
    %cst_299 = arith.constant dense<0.000000e+00> : vector<2x512xf32>
    %282 = tpu.matmul %279, %281, %cst_299 {dimension_numbers = #tpu.dot_dimension_numbers<[1], [0], [0], [1], [0, 0, 1, 1], [], []>} : vector<2x64xf32>, vector<64x512xf32>, vector<2x512xf32> -> vector<2x512xf32>
    %283 = arith.addf %278, %282 : vector<2x512xf32>
    %c36 = arith.constant 36 : index
    %c0_300 = arith.constant 0 : index
    %284 = vector.load %arg12[%c36, %c0_300] : memref<38x64xf32, #tpu.memory_space<vmem>>, vector<2x64xf32>
    %c15 = arith.constant 15 : index
    %c0_301 = arith.constant 0 : index
    %c0_302 = arith.constant 0 : index
    %285 = vector.load %arg6[%c15, %c0_301, %c0_302] : memref<16x64x512xf32, #tpu.memory_space<vmem>>, vector<1x64x512xf32>
    %286 = vector.shape_cast %285 : vector<1x64x512xf32> to vector<64x512xf32>
    %cst_303 = arith.constant dense<0.000000e+00> : vector<2x512xf32>
    %287 = tpu.matmul %284, %286, %cst_303 {dimension_numbers = #tpu.dot_dimension_numbers<[1], [0], [0], [1], [0, 0, 1, 1], [], []>} : vector<2x64xf32>, vector<64x512xf32>, vector<2x512xf32> -> vector<2x512xf32>
    %288 = arith.addf %283, %287 : vector<2x512xf32>
    %c0_304 = arith.constant 0 : index
    %c0_305 = arith.constant 0 : index
    %289 = vector.load %arg7[%c0_304, %c0_305] : memref<1x512xf32, #tpu.memory_space<vmem>>, vector<1x512xf32>
    %290 = vector.broadcast %289 : vector<1x512xf32> to vector<2x512xf32>
    %291 = arith.addf %288, %290 : vector<2x512xf32>
    %cst_306 = arith.constant 0.000000e+00 : f32
    %292 = vector.broadcast %cst_306 : f32 to vector<2x512xf32>
    %293 = arith.maximumf %291, %292 : vector<2x512xf32>
    %c0_307 = arith.constant 0 : index
    %c0_308 = arith.constant 0 : index
    %294 = vector.load %arg8[%c0_307, %c0_308] : memref<512x25xf32, #tpu.memory_space<vmem>>, vector<512x25xf32>
    %cst_309 = arith.constant dense<0.000000e+00> : vector<2x25xf32>
    %295 = tpu.matmul %293, %294, %cst_309 {dimension_numbers = #tpu.dot_dimension_numbers<[1], [0], [0], [1], [0, 0, 1, 1], [], []>} : vector<2x512xf32>, vector<512x25xf32>, vector<2x25xf32> -> vector<2x25xf32>
    %c0_310 = arith.constant 0 : index
    %c0_311 = arith.constant 0 : index
    %296 = vector.load %arg9[%c0_310, %c0_311] : memref<1x25xf32, #tpu.memory_space<vmem>>, vector<1x25xf32>
    %297 = vector.broadcast %296 : vector<1x25xf32> to vector<2x25xf32>
    %298 = arith.addf %295, %297 : vector<2x25xf32>
    %c0_312 = arith.constant 0 : index
    %c0_313 = arith.constant 0 : index
    %299 = vector.load %arg10[%c0_312, %c0_313] : memref<2x25xf32, #tpu.memory_space<vmem>>, vector<2x25xf32>
    tpu.vector_store %arg10[%c0_312, %c0_313], %298 {strides = array<i32>} : memref<2x25xf32, #tpu.memory_space<vmem>>, vector<2x25xf32>,
    return
  }
}

</mosaic_0001>

<llo_original>
// kernel: cnn_forward.1
$region0: #{cnn_forward.1}
  #allocation0 [shape = 'u32[]', space=smem, size = 0x4, offset = 0x4, fixed_abs, tag = 'smem constant byte address 0x4 - core index']
  #allocation1 [shape = 'u32[72,128]{1,0:T(1,128)}', space=vmem, size = 0x9000, scoped, tag = 'internal scratch']
  #allocation2 [shape = 'f32[200,32]{1,0:T(8,128)}', space=vmem, size = 0x19000, scoped, tag = 'scratch operand']
  #allocation3 [shape = 'f32[38,64]{1,0:T(8,128)}', space=vmem, size = 0x5000, scoped, tag = 'scratch operand']
  %s0 = inlined_call_operand.vmem [shape: f32[4,200,9], index: 0, kind: input, shape index: {}]
  %s1 = inlined_call_operand.vmem [shape: f32[200,1], index: 1, kind: input, shape index: {}]
  %s2 = inlined_call_operand.vmem [shape: f32[9,32], index: 2, kind: input, shape index: {}]
  %s3 = inlined_call_operand.vmem [shape: f32[1,32], index: 3, kind: input, shape index: {}]
  %s4 = inlined_call_operand.vmem [shape: f32[9,32,64], index: 4, kind: input, shape index: {}]
  %s5 = inlined_call_operand.vmem [shape: f32[1,64], index: 5, kind: input, shape index: {}]
  %s6 = inlined_call_operand.vmem [shape: f32[16,64,512], index: 6, kind: input, shape index: {}]
  %s7 = inlined_call_operand.vmem [shape: f32[1,512], index: 7, kind: input, shape index: {}]
  %s8 = inlined_call_operand.vmem [shape: f32[512,25], index: 8, kind: input, shape index: {}]
  %s9 = inlined_call_operand.vmem [shape: f32[1,25], index: 9, kind: input, shape index: {}]
  %s10 = inlined_call_operand.hbm [shape: f32[2,25], index: 10, kind: output, shape index: {}]
  %s11 = sld [smem:[#allocation0]]
  $region50: #{cnn_forward.1} parent=0
    _
  %s13 = ssub.s32 1, %s11
  %s14 = scalar_select 0, %s13, %s11
  $region1: #{cnn_forward.1} parent=0
    #allocation4 [shape = 'u8[1024]{0}', space=vmem, size = 0x400, scoped, tag = 'output window, operand 0, single buffered']
    #allocation5 [shape = 's32[1]{0}', space=sflag, size = 0x4, scoped, tag = 'scoped memory for cnn_forward.1']
    %15 = vsyncpa [#allocation5], 0
    // Predicated region
    $region2: #{cnn_forward.1} parent=1 // pred_check
      _
    $region3: #{cnn_forward.1} parent=1 // pred_check_branch
      %17 = sbr.rel (0) target = $region5
    $region4: #{cnn_forward.1} parent=1 // pred_region
      _
    $region5: #{cnn_forward.1} parent=1 // pred_fallthru
      _
    // Predicated region
    $region6: #{cnn_forward.1} parent=1 // pred_check
      _
    $region7: #{cnn_forward.1} parent=1 // pred_check_branch
      %19 = sbr.rel (0) target = $region9
    $region8: #{cnn_forward.1} parent=1 // pred_region
      _
    $region9: #{cnn_forward.1} parent=1 // pred_fallthru
      _
    // Predicated region
    $region10: #{cnn_forward.1} parent=1 // pred_check
      _
    $region11: #{cnn_forward.1} parent=1 // pred_check_branch
      %21 = sbr.rel (0) target = $region13
    $region12: #{cnn_forward.1} parent=1 // pred_region
      _
    $region13: #{cnn_forward.1} parent=1 // pred_fallthru
      _
    // Predicated region
    $region14: #{cnn_forward.1} parent=1 // pred_check
      _
    $region15: #{cnn_forward.1} parent=1 // pred_check_branch
      %23 = sbr.rel (0) target = $region17
    $region16: #{cnn_forward.1} parent=1 // pred_region
      _
    $region17: #{cnn_forward.1} parent=1 // pred_fallthru
      _
    // Predicated region
    $region18: #{cnn_forward.1} parent=1 // pred_check
      _
    $region19: #{cnn_forward.1} parent=1 // pred_check_branch
      %25 = sbr.rel (0) target = $region21
    $region20: #{cnn_forward.1} parent=1 // pred_region
      _
    $region21: #{cnn_forward.1} parent=1 // pred_fallthru
      _
    // Predicated region
    $region22: #{cnn_forward.1} parent=1 // pred_check
      _
    $region23: #{cnn_forward.1} parent=1 // pred_check_branch
      %27 = sbr.rel (0) target = $region25
    $region24: #{cnn_forward.1} parent=1 // pred_region
      _
    $region25: #{cnn_forward.1} parent=1 // pred_fallthru
      _
    // Predicated region
    $region26: #{cnn_forward.1} parent=1 // pred_check
      _
    $region27: #{cnn_forward.1} parent=1 // pred_check_branch
      %29 = sbr.rel (0) target = $region29
    $region28: #{cnn_forward.1} parent=1 // pred_region
      _
    $region29: #{cnn_forward.1} parent=1 // pred_fallthru
      _
    // Predicated region
    $region30: #{cnn_forward.1} parent=1 // pred_check
      _
    $region31: #{cnn_forward.1} parent=1 // pred_check_branch
      %31 = sbr.rel (0) target = $region33
    $region32: #{cnn_forward.1} parent=1 // pred_region
      _
    $region33: #{cnn_forward.1} parent=1 // pred_fallthru
      _
    // Predicated region
    $region34: #{cnn_forward.1} parent=1 // pred_check
      _
    $region35: #{cnn_forward.1} parent=1 // pred_check_branch
      %33 = sbr.rel (0) target = $region37
    $region36: #{cnn_forward.1} parent=1 // pred_region
      _
    $region37: #{cnn_forward.1} parent=1 // pred_fallthru
      _
    // Predicated region
    $region38: #{cnn_forward.1} parent=1 // pred_check
      _
    $region39: #{cnn_forward.1} parent=1 // pred_check_branch
      %35 = sbr.rel (0) target = $region41
    $region40: #{cnn_forward.1} parent=1 // pred_region
      _
    $region41: #{cnn_forward.1} parent=1 // pred_fallthru
      _
    %v36 = vld [vmem:[%s2] sm:$0xff]
    %v37 = vld [vmem:[%s2 + $0x8] sm:$0x1]
    %v38 = vld [vmem:[%s0] sm:$0xff]
    %v39 = vld [vmem:[%s0 + $0x8] sm:$0xff]
    %v40 = vld [vmem:[%s0 + $0x10] sm:$0xff]
    %v41 = vld [vmem:[%s0 + $0x18] sm:$0xff]
    %v42 = vld [vmem:[%s0 + $0x20] sm:$0xff]
    %v43 = vld [vmem:[%s0 + $0x28] sm:$0xff]
    %v44 = vld [vmem:[%s0 + $0x30] sm:$0xff]
    %v45 = vld [vmem:[%s0 + $0x38] sm:$0xff]
    %v46 = vld [vmem:[%s0 + $0x40] sm:$0xff]
    %v47 = vld [vmem:[%s0 + $0x48] sm:$0xff]
    %v48 = vld [vmem:[%s0 + $0x50] sm:$0xff]
    %v49 = vld [vmem:[%s0 + $0x58] sm:$0xff]
    %v50 = vld [vmem:[%s0 + $0x60] sm:$0xff]
    %v51 = vld [vmem:[%s0 + $0x68] sm:$0xff]
    %v52 = vld [vmem:[%s0 + $0x70] sm:$0xff]
    %v53 = vld [vmem:[%s0 + $0x78] sm:$0xff]
    %v54 = vld [vmem:[%s0 + $0x80] sm:$0xff]
    %v55 = vld [vmem:[%s0 + $0x88] sm:$0xff]
    %v56 = vld [vmem:[%s0 + $0x90] sm:$0xff]
    %v57 = vld [vmem:[%s0 + $0x98] sm:$0xff]
    %v58 = vld [vmem:[%s0 + $0xa0] sm:$0xff]
    %v59 = vld [vmem:[%s0 + $0xa8] sm:$0xff]
    %v60 = vld [vmem:[%s0 + $0xb0] sm:$0xff]
    %v61 = vld [vmem:[%s0 + $0xb8] sm:$0xff]
    %v62 = vld [vmem:[%s0 + $0xc0] sm:$0xff]
    %vm63 = vcmask 72704
    %v65 = vsel %vm63, %v38, 0
    %v68 = vsel %vm63, %v39, 0
    %v71 = vsel %vm63, %v40, 0
    %v74 = vsel %vm63, %v41, 0
    %v77 = vsel %vm63, %v42, 0
    %v80 = vsel %vm63, %v43, 0
    %v83 = vsel %vm63, %v44, 0
    %v86 = vsel %vm63, %v45, 0
    %v89 = vsel %vm63, %v46, 0
    %v92 = vsel %vm63, %v47, 0
    %v95 = vsel %vm63, %v48, 0
    %v98 = vsel %vm63, %v49, 0
    %v101 = vsel %vm63, %v50, 0
    %v104 = vsel %vm63, %v51, 0
    %v107 = vsel %vm63, %v52, 0
    %v110 = vsel %vm63, %v53, 0
    %v113 = vsel %vm63, %v54, 0
    %v116 = vsel %vm63, %v55, 0
    %v119 = vsel %vm63, %v56, 0
    %v122 = vsel %vm63, %v57, 0
    %v125 = vsel %vm63, %v58, 0
    %v128 = vsel %vm63, %v59, 0
    %v131 = vsel %vm63, %v60, 0
    %v134 = vsel %vm63, %v61, 0
    %v137 = vsel %vm63, %v62, 0
    %vm139 = vcmask 1040384
    %v141 = vsel %vm139, %v37, 0
    %143 = vmatpush.msra.mxu0 0.0
    %144 = vmatpush.msra.mxu0 0.0
    %145 = vmatpush.msra.mxu0 0.0
    %146 = vmatpush.msra.mxu0 0.0
    %147 = vmatpush.msra.mxu0 0.0
    %148 = vmatpush.msra.mxu0 0.0
    %149 = vmatpush.msra.mxu0 0.0
    %150 = vmatpush.msra.mxu0 0.0
    %151 = vmatpush.msra.mxu0 0.0
    %152 = vmatpush.msra.mxu0 0.0
    %153 = vmatpush.msra.mxu0 0.0
    %154 = vmatpush.msra.mxu0 0.0
    %155 = vmatpush.msra.mxu0 0.0
    %156 = vmatpush.msra.mxu0 0.0
    %157 = vmatpush.msra.mxu0 %v141
    %158 = vmatpush.msra.mxu0 %v36
    %159 = vmatmul.f32.gmra.mxu0 %v65
    %v160 = vpop.f32.mrf.mxu0
    %v161 = vadd.f32 0.0, %v160
    %162 = vmatmul.f32.gmra.mxu0 %v68
    %v163 = vpop.f32.mrf.mxu0
    %v164 = vadd.f32 0.0, %v163
    %165 = vmatmul.f32.gmra.mxu0 %v71
    %v166 = vpop.f32.mrf.mxu0
    %v167 = vadd.f32 0.0, %v166
    %168 = vmatmul.f32.gmra.mxu0 %v74
    %v169 = vpop.f32.mrf.mxu0
    %v170 = vadd.f32 0.0, %v169
    %171 = vmatmul.f32.gmra.mxu0 %v77
    %v172 = vpop.f32.mrf.mxu0
    %v173 = vadd.f32 0.0, %v172
    %174 = vmatmul.f32.gmra.mxu0 %v80
    %v175 = vpop.f32.mrf.mxu0
    %v176 = vadd.f32 0.0, %v175
    %177 = vmatmul.f32.gmra.mxu0 %v83
    %v178 = vpop.f32.mrf.mxu0
    %v179 = vadd.f32 0.0, %v178
    %180 = vmatmul.f32.gmra.mxu0 %v86
    %v181 = vpop.f32.mrf.mxu0
    %v182 = vadd.f32 0.0, %v181
    %183 = vmatmul.f32.gmra.mxu0 %v89
    %v184 = vpop.f32.mrf.mxu0
    %v185 = vadd.f32 0.0, %v184
    %186 = vmatmul.f32.gmra.mxu0 %v92
    %v187 = vpop.f32.mrf.mxu0
    %v188 = vadd.f32 0.0, %v187
    %189 = vmatmul.f32.gmra.mxu0 %v95
    %v190 = vpop.f32.mrf.mxu0
    %v191 = vadd.f32 0.0, %v190
    %192 = vmatmul.f32.gmra.mxu0 %v98
    %v193 = vpop.f32.mrf.mxu0
    %v194 = vadd.f32 0.0, %v193
    %195 = vmatmul.f32.gmra.mxu0 %v101
    %v196 = vpop.f32.mrf.mxu0
    %v197 = vadd.f32 0.0, %v196
    %198 = vmatmul.f32.gmra.mxu0 %v104
    %v199 = vpop.f32.mrf.mxu0
    %v200 = vadd.f32 0.0, %v199
    %201 = vmatmul.f32.gmra.mxu0 %v107
    %v202 = vpop.f32.mrf.mxu0
    %v203 = vadd.f32 0.0, %v202
    %204 = vmatmul.f32.gmra.mxu0 %v110
    %v205 = vpop.f32.mrf.mxu0
    %v206 = vadd.f32 0.0, %v205
    %207 = vmatmul.f32.gmra.mxu0 %v113
    %v208 = vpop.f32.mrf.mxu0
    %v209 = vadd.f32 0.0, %v208
    %210 = vmatmul.f32.gmra.mxu0 %v116
    %v211 = vpop.f32.mrf.mxu0
    %v212 = vadd.f32 0.0, %v211
    %213 = vmatmul.f32.gmra.mxu0 %v119
    %v214 = vpop.f32.mrf.mxu0
    %v215 = vadd.f32 0.0, %v214
    %216 = vmatmul.f32.gmra.mxu0 %v122
    %v217 = vpop.f32.mrf.mxu0
    %v218 = vadd.f32 0.0, %v217
    %219 = vmatmul.f32.gmra.mxu0 %v125
    %v220 = vpop.f32.mrf.mxu0
    %v221 = vadd.f32 0.0, %v220
    %222 = vmatmul.f32.gmra.mxu0 %v128
    %v223 = vpop.f32.mrf.mxu0
    %v224 = vadd.f32 0.0, %v223
    %225 = vmatmul.f32.gmra.mxu0 %v131
    %v226 = vpop.f32.mrf.mxu0
    %v227 = vadd.f32 0.0, %v226
    %228 = vmatmul.f32.gmra.mxu0 %v134
    %v229 = vpop.f32.mrf.mxu0
    %v230 = vadd.f32 0.0, %v229
    %231 = vmatmul.f32.gmra.mxu0 %v137
    %v232 = vpop.f32.mrf.mxu0
    %v233 = vadd.f32 0.0, %v232
    %234 = vdwg.mxu0
    %s235 = scalar_lea.vmem %s0, 200
    %v236 = vld [vmem:[%s235] sm:$0xff]
    %v237 = vld [vmem:[%s235 + $0x8] sm:$0xff]
    %v238 = vld [vmem:[%s235 + $0x10] sm:$0xff]
    %v239 = vld [vmem:[%s235 + $0x18] sm:$0xff]
    %v240 = vld [vmem:[%s235 + $0x20] sm:$0xff]
    %v241 = vld [vmem:[%s235 + $0x28] sm:$0xff]
    %v242 = vld [vmem:[%s235 + $0x30] sm:$0xff]
    %v243 = vld [vmem:[%s235 + $0x38] sm:$0xff]
    %v244 = vld [vmem:[%s235 + $0x40] sm:$0xff]
    %v245 = vld [vmem:[%s235 + $0x48] sm:$0xff]
    %v246 = vld [vmem:[%s235 + $0x50] sm:$0xff]
    %v247 = vld [vmem:[%s235 + $0x58] sm:$0xff]
    %v248 = vld [vmem:[%s235 + $0x60] sm:$0xff]
    %v249 = vld [vmem:[%s235 + $0x68] sm:$0xff]
    %v250 = vld [vmem:[%s235 + $0x70] sm:$0xff]
    %v251 = vld [vmem:[%s235 + $0x78] sm:$0xff]
    %v252 = vld [vmem:[%s235 + $0x80] sm:$0xff]
    %v253 = vld [vmem:[%s235 + $0x88] sm:$0xff]
    %v254 = vld [vmem:[%s235 + $0x90] sm:$0xff]
    %v255 = vld [vmem:[%s235 + $0x98] sm:$0xff]
    %v256 = vld [vmem:[%s235 + $0xa0] sm:$0xff]
    %v257 = vld [vmem:[%s235 + $0xa8] sm:$0xff]
    %v258 = vld [vmem:[%s235 + $0xb0] sm:$0xff]
    %v259 = vld [vmem:[%s235 + $0xb8] sm:$0xff]
    %v260 = vld [vmem:[%s235 + $0xc0] sm:$0xff]
    %v262 = vsel %vm63, %v236, 0
    %v265 = vsel %vm63, %v237, 0
    %v268 = vsel %vm63, %v238, 0
    %v271 = vsel %vm63, %v239, 0
    %v274 = vsel %vm63, %v240, 0
    %v277 = vsel %vm63, %v241, 0
    %v280 = vsel %vm63, %v242, 0
    %v283 = vsel %vm63, %v243, 0
    %v286 = vsel %vm63, %v244, 0
    %v289 = vsel %vm63, %v245, 0
    %v292 = vsel %vm63, %v246, 0
    %v295 = vsel %vm63, %v247, 0
    %v298 = vsel %vm63, %v248, 0
    %v301 = vsel %vm63, %v249, 0
    %v304 = vsel %vm63, %v250, 0
    %v307 = vsel %vm63, %v251, 0
    %v310 = vsel %vm63, %v252, 0
    %v313 = vsel %vm63, %v253, 0
    %v316 = vsel %vm63, %v254, 0
    %v319 = vsel %vm63, %v255, 0
    %v322 = vsel %vm63, %v256, 0
    %v325 = vsel %vm63, %v257, 0
    %v328 = vsel %vm63, %v258, 0
    %v331 = vsel %vm63, %v259, 0
    %v334 = vsel %vm63, %v260, 0
    %336 = vmatpush.msra.mxu0 0.0
    %337 = vmatpush.msra.mxu0 0.0
    %338 = vmatpush.msra.mxu0 0.0
    %339 = vmatpush.msra.mxu0 0.0
    %340 = vmatpush.msra.mxu0 0.0
    %341 = vmatpush.msra.mxu0 0.0
    %342 = vmatpush.msra.mxu0 0.0
    %343 = vmatpush.msra.mxu0 0.0
    %344 = vmatpush.msra.mxu0 0.0
    %345 = vmatpush.msra.mxu0 0.0
    %346 = vmatpush.msra.mxu0 0.0
    %347 = vmatpush.msra.mxu0 0.0
    %348 = vmatpush.msra.mxu0 0.0
    %349 = vmatpush.msra.mxu0 0.0
    %350 = vmatpush.msra.mxu0 %v141
    %351 = vmatpush.msra.mxu0 %v36
    %352 = vmatmul.f32.gmra.mxu0 %v262
    %v353 = vpop.f32.mrf.mxu0
    %v354 = vadd.f32 0.0, %v353
    %355 = vmatmul.f32.gmra.mxu0 %v265
    %v356 = vpop.f32.mrf.mxu0
    %v357 = vadd.f32 0.0, %v356
    %358 = vmatmul.f32.gmra.mxu0 %v268
    %v359 = vpop.f32.mrf.mxu0
    %v360 = vadd.f32 0.0, %v359
    %361 = vmatmul.f32.gmra.mxu0 %v271
    %v362 = vpop.f32.mrf.mxu0
    %v363 = vadd.f32 0.0, %v362
    %364 = vmatmul.f32.gmra.mxu0 %v274
    %v365 = vpop.f32.mrf.mxu0
    %v366 = vadd.f32 0.0, %v365
    %367 = vmatmul.f32.gmra.mxu0 %v277
    %v368 = vpop.f32.mrf.mxu0
    %v369 = vadd.f32 0.0, %v368
    %370 = vmatmul.f32.gmra.mxu0 %v280
    %v371 = vpop.f32.mrf.mxu0
    %v372 = vadd.f32 0.0, %v371
    %373 = vmatmul.f32.gmra.mxu0 %v283
    %v374 = vpop.f32.mrf.mxu0
    %v375 = vadd.f32 0.0, %v374
    %376 = vmatmul.f32.gmra.mxu0 %v286
    %v377 = vpop.f32.mrf.mxu0
    %v378 = vadd.f32 0.0, %v377
    %379 = vmatmul.f32.gmra.mxu0 %v289
    %v380 = vpop.f32.mrf.mxu0
    %v381 = vadd.f32 0.0, %v380
    %382 = vmatmul.f32.gmra.mxu0 %v292
    %v383 = vpop.f32.mrf.mxu0
    %v384 = vadd.f32 0.0, %v383
    %385 = vmatmul.f32.gmra.mxu0 %v295
    %v386 = vpop.f32.mrf.mxu0
    %v387 = vadd.f32 0.0, %v386
    %388 = vmatmul.f32.gmra.mxu0 %v298
    %v389 = vpop.f32.mrf.mxu0
    %v390 = vadd.f32 0.0, %v389
    %391 = vmatmul.f32.gmra.mxu0 %v301
    %v392 = vpop.f32.mrf.mxu0
    %v393 = vadd.f32 0.0, %v392
    %394 = vmatmul.f32.gmra.mxu0 %v304
    %v395 = vpop.f32.mrf.mxu0
    %v396 = vadd.f32 0.0, %v395
    %397 = vmatmul.f32.gmra.mxu0 %v307
    %v398 = vpop.f32.mrf.mxu0
    %v399 = vadd.f32 0.0, %v398
    %400 = vmatmul.f32.gmra.mxu0 %v310
    %v401 = vpop.f32.mrf.mxu0
    %v402 = vadd.f32 0.0, %v401
    %403 = vmatmul.f32.gmra.mxu0 %v313
    %v404 = vpop.f32.mrf.mxu0
    %v405 = vadd.f32 0.0, %v404
    %406 = vmatmul.f32.gmra.mxu0 %v316
    %v407 = vpop.f32.mrf.mxu0
    %v408 = vadd.f32 0.0, %v407
    %409 = vmatmul.f32.gmra.mxu0 %v319
    %v410 = vpop.f32.mrf.mxu0
    %v411 = vadd.f32 0.0, %v410
    %412 = vmatmul.f32.gmra.mxu0 %v322
    %v413 = vpop.f32.mrf.mxu0
    %v414 = vadd.f32 0.0, %v413
    %415 = vmatmul.f32.gmra.mxu0 %v325
    %v416 = vpop.f32.mrf.mxu0
    %v417 = vadd.f32 0.0, %v416
    %418 = vmatmul.f32.gmra.mxu0 %v328
    %v419 = vpop.f32.mrf.mxu0
    %v420 = vadd.f32 0.0, %v419
    %421 = vmatmul.f32.gmra.mxu0 %v331
    %v422 = vpop.f32.mrf.mxu0
    %v423 = vadd.f32 0.0, %v422
    %424 = vmatmul.f32.gmra.mxu0 %v334
    %v425 = vpop.f32.mrf.mxu0
    %v426 = vadd.f32 0.0, %v425
    %427 = vdwg.mxu0
    %v428 = vmax.f32 %v161, %v354
    %v429 = vmax.f32 %v164, %v357
    %v430 = vmax.f32 %v167, %v360
    %v431 = vmax.f32 %v170, %v363
    %v432 = vmax.f32 %v173, %v366
    %v433 = vmax.f32 %v176, %v369
    %v434 = vmax.f32 %v179, %v372
    %v435 = vmax.f32 %v182, %v375
    %v436 = vmax.f32 %v185, %v378
    %v437 = vmax.f32 %v188, %v381
    %v438 = vmax.f32 %v191, %v384
    %v439 = vmax.f32 %v194, %v387
    %v440 = vmax.f32 %v197, %v390
    %v441 = vmax.f32 %v200, %v393
    %v442 = vmax.f32 %v203, %v396
    %v443 = vmax.f32 %v206, %v399
    %v444 = vmax.f32 %v209, %v402
    %v445 = vmax.f32 %v212, %v405
    %v446 = vmax.f32 %v215, %v408
    %v447 = vmax.f32 %v218, %v411
    %v448 = vmax.f32 %v221, %v414
    %v449 = vmax.f32 %v224, %v417
    %v450 = vmax.f32 %v227, %v420
    %v451 = vmax.f32 %v230, %v423
    %v452 = vmax.f32 %v233, %v426
    %s453 = scalar_lea.vmem %s0, 400
    %v454 = vld [vmem:[%s453] sm:$0xff]
    %v455 = vld [vmem:[%s453 + $0x8] sm:$0xff]
    %v456 = vld [vmem:[%s453 + $0x10] sm:$0xff]
    %v457 = vld [vmem:[%s453 + $0x18] sm:$0xff]
    %v458 = vld [vmem:[%s453 + $0x20] sm:$0xff]
    %v459 = vld [vmem:[%s453 + $0x28] sm:$0xff]
    %v460 = vld [vmem:[%s453 + $0x30] sm:$0xff]
    %v461 = vld [vmem:[%s453 + $0x38] sm:$0xff]
    %v462 = vld [vmem:[%s453 + $0x40] sm:$0xff]
    %v463 = vld [vmem:[%s453 + $0x48] sm:$0xff]
    %v464 = vld [vmem:[%s453 + $0x50] sm:$0xff]
    %v465 = vld [vmem:[%s453 + $0x58] sm:$0xff]
    %v466 = vld [vmem:[%s453 + $0x60] sm:$0xff]
    %v467 = vld [vmem:[%s453 + $0x68] sm:$0xff]
    %v468 = vld [vmem:[%s453 + $0x70] sm:$0xff]
    %v469 = vld [vmem:[%s453 + $0x78] sm:$0xff]
    %v470 = vld [vmem:[%s453 + $0x80] sm:$0xff]
    %v471 = vld [vmem:[%s453 + $0x88] sm:$0xff]
    %v472 = vld [vmem:[%s453 + $0x90] sm:$0xff]
    %v473 = vld [vmem:[%s453 + $0x98] sm:$0xff]
    %v474 = vld [vmem:[%s453 + $0xa0] sm:$0xff]
    %v475 = vld [vmem:[%s453 + $0xa8] sm:$0xff]
    %v476 = vld [vmem:[%s453 + $0xb0] sm:$0xff]
    %v477 = vld [vmem:[%s453 + $0xb8] sm:$0xff]
    %v478 = vld [vmem:[%s453 + $0xc0] sm:$0xff]
    %v480 = vsel %vm63, %v454, 0
    %v483 = vsel %vm63, %v455, 0
    %v486 = vsel %vm63, %v456, 0
    %v489 = vsel %vm63, %v457, 0
    %v492 = vsel %vm63, %v458, 0
    %v495 = vsel %vm63, %v459, 0
    %v498 = vsel %vm63, %v460, 0
    %v501 = vsel %vm63, %v461, 0
    %v504 = vsel %vm63, %v462, 0
    %v507 = vsel %vm63, %v463, 0
    %v510 = vsel %vm63, %v464, 0
    %v513 = vsel %vm63, %v465, 0
    %v516 = vsel %vm63, %v466, 0
    %v519 = vsel %vm63, %v467, 0
    %v522 = vsel %vm63, %v468, 0
    %v525 = vsel %vm63, %v469, 0
    %v528 = vsel %vm63, %v470, 0
    %v531 = vsel %vm63, %v471, 0
    %v534 = vsel %vm63, %v472, 0
    %v537 = vsel %vm63, %v473, 0
    %v540 = vsel %vm63, %v474, 0
    %v543 = vsel %vm63, %v475, 0
    %v546 = vsel %vm63, %v476, 0
    %v549 = vsel %vm63, %v477, 0
    %v552 = vsel %vm63, %v478, 0
    %554 = vmatpush.msra.mxu0 0.0
    %555 = vmatpush.msra.mxu0 0.0
    %556 = vmatpush.msra.mxu0 0.0
    %557 = vmatpush.msra.mxu0 0.0
    %558 = vmatpush.msra.mxu0 0.0
    %559 = vmatpush.msra.mxu0 0.0
    %560 = vmatpush.msra.mxu0 0.0
    %561 = vmatpush.msra.mxu0 0.0
    %562 = vmatpush.msra.mxu0 0.0
    %563 = vmatpush.msra.mxu0 0.0
    %564 = vmatpush.msra.mxu0 0.0
    %565 = vmatpush.msra.mxu0 0.0
    %566 = vmatpush.msra.mxu0 0.0
    %567 = vmatpush.msra.mxu0 0.0
    %568 = vmatpush.msra.mxu0 %v141
    %569 = vmatpush.msra.mxu0 %v36
    %570 = vmatmul.f32.gmra.mxu0 %v480
    %v571 = vpop.f32.mrf.mxu0
    %v572 = vadd.f32 0.0, %v571
    %573 = vmatmul.f32.gmra.mxu0 %v483
    %v574 = vpop.f32.mrf.mxu0
    %v575 = vadd.f32 0.0, %v574
    %576 = vmatmul.f32.gmra.mxu0 %v486
    %v577 = vpop.f32.mrf.mxu0
    %v578 = vadd.f32 0.0, %v577
    %579 = vmatmul.f32.gmra.mxu0 %v489
    %v580 = vpop.f32.mrf.mxu0
    %v581 = vadd.f32 0.0, %v580
    %582 = vmatmul.f32.gmra.mxu0 %v492
    %v583 = vpop.f32.mrf.mxu0
    %v584 = vadd.f32 0.0, %v583
    %585 = vmatmul.f32.gmra.mxu0 %v495
    %v586 = vpop.f32.mrf.mxu0
    %v587 = vadd.f32 0.0, %v586
    %588 = vmatmul.f32.gmra.mxu0 %v498
    %v589 = vpop.f32.mrf.mxu0
    %v590 = vadd.f32 0.0, %v589
    %591 = vmatmul.f32.gmra.mxu0 %v501
    %v592 = vpop.f32.mrf.mxu0
    %v593 = vadd.f32 0.0, %v592
    %594 = vmatmul.f32.gmra.mxu0 %v504
    %v595 = vpop.f32.mrf.mxu0
    %v596 = vadd.f32 0.0, %v595
    %597 = vmatmul.f32.gmra.mxu0 %v507
    %v598 = vpop.f32.mrf.mxu0
    %v599 = vadd.f32 0.0, %v598
    %600 = vmatmul.f32.gmra.mxu0 %v510
    %v601 = vpop.f32.mrf.mxu0
    %v602 = vadd.f32 0.0, %v601
    %603 = vmatmul.f32.gmra.mxu0 %v513
    %v604 = vpop.f32.mrf.mxu0
    %v605 = vadd.f32 0.0, %v604
    %606 = vmatmul.f32.gmra.mxu0 %v516
    %v607 = vpop.f32.mrf.mxu0
    %v608 = vadd.f32 0.0, %v607
    %609 = vmatmul.f32.gmra.mxu0 %v519
    %v610 = vpop.f32.mrf.mxu0
    %v611 = vadd.f32 0.0, %v610
    %612 = vmatmul.f32.gmra.mxu0 %v522
    %v613 = vpop.f32.mrf.mxu0
    %v614 = vadd.f32 0.0, %v613
    %615 = vmatmul.f32.gmra.mxu0 %v525
    %v616 = vpop.f32.mrf.mxu0
    %v617 = vadd.f32 0.0, %v616
    %618 = vmatmul.f32.gmra.mxu0 %v528
    %v619 = vpop.f32.mrf.mxu0
    %v620 = vadd.f32 0.0, %v619
    %621 = vmatmul.f32.gmra.mxu0 %v531
    %v622 = vpop.f32.mrf.mxu0
    %v623 = vadd.f32 0.0, %v622
    %624 = vmatmul.f32.gmra.mxu0 %v534
    %v625 = vpop.f32.mrf.mxu0
    %v626 = vadd.f32 0.0, %v625
    %627 = vmatmul.f32.gmra.mxu0 %v537
    %v628 = vpop.f32.mrf.mxu0
    %v629 = vadd.f32 0.0, %v628
    %630 = vmatmul.f32.gmra.mxu0 %v540
    %v631 = vpop.f32.mrf.mxu0
    %v632 = vadd.f32 0.0, %v631
    %633 = vmatmul.f32.gmra.mxu0 %v543
    %v634 = vpop.f32.mrf.mxu0
    %v635 = vadd.f32 0.0, %v634
    %636 = vmatmul.f32.gmra.mxu0 %v546
    %v637 = vpop.f32.mrf.mxu0
    %v638 = vadd.f32 0.0, %v637
    %639 = vmatmul.f32.gmra.mxu0 %v549
    %v640 = vpop.f32.mrf.mxu0
    %v641 = vadd.f32 0.0, %v640
    %642 = vmatmul.f32.gmra.mxu0 %v552
    %v643 = vpop.f32.mrf.mxu0
    %v644 = vadd.f32 0.0, %v643
    %645 = vdwg.mxu0
    %v646 = vmax.f32 %v428, %v572
    %v647 = vmax.f32 %v429, %v575
    %v648 = vmax.f32 %v430, %v578
    %v649 = vmax.f32 %v431, %v581
    %v650 = vmax.f32 %v432, %v584
    %v651 = vmax.f32 %v433, %v587
    %v652 = vmax.f32 %v434, %v590
    %v653 = vmax.f32 %v435, %v593
    %v654 = vmax.f32 %v436, %v596
    %v655 = vmax.f32 %v437, %v599
    %v656 = vmax.f32 %v438, %v602
    %v657 = vmax.f32 %v439, %v605
    %v658 = vmax.f32 %v440, %v608
    %v659 = vmax.f32 %v441, %v611
    %v660 = vmax.f32 %v442, %v614
    %v661 = vmax.f32 %v443, %v617
    %v662 = vmax.f32 %v444, %v620
    %v663 = vmax.f32 %v445, %v623
    %v664 = vmax.f32 %v446, %v626
    %v665 = vmax.f32 %v447, %v629
    %v666 = vmax.f32 %v448, %v632
    %v667 = vmax.f32 %v449, %v635
    %v668 = vmax.f32 %v450, %v638
    %v669 = vmax.f32 %v451, %v641
    %v670 = vmax.f32 %v452, %v644
    %s671 = scalar_lea.vmem %s0, 600
    %v672 = vld [vmem:[%s671] sm:$0xff]
    %v673 = vld [vmem:[%s671 + $0x8] sm:$0xff]
    %v674 = vld [vmem:[%s671 + $0x10] sm:$0xff]
    %v675 = vld [vmem:[%s671 + $0x18] sm:$0xff]
    %v676 = vld [vmem:[%s671 + $0x20] sm:$0xff]
    %v677 = vld [vmem:[%s671 + $0x28] sm:$0xff]
    %v678 = vld [vmem:[%s671 + $0x30] sm:$0xff]
    %v679 = vld [vmem:[%s671 + $0x38] sm:$0xff]
    %v680 = vld [vmem:[%s671 + $0x40] sm:$0xff]
    %v681 = vld [vmem:[%s671 + $0x48] sm:$0xff]
    %v682 = vld [vmem:[%s671 + $0x50] sm:$0xff]
    %v683 = vld [vmem:[%s671 + $0x58] sm:$0xff]
    %v684 = vld [vmem:[%s671 + $0x60] sm:$0xff]
    %v685 = vld [vmem:[%s671 + $0x68] sm:$0xff]
    %v686 = vld [vmem:[%s671 + $0x70] sm:$0xff]
    %v687 = vld [vmem:[%s671 + $0x78] sm:$0xff]
    %v688 = vld [vmem:[%s671 + $0x80] sm:$0xff]
    %v689 = vld [vmem:[%s671 + $0x88] sm:$0xff]
    %v690 = vld [vmem:[%s671 + $0x90] sm:$0xff]
    %v691 = vld [vmem:[%s671 + $0x98] sm:$0xff]
    %v692 = vld [vmem:[%s671 + $0xa0] sm:$0xff]
    %v693 = vld [vmem:[%s671 + $0xa8] sm:$0xff]
    %v694 = vld [vmem:[%s671 + $0xb0] sm:$0xff]
    %v695 = vld [vmem:[%s671 + $0xb8] sm:$0xff]
    %v696 = vld [vmem:[%s671 + $0xc0] sm:$0xff]
    %v698 = vsel %vm63, %v672, 0
    %v701 = vsel %vm63, %v673, 0
    %v704 = vsel %vm63, %v674, 0
    %v707 = vsel %vm63, %v675, 0
    %v710 = vsel %vm63, %v676, 0
    %v713 = vsel %vm63, %v677, 0
    %v716 = vsel %vm63, %v678, 0
    %v719 = vsel %vm63, %v679, 0
    %v722 = vsel %vm63, %v680, 0
    %v725 = vsel %vm63, %v681, 0
    %v728 = vsel %vm63, %v682, 0
    %v731 = vsel %vm63, %v683, 0
    %v734 = vsel %vm63, %v684, 0
    %v737 = vsel %vm63, %v685, 0
    %v740 = vsel %vm63, %v686, 0
    %v743 = vsel %vm63, %v687, 0
    %v746 = vsel %vm63, %v688, 0
    %v749 = vsel %vm63, %v689, 0
    %v752 = vsel %vm63, %v690, 0
    %v755 = vsel %vm63, %v691, 0
    %v758 = vsel %vm63, %v692, 0
    %v761 = vsel %vm63, %v693, 0
    %v764 = vsel %vm63, %v694, 0
    %v767 = vsel %vm63, %v695, 0
    %v770 = vsel %vm63, %v696, 0
    %772 = vmatpush.msra.mxu0 0.0
    %773 = vmatpush.msra.mxu0 0.0
    %774 = vmatpush.msra.mxu0 0.0
    %775 = vmatpush.msra.mxu0 0.0
    %776 = vmatpush.msra.mxu0 0.0
    %777 = vmatpush.msra.mxu0 0.0
    %778 = vmatpush.msra.mxu0 0.0
    %779 = vmatpush.msra.mxu0 0.0
    %780 = vmatpush.msra.mxu0 0.0
    %781 = vmatpush.msra.mxu0 0.0
    %782 = vmatpush.msra.mxu0 0.0
    %783 = vmatpush.msra.mxu0 0.0
    %784 = vmatpush.msra.mxu0 0.0
    %785 = vmatpush.msra.mxu0 0.0
    %786 = vmatpush.msra.mxu0 %v141
    %787 = vmatpush.msra.mxu0 %v36
    %788 = vmatmul.f32.gmra.mxu0 %v698
    %v789 = vpop.f32.mrf.mxu0
    %v790 = vadd.f32 0.0, %v789
    %791 = vmatmul.f32.gmra.mxu0 %v701
    %v792 = vpop.f32.mrf.mxu0
    %v793 = vadd.f32 0.0, %v792
    %794 = vmatmul.f32.gmra.mxu0 %v704
    %v795 = vpop.f32.mrf.mxu0
    %v796 = vadd.f32 0.0, %v795
    %797 = vmatmul.f32.gmra.mxu0 %v707
    %v798 = vpop.f32.mrf.mxu0
    %v799 = vadd.f32 0.0, %v798
    %800 = vmatmul.f32.gmra.mxu0 %v710
    %v801 = vpop.f32.mrf.mxu0
    %v802 = vadd.f32 0.0, %v801
    %803 = vmatmul.f32.gmra.mxu0 %v713
    %v804 = vpop.f32.mrf.mxu0
    %v805 = vadd.f32 0.0, %v804
    %806 = vmatmul.f32.gmra.mxu0 %v716
    %v807 = vpop.f32.mrf.mxu0
    %v808 = vadd.f32 0.0, %v807
    %809 = vmatmul.f32.gmra.mxu0 %v719
    %v810 = vpop.f32.mrf.mxu0
    %v811 = vadd.f32 0.0, %v810
    %812 = vmatmul.f32.gmra.mxu0 %v722
    %v813 = vpop.f32.mrf.mxu0
    %v814 = vadd.f32 0.0, %v813
    %815 = vmatmul.f32.gmra.mxu0 %v725
    %v816 = vpop.f32.mrf.mxu0
    %v817 = vadd.f32 0.0, %v816
    %818 = vmatmul.f32.gmra.mxu0 %v728
    %v819 = vpop.f32.mrf.mxu0
    %v820 = vadd.f32 0.0, %v819
    %821 = vmatmul.f32.gmra.mxu0 %v731
    %v822 = vpop.f32.mrf.mxu0
    %v823 = vadd.f32 0.0, %v822
    %824 = vmatmul.f32.gmra.mxu0 %v734
    %v825 = vpop.f32.mrf.mxu0
    %v826 = vadd.f32 0.0, %v825
    %827 = vmatmul.f32.gmra.mxu0 %v737
    %v828 = vpop.f32.mrf.mxu0
    %v829 = vadd.f32 0.0, %v828
    %830 = vmatmul.f32.gmra.mxu0 %v740
    %v831 = vpop.f32.mrf.mxu0
    %v832 = vadd.f32 0.0, %v831
    %833 = vmatmul.f32.gmra.mxu0 %v743
    %v834 = vpop.f32.mrf.mxu0
    %v835 = vadd.f32 0.0, %v834
    %836 = vmatmul.f32.gmra.mxu0 %v746
    %v837 = vpop.f32.mrf.mxu0
    %v838 = vadd.f32 0.0, %v837
    %839 = vmatmul.f32.gmra.mxu0 %v749
    %v840 = vpop.f32.mrf.mxu0
    %v841 = vadd.f32 0.0, %v840
    %842 = vmatmul.f32.gmra.mxu0 %v752
    %v843 = vpop.f32.mrf.mxu0
    %v844 = vadd.f32 0.0, %v843
    %845 = vmatmul.f32.gmra.mxu0 %v755
    %v846 = vpop.f32.mrf.mxu0
    %v847 = vadd.f32 0.0, %v846
    %848 = vmatmul.f32.gmra.mxu0 %v758
    %v849 = vpop.f32.mrf.mxu0
    %v850 = vadd.f32 0.0, %v849
    %851 = vmatmul.f32.gmra.mxu0 %v761
    %v852 = vpop.f32.mrf.mxu0
    %v853 = vadd.f32 0.0, %v852
    %854 = vmatmul.f32.gmra.mxu0 %v764
    %v855 = vpop.f32.mrf.mxu0
    %v856 = vadd.f32 0.0, %v855
    %857 = vmatmul.f32.gmra.mxu0 %v767
    %v858 = vpop.f32.mrf.mxu0
    %v859 = vadd.f32 0.0, %v858
    %860 = vmatmul.f32.gmra.mxu0 %v770
    %v861 = vpop.f32.mrf.mxu0
    %v862 = vadd.f32 0.0, %v861
    %863 = vdwg.mxu0
    %v864 = vmax.f32 %v646, %v790
    %v865 = vmax.f32 %v647, %v793
    %v866 = vmax.f32 %v648, %v796
    %v867 = vmax.f32 %v649, %v799
    %v868 = vmax.f32 %v650, %v802
    %v869 = vmax.f32 %v651, %v805
    %v870 = vmax.f32 %v652, %v808
    %v871 = vmax.f32 %v653, %v811
    %v872 = vmax.f32 %v654, %v814
    %v873 = vmax.f32 %v655, %v817
    %v874 = vmax.f32 %v656, %v820
    %v875 = vmax.f32 %v657, %v823
    %v876 = vmax.f32 %v658, %v826
    %v877 = vmax.f32 %v659, %v829
    %v878 = vmax.f32 %v660, %v832
    %v879 = vmax.f32 %v661, %v835
    %v880 = vmax.f32 %v662, %v838
    %v881 = vmax.f32 %v663, %v841
    %v882 = vmax.f32 %v664, %v844
    %v883 = vmax.f32 %v665, %v847
    %v884 = vmax.f32 %v666, %v850
    %v885 = vmax.f32 %v667, %v853
    %v886 = vmax.f32 %v668, %v856
    %v887 = vmax.f32 %v669, %v859
    %v888 = vmax.f32 %v670, %v862
    %v889 = vld [vmem:[%s3] sm:$0x1]
    %v891 = vperm.slane %v889, 0
    %v893 = vadd.f32 %v864, %v891
    %v894 = vadd.f32 %v865, %v891
    %v895 = vadd.f32 %v866, %v891
    %v896 = vadd.f32 %v867, %v891
    %v897 = vadd.f32 %v868, %v891
    %v898 = vadd.f32 %v869, %v891
    %v899 = vadd.f32 %v870, %v891
    %v900 = vadd.f32 %v871, %v891
    %v901 = vadd.f32 %v872, %v891
    %v902 = vadd.f32 %v873, %v891
    %v903 = vadd.f32 %v874, %v891
    %v904 = vadd.f32 %v875, %v891
    %v905 = vadd.f32 %v876, %v891
    %v906 = vadd.f32 %v877, %v891
    %v907 = vadd.f32 %v878, %v891
    %v908 = vadd.f32 %v879, %v891
    %v909 = vadd.f32 %v880, %v891
    %v910 = vadd.f32 %v881, %v891
    %v911 = vadd.f32 %v882, %v891
    %v912 = vadd.f32 %v883, %v891
    %v913 = vadd.f32 %v884, %v891
    %v914 = vadd.f32 %v885, %v891
    %v915 = vadd.f32 %v886, %v891
    %v916 = vadd.f32 %v887, %v891
    %v917 = vadd.f32 %v888, %v891
    %v918 = vmax.f32 %v893, 0.0
    %v919 = vmax.f32 %v894, 0.0
    %v920 = vmax.f32 %v895, 0.0
    %v921 = vmax.f32 %v896, 0.0
    %v922 = vmax.f32 %v897, 0.0
    %v923 = vmax.f32 %v898, 0.0
    %v924 = vmax.f32 %v899, 0.0
    %v925 = vmax.f32 %v900, 0.0
    %v926 = vmax.f32 %v901, 0.0
    %v927 = vmax.f32 %v902, 0.0
    %v928 = vmax.f32 %v903, 0.0
    %v929 = vmax.f32 %v904, 0.0
    %v930 = vmax.f32 %v905, 0.0
    %v931 = vmax.f32 %v906, 0.0
    %v932 = vmax.f32 %v907, 0.0
    %v933 = vmax.f32 %v908, 0.0
    %v934 = vmax.f32 %v909, 0.0
    %v935 = vmax.f32 %v910, 0.0
    %v936 = vmax.f32 %v911, 0.0
    %v937 = vmax.f32 %v912, 0.0
    %v938 = vmax.f32 %v913, 0.0
    %v939 = vmax.f32 %v914, 0.0
    %v940 = vmax.f32 %v915, 0.0
    %v941 = vmax.f32 %v916, 0.0
    %v942 = vmax.f32 %v917, 0.0
    %v943 = vld [vmem:[%s1] sm:$0xff]
    %v944 = vld [vmem:[%s1 + $0x8] sm:$0xff]
    %v945 = vld [vmem:[%s1 + $0x10] sm:$0xff]
    %v946 = vld [vmem:[%s1 + $0x18] sm:$0xff]
    %v947 = vld [vmem:[%s1 + $0x20] sm:$0xff]
    %v948 = vld [vmem:[%s1 + $0x28] sm:$0xff]
    %v949 = vld [vmem:[%s1 + $0x30] sm:$0xff]
    %v950 = vld [vmem:[%s1 + $0x38] sm:$0xff]
    %v951 = vld [vmem:[%s1 + $0x40] sm:$0xff]
    %v952 = vld [vmem:[%s1 + $0x48] sm:$0xff]
    %v953 = vld [vmem:[%s1 + $0x50] sm:$0xff]
    %v954 = vld [vmem:[%s1 + $0x58] sm:$0xff]
    %v955 = vld [vmem:[%s1 + $0x60] sm:$0xff]
    %v956 = vld [vmem:[%s1 + $0x68] sm:$0xff]
    %v957 = vld [vmem:[%s1 + $0x70] sm:$0xff]
    %v958 = vld [vmem:[%s1 + $0x78] sm:$0xff]
    %v959 = vld [vmem:[%s1 + $0x80] sm:$0xff]
    %v960 = vld [vmem:[%s1 + $0x88] sm:$0xff]
    %v961 = vld [vmem:[%s1 + $0x90] sm:$0xff]
    %v962 = vld [vmem:[%s1 + $0x98] sm:$0xff]
    %v963 = vld [vmem:[%s1 + $0xa0] sm:$0xff]
    %v964 = vld [vmem:[%s1 + $0xa8] sm:$0xff]
    %v965 = vld [vmem:[%s1 + $0xb0] sm:$0xff]
    %v966 = vld [vmem:[%s1 + $0xb8] sm:$0xff]
    %v967 = vld [vmem:[%s1 + $0xc0] sm:$0xff]
    %969 = vset.pattern.permute.xlu0 0
    %970 = vperm.xlu0 %969, %v943
    %v971 = vpop.permute.xlu0 %970
    %974 = vset.pattern.permute.xlu0 0
    %975 = vperm.xlu0 %974, %v944
    %v976 = vpop.permute.xlu0 %975
    %979 = vset.pattern.permute.xlu0 0
    %980 = vperm.xlu0 %979, %v945
    %v981 = vpop.permute.xlu0 %980
    %984 = vset.pattern.permute.xlu0 0
    %985 = vperm.xlu0 %984, %v946
    %v986 = vpop.permute.xlu0 %985
    %989 = vset.pattern.permute.xlu0 0
    %990 = vperm.xlu0 %989, %v947
    %v991 = vpop.permute.xlu0 %990
    %994 = vset.pattern.permute.xlu0 0
    %995 = vperm.xlu0 %994, %v948
    %v996 = vpop.permute.xlu0 %995
    %999 = vset.pattern.permute.xlu0 0
    %1000 = vperm.xlu0 %999, %v949
    %v1001 = vpop.permute.xlu0 %1000
    %1004 = vset.pattern.permute.xlu0 0
    %1005 = vperm.xlu0 %1004, %v950
    %v1006 = vpop.permute.xlu0 %1005
    %1009 = vset.pattern.permute.xlu0 0
    %1010 = vperm.xlu0 %1009, %v951
    %v1011 = vpop.permute.xlu0 %1010
    %1014 = vset.pattern.permute.xlu0 0
    %1015 = vperm.xlu0 %1014, %v952
    %v1016 = vpop.permute.xlu0 %1015
    %1019 = vset.pattern.permute.xlu0 0
    %1020 = vperm.xlu0 %1019, %v953
    %v1021 = vpop.permute.xlu0 %1020
    %1024 = vset.pattern.permute.xlu0 0
    %1025 = vperm.xlu0 %1024, %v954
    %v1026 = vpop.permute.xlu0 %1025
    %1029 = vset.pattern.permute.xlu0 0
    %1030 = vperm.xlu0 %1029, %v955
    %v1031 = vpop.permute.xlu0 %1030
    %1034 = vset.pattern.permute.xlu0 0
    %1035 = vperm.xlu0 %1034, %v956
    %v1036 = vpop.permute.xlu0 %1035
    %1039 = vset.pattern.permute.xlu0 0
    %1040 = vperm.xlu0 %1039, %v957
    %v1041 = vpop.permute.xlu0 %1040
    %1044 = vset.pattern.permute.xlu0 0
    %1045 = vperm.xlu0 %1044, %v958
    %v1046 = vpop.permute.xlu0 %1045
    %1049 = vset.pattern.permute.xlu0 0
    %1050 = vperm.xlu0 %1049, %v959
    %v1051 = vpop.permute.xlu0 %1050
    %1054 = vset.pattern.permute.xlu0 0
    %1055 = vperm.xlu0 %1054, %v960
    %v1056 = vpop.permute.xlu0 %1055
    %1059 = vset.pattern.permute.xlu0 0
    %1060 = vperm.xlu0 %1059, %v961
    %v1061 = vpop.permute.xlu0 %1060
    %1064 = vset.pattern.permute.xlu0 0
    %1065 = vperm.xlu0 %1064, %v962
    %v1066 = vpop.permute.xlu0 %1065
    %1069 = vset.pattern.permute.xlu0 0
    %1070 = vperm.xlu0 %1069, %v963
    %v1071 = vpop.permute.xlu0 %1070
    %1074 = vset.pattern.permute.xlu0 0
    %1075 = vperm.xlu0 %1074, %v964
    %v1076 = vpop.permute.xlu0 %1075
    %1079 = vset.pattern.permute.xlu0 0
    %1080 = vperm.xlu0 %1079, %v965
    %v1081 = vpop.permute.xlu0 %1080
    %1084 = vset.pattern.permute.xlu0 0
    %1085 = vperm.xlu0 %1084, %v966
    %v1086 = vpop.permute.xlu0 %1085
    %1089 = vset.pattern.permute.xlu0 0
    %1090 = vperm.xlu0 %1089, %v967
    %v1091 = vpop.permute.xlu0 %1090
    %v1093 = vmul.f32 %v918, %v971
    %v1094 = vmul.f32 %v919, %v976
    %v1095 = vmul.f32 %v920, %v981
    %v1096 = vmul.f32 %v921, %v986
    %v1097 = vmul.f32 %v922, %v991
    %v1098 = vmul.f32 %v923, %v996
    %v1099 = vmul.f32 %v924, %v1001
    %v1100 = vmul.f32 %v925, %v1006
    %v1101 = vmul.f32 %v926, %v1011
    %v1102 = vmul.f32 %v927, %v1016
    %v1103 = vmul.f32 %v928, %v1021
    %v1104 = vmul.f32 %v929, %v1026
    %v1105 = vmul.f32 %v930, %v1031
    %v1106 = vmul.f32 %v931, %v1036
    %v1107 = vmul.f32 %v932, %v1041
    %v1108 = vmul.f32 %v933, %v1046
    %v1109 = vmul.f32 %v934, %v1051
    %v1110 = vmul.f32 %v935, %v1056
    %v1111 = vmul.f32 %v936, %v1061
    %v1112 = vmul.f32 %v937, %v1066
    %v1113 = vmul.f32 %v938, %v1071
    %v1114 = vmul.f32 %v939, %v1076
    %v1115 = vmul.f32 %v940, %v1081
    %v1116 = vmul.f32 %v941, %v1086
    %v1117 = vmul.f32 %v942, %v1091
    %vm1118 = vcmask 261120
    %1119 = vst.msk [vmem:[#allocation2] sm:$0xff] %vm1118, %v1093
    %1120 = vst.msk [vmem:[#allocation2 + $0x8] sm:$0xff] %vm1118, %v1094
    %1121 = vst.msk [vmem:[#allocation2 + $0x10] sm:$0xff] %vm1118, %v1095
    %1122 = vst.msk [vmem:[#allocation2 + $0x18] sm:$0xff] %vm1118, %v1096
    %1123 = vst.msk [vmem:[#allocation2 + $0x20] sm:$0xff] %vm1118, %v1097
    %1124 = vst.msk [vmem:[#allocation2 + $0x28] sm:$0xff] %vm1118, %v1098
    %1125 = vst.msk [vmem:[#allocation2 + $0x30] sm:$0xff] %vm1118, %v1099
    %1126 = vst.msk [vmem:[#allocation2 + $0x38] sm:$0xff] %vm1118, %v1100
    %1127 = vst.msk [vmem:[#allocation2 + $0x40] sm:$0xff] %vm1118, %v1101
    %1128 = vst.msk [vmem:[#allocation2 + $0x48] sm:$0xff] %vm1118, %v1102
    %1129 = vst.msk [vmem:[#allocation2 + $0x50] sm:$0xff] %vm1118, %v1103
    %1130 = vst.msk [vmem:[#allocation2 + $0x58] sm:$0xff] %vm1118, %v1104
    %1131 = vst.msk [vmem:[#allocation2 + $0x60] sm:$0xff] %vm1118, %v1105
    %1132 = vst.msk [vmem:[#allocation2 + $0x68] sm:$0xff] %vm1118, %v1106
    %1133 = vst.msk [vmem:[#allocation2 + $0x70] sm:$0xff] %vm1118, %v1107
    %1134 = vst.msk [vmem:[#allocation2 + $0x78] sm:$0xff] %vm1118, %v1108
    %1135 = vst.msk [vmem:[#allocation2 + $0x80] sm:$0xff] %vm1118, %v1109
    %1136 = vst.msk [vmem:[#allocation2 + $0x88] sm:$0xff] %vm1118, %v1110
    %1137 = vst.msk [vmem:[#allocation2 + $0x90] sm:$0xff] %vm1118, %v1111
    %1138 = vst.msk [vmem:[#allocation2 + $0x98] sm:$0xff] %vm1118, %v1112
    %1139 = vst.msk [vmem:[#allocation2 + $0xa0] sm:$0xff] %vm1118, %v1113
    %1140 = vst.msk [vmem:[#allocation2 + $0xa8] sm:$0xff] %vm1118, %v1114
    %1141 = vst.msk [vmem:[#allocation2 + $0xb0] sm:$0xff] %vm1118, %v1115
    %1142 = vst.msk [vmem:[#allocation2 + $0xb8] sm:$0xff] %vm1118, %v1116
    %1143 = vst.msk [vmem:[#allocation2 + $0xc0] sm:$0xff] %vm1118, %v1117
    %v1144 = vld [vmem:[#allocation2] sm:$0xff]
    %v1145 = vld [vmem:[#allocation2 + $0x8] sm:$0xff]
    %v1146 = vld [vmem:[#allocation2 + $0x10] sm:$0xff]
    %v1147 = vld [vmem:[#allocation2 + $0x18] sm:$0xff]
    %v1148 = vld [vmem:[#allocation2 + $0x20] sm:$0x3f]
    %v1149 = vld [vmem:[%s4] sm:$0xff]
    %v1150 = vld [vmem:[%s4 + $0x8] sm:$0xff]
    %v1151 = vld [vmem:[%s4 + $0x10] sm:$0xff]
    %v1152 = vld [vmem:[%s4 + $0x18] sm:$0xff]
    %v1153 = vld [vmem:[#allocation2 + $0x32] sm:$0xff]
    %v1154 = vld [vmem:[#allocation2 + $0x3a] sm:$0xff]
    %v1155 = vld [vmem:[#allocation2 + $0x42] sm:$0xff]
    %v1156 = vld [vmem:[#allocation2 + $0x4a] sm:$0xff]
    %v1157 = vld [vmem:[#allocation2 + $0x52] sm:$0x3f]
    %s1158 = scalar_lea.vmem %s4, 32
    %v1159 = vld [vmem:[%s1158] sm:$0xff]
    %v1160 = vld [vmem:[%s1158 + $0x8] sm:$0xff]
    %v1161 = vld [vmem:[%s1158 + $0x10] sm:$0xff]
    %v1162 = vld [vmem:[%s1158 + $0x18] sm:$0xff]
    %v1164 = vsel %vm1118, %v1153, 0
    %v1167 = vsel %vm1118, %v1154, 0
    %v1170 = vsel %vm1118, %v1155, 0
    %v1173 = vsel %vm1118, %v1156, 0
    %v1176 = vsel %vm1118, %v1157, 0
    %1178 = vmatpush.msra.mxu0 0.0
    %1179 = vmatpush.msra.mxu0 0.0
    %1180 = vmatpush.msra.mxu0 0.0
    %1181 = vmatpush.msra.mxu0 0.0
    %1182 = vmatpush.msra.mxu0 0.0
    %1183 = vmatpush.msra.mxu0 0.0
    %1184 = vmatpush.msra.mxu0 0.0
    %1185 = vmatpush.msra.mxu0 0.0
    %1186 = vmatpush.msra.mxu0 0.0
    %1187 = vmatpush.msra.mxu0 0.0
    %1188 = vmatpush.msra.mxu0 0.0
    %1189 = vmatpush.msra.mxu0 0.0
    %1190 = vmatpush.msra.mxu0 %v1162
    %1191 = vmatpush.msra.mxu0 %v1161
    %1192 = vmatpush.msra.mxu0 %v1160
    %1193 = vmatpush.msra.mxu0 %v1159
    %1194 = vmatmul.f32.gmra.mxu0 %v1164
    %v1195 = vpop.f32.mrf.mxu0
    %v1196 = vadd.f32 0.0, %v1195
    %1197 = vmatmul.f32.gmra.mxu0 %v1167
    %v1198 = vpop.f32.mrf.mxu0
    %v1199 = vadd.f32 0.0, %v1198
    %1200 = vmatmul.f32.gmra.mxu0 %v1170
    %v1201 = vpop.f32.mrf.mxu0
    %v1202 = vadd.f32 0.0, %v1201
    %1203 = vmatmul.f32.gmra.mxu0 %v1173
    %v1204 = vpop.f32.mrf.mxu0
    %v1205 = vadd.f32 0.0, %v1204
    %1206 = vmatmul.f32.gmra.mxu0 %v1176
    %v1207 = vpop.f32.mrf.mxu0
    %v1208 = vadd.f32 0.0, %v1207
    %1209 = vdwg.mxu0
    %v1211 = vsel %vm1118, %v1144, 0
    %v1214 = vsel %vm1118, %v1145, 0
    %v1217 = vsel %vm1118, %v1146, 0
    %v1220 = vsel %vm1118, %v1147, 0
    %v1223 = vsel %vm1118, %v1148, 0
    %1225 = vmatpush.msra.mxu0 0.0
    %1226 = vmatpush.msra.mxu0 0.0
    %1227 = vmatpush.msra.mxu0 0.0
    %1228 = vmatpush.msra.mxu0 0.0
    %1229 = vmatpush.msra.mxu0 0.0
    %1230 = vmatpush.msra.mxu0 0.0
    %1231 = vmatpush.msra.mxu0 0.0
    %1232 = vmatpush.msra.mxu0 0.0
    %1233 = vmatpush.msra.mxu0 0.0
    %1234 = vmatpush.msra.mxu0 0.0
    %1235 = vmatpush.msra.mxu0 0.0
    %1236 = vmatpush.msra.mxu0 0.0
    %1237 = vmatpush.msra.mxu0 %v1152
    %1238 = vmatpush.msra.mxu0 %v1151
    %1239 = vmatpush.msra.mxu0 %v1150
    %1240 = vmatpush.msra.mxu0 %v1149
    %1241 = vmatmul.f32.gmra.mxu0 %v1211
    %v1242 = vpop.f32.mrf.mxu0
    %v1243 = vadd.f32 %v1196, %v1242
    %1244 = vmatmul.f32.gmra.mxu0 %v1214
    %v1245 = vpop.f32.mrf.mxu0
    %v1246 = vadd.f32 %v1199, %v1245
    %1247 = vmatmul.f32.gmra.mxu0 %v1217
    %v1248 = vpop.f32.mrf.mxu0
    %v1249 = vadd.f32 %v1202, %v1248
    %1250 = vmatmul.f32.gmra.mxu0 %v1220
    %v1251 = vpop.f32.mrf.mxu0
    %v1252 = vadd.f32 %v1205, %v1251
    %1253 = vmatmul.f32.gmra.mxu0 %v1223
    %v1254 = vpop.f32.mrf.mxu0
    %v1255 = vadd.f32 %v1208, %v1254
    %1256 = vdwg.mxu0
    %v1257 = vld [vmem:[#allocation2 + $0x2] sm:$0xff]
    %v1258 = vld [vmem:[#allocation2 + $0xa] sm:$0xff]
    %v1259 = vld [vmem:[#allocation2 + $0x12] sm:$0xff]
    %v1260 = vld [vmem:[#allocation2 + $0x1a] sm:$0xff]
    %v1261 = vld [vmem:[#allocation2 + $0x22] sm:$0x3f]
    %s1262 = scalar_lea.vmem %s4, 64
    %v1263 = vld [vmem:[%s1262] sm:$0xff]
    %v1264 = vld [vmem:[%s1262 + $0x8] sm:$0xff]
    %v1265 = vld [vmem:[%s1262 + $0x10] sm:$0xff]
    %v1266 = vld [vmem:[%s1262 + $0x18] sm:$0xff]
    %v1268 = vsel %vm1118, %v1257, 0
    %v1271 = vsel %vm1118, %v1258, 0
    %v1274 = vsel %vm1118, %v1259, 0
    %v1277 = vsel %vm1118, %v1260, 0
    %v1280 = vsel %vm1118, %v1261, 0
    %1282 = vmatpush.msra.mxu0 0.0
    %1283 = vmatpush.msra.mxu0 0.0
    %1284 = vmatpush.msra.mxu0 0.0
    %1285 = vmatpush.msra.mxu0 0.0
    %1286 = vmatpush.msra.mxu0 0.0
    %1287 = vmatpush.msra.mxu0 0.0
    %1288 = vmatpush.msra.mxu0 0.0
    %1289 = vmatpush.msra.mxu0 0.0
    %1290 = vmatpush.msra.mxu0 0.0
    %1291 = vmatpush.msra.mxu0 0.0
    %1292 = vmatpush.msra.mxu0 0.0
    %1293 = vmatpush.msra.mxu0 0.0
    %1294 = vmatpush.msra.mxu0 %v1266
    %1295 = vmatpush.msra.mxu0 %v1265
    %1296 = vmatpush.msra.mxu0 %v1264
    %1297 = vmatpush.msra.mxu0 %v1263
    %1298 = vmatmul.f32.gmra.mxu0 %v1268
    %v1299 = vpop.f32.mrf.mxu0
    %v1300 = vadd.f32 0.0, %v1299
    %1301 = vmatmul.f32.gmra.mxu0 %v1271
    %v1302 = vpop.f32.mrf.mxu0
    %v1303 = vadd.f32 0.0, %v1302
    %1304 = vmatmul.f32.gmra.mxu0 %v1274
    %v1305 = vpop.f32.mrf.mxu0
    %v1306 = vadd.f32 0.0, %v1305
    %1307 = vmatmul.f32.gmra.mxu0 %v1277
    %v1308 = vpop.f32.mrf.mxu0
    %v1309 = vadd.f32 0.0, %v1308
    %1310 = vmatmul.f32.gmra.mxu0 %v1280
    %v1311 = vpop.f32.mrf.mxu0
    %v1312 = vadd.f32 0.0, %v1311
    %1313 = vdwg.mxu0
    %v1314 = vadd.f32 %v1243, %v1300
    %v1315 = vadd.f32 %v1246, %v1303
    %v1316 = vadd.f32 %v1249, %v1306
    %v1317 = vadd.f32 %v1252, %v1309
    %v1318 = vadd.f32 %v1255, %v1312
    %v1319 = vld [vmem:[#allocation2 + $0x64] sm:$0xff]
    %v1320 = vld [vmem:[#allocation2 + $0x6c] sm:$0xff]
    %v1321 = vld [vmem:[#allocation2 + $0x74] sm:$0xff]
    %v1322 = vld [vmem:[#allocation2 + $0x7c] sm:$0xff]
    %v1323 = vld [vmem:[#allocation2 + $0x84] sm:$0x3f]
    %s1324 = scalar_lea.vmem %s4, 96
    %v1325 = vld [vmem:[%s1324] sm:$0xff]
    %v1326 = vld [vmem:[%s1324 + $0x8] sm:$0xff]
    %v1327 = vld [vmem:[%s1324 + $0x10] sm:$0xff]
    %v1328 = vld [vmem:[%s1324 + $0x18] sm:$0xff]
    %v1330 = vsel %vm1118, %v1319, 0
    %v1333 = vsel %vm1118, %v1320, 0
    %v1336 = vsel %vm1118, %v1321, 0
    %v1339 = vsel %vm1118, %v1322, 0
    %v1342 = vsel %vm1118, %v1323, 0
    %1344 = vmatpush.msra.mxu0 0.0
    %1345 = vmatpush.msra.mxu0 0.0
    %1346 = vmatpush.msra.mxu0 0.0
    %1347 = vmatpush.msra.mxu0 0.0
    %1348 = vmatpush.msra.mxu0 0.0
    %1349 = vmatpush.msra.mxu0 0.0
    %1350 = vmatpush.msra.mxu0 0.0
    %1351 = vmatpush.msra.mxu0 0.0
    %1352 = vmatpush.msra.mxu0 0.0
    %1353 = vmatpush.msra.mxu0 0.0
    %1354 = vmatpush.msra.mxu0 0.0
    %1355 = vmatpush.msra.mxu0 0.0
    %1356 = vmatpush.msra.mxu0 %v1328
    %1357 = vmatpush.msra.mxu0 %v1327
    %1358 = vmatpush.msra.mxu0 %v1326
    %1359 = vmatpush.msra.mxu0 %v1325
    %1360 = vmatmul.f32.gmra.mxu0 %v1330
    %v1361 = vpop.f32.mrf.mxu0
    %v1362 = vadd.f32 0.0, %v1361
    %1363 = vmatmul.f32.gmra.mxu0 %v1333
    %v1364 = vpop.f32.mrf.mxu0
    %v1365 = vadd.f32 0.0, %v1364
    %1366 = vmatmul.f32.gmra.mxu0 %v1336
    %v1367 = vpop.f32.mrf.mxu0
    %v1368 = vadd.f32 0.0, %v1367
    %1369 = vmatmul.f32.gmra.mxu0 %v1339
    %v1370 = vpop.f32.mrf.mxu0
    %v1371 = vadd.f32 0.0, %v1370
    %1372 = vmatmul.f32.gmra.mxu0 %v1342
    %v1373 = vpop.f32.mrf.mxu0
    %v1374 = vadd.f32 0.0, %v1373
    %1375 = vdwg.mxu0
    %v1376 = vadd.f32 %v1314, %v1362
    %v1377 = vadd.f32 %v1315, %v1365
    %v1378 = vadd.f32 %v1316, %v1368
    %v1379 = vadd.f32 %v1317, %v1371
    %v1380 = vadd.f32 %v1318, %v1374
    %v1381 = vld [vmem:[#allocation2 + $0x96] sm:$0xff]
    %v1382 = vld [vmem:[#allocation2 + $0x9e] sm:$0xff]
    %v1383 = vld [vmem:[#allocation2 + $0xa6] sm:$0xff]
    %v1384 = vld [vmem:[#allocation2 + $0xae] sm:$0xff]
    %v1385 = vld [vmem:[#allocation2 + $0xb6] sm:$0x3f]
    %s1386 = scalar_lea.vmem %s4, 128
    %v1387 = vld [vmem:[%s1386] sm:$0xff]
    %v1388 = vld [vmem:[%s1386 + $0x8] sm:$0xff]
    %v1389 = vld [vmem:[%s1386 + $0x10] sm:$0xff]
    %v1390 = vld [vmem:[%s1386 + $0x18] sm:$0xff]
    %v1392 = vsel %vm1118, %v1381, 0
    %v1395 = vsel %vm1118, %v1382, 0
    %v1398 = vsel %vm1118, %v1383, 0
    %v1401 = vsel %vm1118, %v1384, 0
    %v1404 = vsel %vm1118, %v1385, 0
    %1406 = vmatpush.msra.mxu0 0.0
    %1407 = vmatpush.msra.mxu0 0.0
    %1408 = vmatpush.msra.mxu0 0.0
    %1409 = vmatpush.msra.mxu0 0.0
    %1410 = vmatpush.msra.mxu0 0.0
    %1411 = vmatpush.msra.mxu0 0.0
    %1412 = vmatpush.msra.mxu0 0.0
    %1413 = vmatpush.msra.mxu0 0.0
    %1414 = vmatpush.msra.mxu0 0.0
    %1415 = vmatpush.msra.mxu0 0.0
    %1416 = vmatpush.msra.mxu0 0.0
    %1417 = vmatpush.msra.mxu0 0.0
    %1418 = vmatpush.msra.mxu0 %v1390
    %1419 = vmatpush.msra.mxu0 %v1389
    %1420 = vmatpush.msra.mxu0 %v1388
    %1421 = vmatpush.msra.mxu0 %v1387
    %1422 = vmatmul.f32.gmra.mxu0 %v1392
    %v1423 = vpop.f32.mrf.mxu0
    %v1424 = vadd.f32 0.0, %v1423
    %1425 = vmatmul.f32.gmra.mxu0 %v1395
    %v1426 = vpop.f32.mrf.mxu0
    %v1427 = vadd.f32 0.0, %v1426
    %1428 = vmatmul.f32.gmra.mxu0 %v1398
    %v1429 = vpop.f32.mrf.mxu0
    %v1430 = vadd.f32 0.0, %v1429
    %1431 = vmatmul.f32.gmra.mxu0 %v1401
    %v1432 = vpop.f32.mrf.mxu0
    %v1433 = vadd.f32 0.0, %v1432
    %1434 = vmatmul.f32.gmra.mxu0 %v1404
    %v1435 = vpop.f32.mrf.mxu0
    %v1436 = vadd.f32 0.0, %v1435
    %1437 = vdwg.mxu0
    %v1438 = vadd.f32 %v1376, %v1424
    %v1439 = vadd.f32 %v1377, %v1427
    %v1440 = vadd.f32 %v1378, %v1430
    %v1441 = vadd.f32 %v1379, %v1433
    %v1442 = vadd.f32 %v1380, %v1436
    %v1443 = vld [vmem:[#allocation2 + $0x66] sm:$0xff]
    %v1444 = vld [vmem:[#allocation2 + $0x6e] sm:$0xff]
    %v1445 = vld [vmem:[#allocation2 + $0x76] sm:$0xff]
    %v1446 = vld [vmem:[#allocation2 + $0x7e] sm:$0xff]
    %v1447 = vld [vmem:[#allocation2 + $0x86] sm:$0x3f]
    %s1448 = scalar_lea.vmem %s4, 160
    %v1449 = vld [vmem:[%s1448] sm:$0xff]
    %v1450 = vld [vmem:[%s1448 + $0x8] sm:$0xff]
    %v1451 = vld [vmem:[%s1448 + $0x10] sm:$0xff]
    %v1452 = vld [vmem:[%s1448 + $0x18] sm:$0xff]
    %v1454 = vsel %vm1118, %v1443, 0
    %v1457 = vsel %vm1118, %v1444, 0
    %v1460 = vsel %vm1118, %v1445, 0
    %v1463 = vsel %vm1118, %v1446, 0
    %v1466 = vsel %vm1118, %v1447, 0
    %1468 = vmatpush.msra.mxu0 0.0
    %1469 = vmatpush.msra.mxu0 0.0
    %1470 = vmatpush.msra.mxu0 0.0
    %1471 = vmatpush.msra.mxu0 0.0
    %1472 = vmatpush.msra.mxu0 0.0
    %1473 = vmatpush.msra.mxu0 0.0
    %1474 = vmatpush.msra.mxu0 0.0
    %1475 = vmatpush.msra.mxu0 0.0
    %1476 = vmatpush.msra.mxu0 0.0
    %1477 = vmatpush.msra.mxu0 0.0
    %1478 = vmatpush.msra.mxu0 0.0
    %1479 = vmatpush.msra.mxu0 0.0
    %1480 = vmatpush.msra.mxu0 %v1452
    %1481 = vmatpush.msra.mxu0 %v1451
    %1482 = vmatpush.msra.mxu0 %v1450
    %1483 = vmatpush.msra.mxu0 %v1449
    %1484 = vmatmul.f32.gmra.mxu0 %v1454
    %v1485 = vpop.f32.mrf.mxu0
    %v1486 = vadd.f32 0.0, %v1485
    %1487 = vmatmul.f32.gmra.mxu0 %v1457
    %v1488 = vpop.f32.mrf.mxu0
    %v1489 = vadd.f32 0.0, %v1488
    %1490 = vmatmul.f32.gmra.mxu0 %v1460
    %v1491 = vpop.f32.mrf.mxu0
    %v1492 = vadd.f32 0.0, %v1491
    %1493 = vmatmul.f32.gmra.mxu0 %v1463
    %v1494 = vpop.f32.mrf.mxu0
    %v1495 = vadd.f32 0.0, %v1494
    %1496 = vmatmul.f32.gmra.mxu0 %v1466
    %v1497 = vpop.f32.mrf.mxu0
    %v1498 = vadd.f32 0.0, %v1497
    %1499 = vdwg.mxu0
    %v1500 = vadd.f32 %v1438, %v1486
    %v1501 = vadd.f32 %v1439, %v1489
    %v1502 = vadd.f32 %v1440, %v1492
    %v1503 = vadd.f32 %v1441, %v1495
    %v1504 = vadd.f32 %v1442, %v1498
    %v1505 = vld [vmem:[#allocation2 + $0xa] sm:$0xff]
    %v1506 = vld [vmem:[#allocation2 + $0x12] sm:$0xff]
    %v1507 = vld [vmem:[#allocation2 + $0x1a] sm:$0xff]
    %v1508 = vld [vmem:[#allocation2 + $0x22] sm:$0xff]
    %v1509 = vld [vmem:[#allocation2 + $0x2a] sm:$0x3f]
    %s1510 = scalar_lea.vmem %s4, 192
    %v1511 = vld [vmem:[%s1510] sm:$0xff]
    %v1512 = vld [vmem:[%s1510 + $0x8] sm:$0xff]
    %v1513 = vld [vmem:[%s1510 + $0x10] sm:$0xff]
    %v1514 = vld [vmem:[%s1510 + $0x18] sm:$0xff]
    %v1516 = vsel %vm1118, %v1505, 0
    %v1519 = vsel %vm1118, %v1506, 0
    %v1522 = vsel %vm1118, %v1507, 0
    %v1525 = vsel %vm1118, %v1508, 0
    %v1528 = vsel %vm1118, %v1509, 0
    %1530 = vmatpush.msra.mxu0 0.0
    %1531 = vmatpush.msra.mxu0 0.0
    %1532 = vmatpush.msra.mxu0 0.0
    %1533 = vmatpush.msra.mxu0 0.0
    %1534 = vmatpush.msra.mxu0 0.0
    %1535 = vmatpush.msra.mxu0 0.0
    %1536 = vmatpush.msra.mxu0 0.0
    %1537 = vmatpush.msra.mxu0 0.0
    %1538 = vmatpush.msra.mxu0 0.0
    %1539 = vmatpush.msra.mxu0 0.0
    %1540 = vmatpush.msra.mxu0 0.0
    %1541 = vmatpush.msra.mxu0 0.0
    %1542 = vmatpush.msra.mxu0 %v1514
    %1543 = vmatpush.msra.mxu0 %v1513
    %1544 = vmatpush.msra.mxu0 %v1512
    %1545 = vmatpush.msra.mxu0 %v1511
    %1546 = vmatmul.f32.gmra.mxu0 %v1516
    %v1547 = vpop.f32.mrf.mxu0
    %v1548 = vadd.f32 0.0, %v1547
    %1549 = vmatmul.f32.gmra.mxu0 %v1519
    %v1550 = vpop.f32.mrf.mxu0
    %v1551 = vadd.f32 0.0, %v1550
    %1552 = vmatmul.f32.gmra.mxu0 %v1522
    %v1553 = vpop.f32.mrf.mxu0
    %v1554 = vadd.f32 0.0, %v1553
    %1555 = vmatmul.f32.gmra.mxu0 %v1525
    %v1556 = vpop.f32.mrf.mxu0
    %v1557 = vadd.f32 0.0, %v1556
    %1558 = vmatmul.f32.gmra.mxu0 %v1528
    %v1559 = vpop.f32.mrf.mxu0
    %v1560 = vadd.f32 0.0, %v1559
    %1561 = vdwg.mxu0
    %v1562 = vadd.f32 %v1500, %v1548
    %v1563 = vadd.f32 %v1501, %v1551
    %v1564 = vadd.f32 %v1502, %v1554
    %v1565 = vadd.f32 %v1503, %v1557
    %v1566 = vadd.f32 %v1504, %v1560
    %v1567 = vld [vmem:[#allocation2 + $0x3c] sm:$0xff]
    %v1568 = vld [vmem:[#allocation2 + $0x44] sm:$0xff]
    %v1569 = vld [vmem:[#allocation2 + $0x4c] sm:$0xff]
    %v1570 = vld [vmem:[#allocation2 + $0x54] sm:$0xff]
    %v1571 = vld [vmem:[#allocation2 + $0x5c] sm:$0x3f]
    %s1572 = scalar_lea.vmem %s4, 224
    %v1573 = vld [vmem:[%s1572] sm:$0xff]
    %v1574 = vld [vmem:[%s1572 + $0x8] sm:$0xff]
    %v1575 = vld [vmem:[%s1572 + $0x10] sm:$0xff]
    %v1576 = vld [vmem:[%s1572 + $0x18] sm:$0xff]
    %v1578 = vsel %vm1118, %v1567, 0
    %v1581 = vsel %vm1118, %v1568, 0
    %v1584 = vsel %vm1118, %v1569, 0
    %v1587 = vsel %vm1118, %v1570, 0
    %v1590 = vsel %vm1118, %v1571, 0
    %1592 = vmatpush.msra.mxu0 0.0
    %1593 = vmatpush.msra.mxu0 0.0
    %1594 = vmatpush.msra.mxu0 0.0
    %1595 = vmatpush.msra.mxu0 0.0
    %1596 = vmatpush.msra.mxu0 0.0
    %1597 = vmatpush.msra.mxu0 0.0
    %1598 = vmatpush.msra.mxu0 0.0
    %1599 = vmatpush.msra.mxu0 0.0
    %1600 = vmatpush.msra.mxu0 0.0
    %1601 = vmatpush.msra.mxu0 0.0
    %1602 = vmatpush.msra.mxu0 0.0
    %1603 = vmatpush.msra.mxu0 0.0
    %1604 = vmatpush.msra.mxu0 %v1576
    %1605 = vmatpush.msra.mxu0 %v1575
    %1606 = vmatpush.msra.mxu0 %v1574
    %1607 = vmatpush.msra.mxu0 %v1573
    %1608 = vmatmul.f32.gmra.mxu0 %v1578
    %v1609 = vpop.f32.mrf.mxu0
    %v1610 = vadd.f32 0.0, %v1609
    %1611 = vmatmul.f32.gmra.mxu0 %v1581
    %v1612 = vpop.f32.mrf.mxu0
    %v1613 = vadd.f32 0.0, %v1612
    %1614 = vmatmul.f32.gmra.mxu0 %v1584
    %v1615 = vpop.f32.mrf.mxu0
    %v1616 = vadd.f32 0.0, %v1615
    %1617 = vmatmul.f32.gmra.mxu0 %v1587
    %v1618 = vpop.f32.mrf.mxu0
    %v1619 = vadd.f32 0.0, %v1618
    %1620 = vmatmul.f32.gmra.mxu0 %v1590
    %v1621 = vpop.f32.mrf.mxu0
    %v1622 = vadd.f32 0.0, %v1621
    %1623 = vdwg.mxu0
    %v1624 = vadd.f32 %v1562, %v1610
    %v1625 = vadd.f32 %v1563, %v1613
    %v1626 = vadd.f32 %v1564, %v1616
    %v1627 = vadd.f32 %v1565, %v1619
    %v1628 = vadd.f32 %v1566, %v1622
    %v1629 = vld [vmem:[#allocation2 + $0xc] sm:$0xff]
    %v1630 = vld [vmem:[#allocation2 + $0x14] sm:$0xff]
    %v1631 = vld [vmem:[#allocation2 + $0x1c] sm:$0xff]
    %v1632 = vld [vmem:[#allocation2 + $0x24] sm:$0xff]
    %v1633 = vld [vmem:[#allocation2 + $0x2c] sm:$0x3f]
    %s1634 = scalar_lea.vmem %s4, 256
    %v1635 = vld [vmem:[%s1634] sm:$0xff]
    %v1636 = vld [vmem:[%s1634 + $0x8] sm:$0xff]
    %v1637 = vld [vmem:[%s1634 + $0x10] sm:$0xff]
    %v1638 = vld [vmem:[%s1634 + $0x18] sm:$0xff]
    %v1640 = vsel %vm1118, %v1629, 0
    %v1643 = vsel %vm1118, %v1630, 0
    %v1646 = vsel %vm1118, %v1631, 0
    %v1649 = vsel %vm1118, %v1632, 0
    %v1652 = vsel %vm1118, %v1633, 0
    %1654 = vmatpush.msra.mxu0 0.0
    %1655 = vmatpush.msra.mxu0 0.0
    %1656 = vmatpush.msra.mxu0 0.0
    %1657 = vmatpush.msra.mxu0 0.0
    %1658 = vmatpush.msra.mxu0 0.0
    %1659 = vmatpush.msra.mxu0 0.0
    %1660 = vmatpush.msra.mxu0 0.0
    %1661 = vmatpush.msra.mxu0 0.0
    %1662 = vmatpush.msra.mxu0 0.0
    %1663 = vmatpush.msra.mxu0 0.0
    %1664 = vmatpush.msra.mxu0 0.0
    %1665 = vmatpush.msra.mxu0 0.0
    %1666 = vmatpush.msra.mxu0 %v1638
    %1667 = vmatpush.msra.mxu0 %v1637
    %1668 = vmatpush.msra.mxu0 %v1636
    %1669 = vmatpush.msra.mxu0 %v1635
    %1670 = vmatmul.f32.gmra.mxu0 %v1640
    %v1671 = vpop.f32.mrf.mxu0
    %v1672 = vadd.f32 0.0, %v1671
    %1673 = vmatmul.f32.gmra.mxu0 %v1643
    %v1674 = vpop.f32.mrf.mxu0
    %v1675 = vadd.f32 0.0, %v1674
    %1676 = vmatmul.f32.gmra.mxu0 %v1646
    %v1677 = vpop.f32.mrf.mxu0
    %v1678 = vadd.f32 0.0, %v1677
    %1679 = vmatmul.f32.gmra.mxu0 %v1649
    %v1680 = vpop.f32.mrf.mxu0
    %v1681 = vadd.f32 0.0, %v1680
    %1682 = vmatmul.f32.gmra.mxu0 %v1652
    %v1683 = vpop.f32.mrf.mxu0
    %v1684 = vadd.f32 0.0, %v1683
    %1685 = vdwg.mxu0
    %v1686 = vadd.f32 %v1624, %v1672
    %v1687 = vadd.f32 %v1625, %v1675
    %v1688 = vadd.f32 %v1626, %v1678
    %v1689 = vadd.f32 %v1627, %v1681
    %v1690 = vadd.f32 %v1628, %v1684
    %1691 = vmatpush.msra.mxu0 0.0
    %1692 = vmatpush.msra.mxu0 0.0
    %1693 = vmatpush.msra.mxu0 0.0
    %1694 = vmatpush.msra.mxu0 0.0
    %1695 = vmatpush.msra.mxu0 0.0
    %1696 = vmatpush.msra.mxu0 0.0
    %1697 = vmatpush.msra.mxu0 0.0
    %1698 = vmatpush.msra.mxu0 0.0
    %1699 = vmatpush.msra.mxu0 0.0
    %1700 = vmatpush.msra.mxu0 0.0
    %1701 = vmatpush.msra.mxu0 0.0
    %1702 = vmatpush.msra.mxu0 0.0
    %1703 = vmatpush.msra.mxu0 %v1162
    %1704 = vmatpush.msra.mxu0 %v1161
    %1705 = vmatpush.msra.mxu0 %v1160
    %1706 = vmatpush.msra.mxu0 %v1159
    %1707 = vmatmul.f32.gmra.mxu0 %v1268
    %v1708 = vpop.f32.mrf.mxu0
    %v1709 = vadd.f32 0.0, %v1708
    %1710 = vmatmul.f32.gmra.mxu0 %v1271
    %v1711 = vpop.f32.mrf.mxu0
    %v1712 = vadd.f32 0.0, %v1711
    %1713 = vmatmul.f32.gmra.mxu0 %v1274
    %v1714 = vpop.f32.mrf.mxu0
    %v1715 = vadd.f32 0.0, %v1714
    %1716 = vmatmul.f32.gmra.mxu0 %v1277
    %v1717 = vpop.f32.mrf.mxu0
    %v1718 = vadd.f32 0.0, %v1717
    %1719 = vmatmul.f32.gmra.mxu0 %v1280
    %v1720 = vpop.f32.mrf.mxu0
    %v1721 = vadd.f32 0.0, %v1720
    %1722 = vdwg.mxu0
    %1723 = vmatpush.msra.mxu0 0.0
    %1724 = vmatpush.msra.mxu0 0.0
    %1725 = vmatpush.msra.mxu0 0.0
    %1726 = vmatpush.msra.mxu0 0.0
    %1727 = vmatpush.msra.mxu0 0.0
    %1728 = vmatpush.msra.mxu0 0.0
    %1729 = vmatpush.msra.mxu0 0.0
    %1730 = vmatpush.msra.mxu0 0.0
    %1731 = vmatpush.msra.mxu0 0.0
    %1732 = vmatpush.msra.mxu0 0.0
    %1733 = vmatpush.msra.mxu0 0.0
    %1734 = vmatpush.msra.mxu0 0.0
    %1735 = vmatpush.msra.mxu0 %v1152
    %1736 = vmatpush.msra.mxu0 %v1151
    %1737 = vmatpush.msra.mxu0 %v1150
    %1738 = vmatpush.msra.mxu0 %v1149
    %1739 = vmatmul.f32.gmra.mxu0 %v1164
    %v1740 = vpop.f32.mrf.mxu0
    %v1741 = vadd.f32 %v1709, %v1740
    %1742 = vmatmul.f32.gmra.mxu0 %v1167
    %v1743 = vpop.f32.mrf.mxu0
    %v1744 = vadd.f32 %v1712, %v1743
    %1745 = vmatmul.f32.gmra.mxu0 %v1170
    %v1746 = vpop.f32.mrf.mxu0
    %v1747 = vadd.f32 %v1715, %v1746
    %1748 = vmatmul.f32.gmra.mxu0 %v1173
    %v1749 = vpop.f32.mrf.mxu0
    %v1750 = vadd.f32 %v1718, %v1749
    %1751 = vmatmul.f32.gmra.mxu0 %v1176
    %v1752 = vpop.f32.mrf.mxu0
    %v1753 = vadd.f32 %v1721, %v1752
    %1754 = vdwg.mxu0
    %v1755 = vld [vmem:[#allocation2 + $0x34] sm:$0xff]
    %v1756 = vld [vmem:[#allocation2 + $0x3c] sm:$0xff]
    %v1757 = vld [vmem:[#allocation2 + $0x44] sm:$0xff]
    %v1758 = vld [vmem:[#allocation2 + $0x4c] sm:$0xff]
    %v1759 = vld [vmem:[#allocation2 + $0x54] sm:$0x3f]
    %v1761 = vsel %vm1118, %v1755, 0
    %v1764 = vsel %vm1118, %v1756, 0
    %v1767 = vsel %vm1118, %v1757, 0
    %v1770 = vsel %vm1118, %v1758, 0
    %v1773 = vsel %vm1118, %v1759, 0
    %1775 = vmatpush.msra.mxu0 0.0
    %1776 = vmatpush.msra.mxu0 0.0
    %1777 = vmatpush.msra.mxu0 0.0
    %1778 = vmatpush.msra.mxu0 0.0
    %1779 = vmatpush.msra.mxu0 0.0
    %1780 = vmatpush.msra.mxu0 0.0
    %1781 = vmatpush.msra.mxu0 0.0
    %1782 = vmatpush.msra.mxu0 0.0
    %1783 = vmatpush.msra.mxu0 0.0
    %1784 = vmatpush.msra.mxu0 0.0
    %1785 = vmatpush.msra.mxu0 0.0
    %1786 = vmatpush.msra.mxu0 0.0
    %1787 = vmatpush.msra.mxu0 %v1266
    %1788 = vmatpush.msra.mxu0 %v1265
    %1789 = vmatpush.msra.mxu0 %v1264
    %1790 = vmatpush.msra.mxu0 %v1263
    %1791 = vmatmul.f32.gmra.mxu0 %v1761
    %v1792 = vpop.f32.mrf.mxu0
    %v1793 = vadd.f32 0.0, %v1792
    %1794 = vmatmul.f32.gmra.mxu0 %v1764
    %v1795 = vpop.f32.mrf.mxu0
    %v1796 = vadd.f32 0.0, %v1795
    %1797 = vmatmul.f32.gmra.mxu0 %v1767
    %v1798 = vpop.f32.mrf.mxu0
    %v1799 = vadd.f32 0.0, %v1798
    %1800 = vmatmul.f32.gmra.mxu0 %v1770
    %v1801 = vpop.f32.mrf.mxu0
    %v1802 = vadd.f32 0.0, %v1801
    %1803 = vmatmul.f32.gmra.mxu0 %v1773
    %v1804 = vpop.f32.mrf.mxu0
    %v1805 = vadd.f32 0.0, %v1804
    %1806 = vdwg.mxu0
    %v1807 = vadd.f32 %v1741, %v1793
    %v1808 = vadd.f32 %v1744, %v1796
    %v1809 = vadd.f32 %v1747, %v1799
    %v1810 = vadd.f32 %v1750, %v1802
    %v1811 = vadd.f32 %v1753, %v1805
    %1812 = vmatpush.msra.mxu0 0.0
    %1813 = vmatpush.msra.mxu0 0.0
    %1814 = vmatpush.msra.mxu0 0.0
    %1815 = vmatpush.msra.mxu0 0.0
    %1816 = vmatpush.msra.mxu0 0.0
    %1817 = vmatpush.msra.mxu0 0.0
    %1818 = vmatpush.msra.mxu0 0.0
    %1819 = vmatpush.msra.mxu0 0.0
    %1820 = vmatpush.msra.mxu0 0.0
    %1821 = vmatpush.msra.mxu0 0.0
    %1822 = vmatpush.msra.mxu0 0.0
    %1823 = vmatpush.msra.mxu0 0.0
    %1824 = vmatpush.msra.mxu0 %v1328
    %1825 = vmatpush.msra.mxu0 %v1327
    %1826 = vmatpush.msra.mxu0 %v1326
    %1827 = vmatpush.msra.mxu0 %v1325
    %1828 = vmatmul.f32.gmra.mxu0 %v1392
    %v1829 = vpop.f32.mrf.mxu0
    %v1830 = vadd.f32 0.0, %v1829
    %1831 = vmatmul.f32.gmra.mxu0 %v1395
    %v1832 = vpop.f32.mrf.mxu0
    %v1833 = vadd.f32 0.0, %v1832
    %1834 = vmatmul.f32.gmra.mxu0 %v1398
    %v1835 = vpop.f32.mrf.mxu0
    %v1836 = vadd.f32 0.0, %v1835
    %1837 = vmatmul.f32.gmra.mxu0 %v1401
    %v1838 = vpop.f32.mrf.mxu0
    %v1839 = vadd.f32 0.0, %v1838
    %1840 = vmatmul.f32.gmra.mxu0 %v1404
    %v1841 = vpop.f32.mrf.mxu0
    %v1842 = vadd.f32 0.0, %v1841
    %1843 = vdwg.mxu0
    %v1844 = vadd.f32 %v1807, %v1830
    %v1845 = vadd.f32 %v1808, %v1833
    %v1846 = vadd.f32 %v1809, %v1836
    %v1847 = vadd.f32 %v1810, %v1839
    %v1848 = vadd.f32 %v1811, %v1842
    %1849 = vmatpush.msra.mxu0 0.0
    %1850 = vmatpush.msra.mxu0 0.0
    %1851 = vmatpush.msra.mxu0 0.0
    %1852 = vmatpush.msra.mxu0 0.0
    %1853 = vmatpush.msra.mxu0 0.0
    %1854 = vmatpush.msra.mxu0 0.0
    %1855 = vmatpush.msra.mxu0 0.0
    %1856 = vmatpush.msra.mxu0 0.0
    %1857 = vmatpush.msra.mxu0 0.0
    %1858 = vmatpush.msra.mxu0 0.0
    %1859 = vmatpush.msra.mxu0 0.0
    %1860 = vmatpush.msra.mxu0 0.0
    %1861 = vmatpush.msra.mxu0 %v1390
    %1862 = vmatpush.msra.mxu0 %v1389
    %1863 = vmatpush.msra.mxu0 %v1388
    %1864 = vmatpush.msra.mxu0 %v1387
    %1865 = vmatmul.f32.gmra.mxu0 %v1454
    %v1866 = vpop.f32.mrf.mxu0
    %v1867 = vadd.f32 0.0, %v1866
    %1868 = vmatmul.f32.gmra.mxu0 %v1457
    %v1869 = vpop.f32.mrf.mxu0
    %v1870 = vadd.f32 0.0, %v1869
    %1871 = vmatmul.f32.gmra.mxu0 %v1460
    %v1872 = vpop.f32.mrf.mxu0
    %v1873 = vadd.f32 0.0, %v1872
    %1874 = vmatmul.f32.gmra.mxu0 %v1463
    %v1875 = vpop.f32.mrf.mxu0
    %v1876 = vadd.f32 0.0, %v1875
    %1877 = vmatmul.f32.gmra.mxu0 %v1466
    %v1878 = vpop.f32.mrf.mxu0
    %v1879 = vadd.f32 0.0, %v1878
    %1880 = vdwg.mxu0
    %v1881 = vadd.f32 %v1844, %v1867
    %v1882 = vadd.f32 %v1845, %v1870
    %v1883 = vadd.f32 %v1846, %v1873
    %v1884 = vadd.f32 %v1847, %v1876
    %v1885 = vadd.f32 %v1848, %v1879
    %v1886 = vld [vmem:[#allocation2 + $0x98] sm:$0xff]
    %v1887 = vld [vmem:[#allocation2 + $0xa0] sm:$0xff]
    %v1888 = vld [vmem:[#allocation2 + $0xa8] sm:$0xff]
    %v1889 = vld [vmem:[#allocation2 + $0xb0] sm:$0xff]
    %v1890 = vld [vmem:[#allocation2 + $0xb8] sm:$0x3f]
    %v1892 = vsel %vm1118, %v1886, 0
    %v1895 = vsel %vm1118, %v1887, 0
    %v1898 = vsel %vm1118, %v1888, 0
    %v1901 = vsel %vm1118, %v1889, 0
    %v1904 = vsel %vm1118, %v1890, 0
    %1906 = vmatpush.msra.mxu0 0.0
    %1907 = vmatpush.msra.mxu0 0.0
    %1908 = vmatpush.msra.mxu0 0.0
    %1909 = vmatpush.msra.mxu0 0.0
    %1910 = vmatpush.msra.mxu0 0.0
    %1911 = vmatpush.msra.mxu0 0.0
    %1912 = vmatpush.msra.mxu0 0.0
    %1913 = vmatpush.msra.mxu0 0.0
    %1914 = vmatpush.msra.mxu0 0.0
    %1915 = vmatpush.msra.mxu0 0.0
    %1916 = vmatpush.msra.mxu0 0.0
    %1917 = vmatpush.msra.mxu0 0.0
    %1918 = vmatpush.msra.mxu0 %v1452
    %1919 = vmatpush.msra.mxu0 %v1451
    %1920 = vmatpush.msra.mxu0 %v1450
    %1921 = vmatpush.msra.mxu0 %v1449
    %1922 = vmatmul.f32.gmra.mxu0 %v1892
    %v1923 = vpop.f32.mrf.mxu0
    %v1924 = vadd.f32 0.0, %v1923
    %1925 = vmatmul.f32.gmra.mxu0 %v1895
    %v1926 = vpop.f32.mrf.mxu0
    %v1927 = vadd.f32 0.0, %v1926
    %1928 = vmatmul.f32.gmra.mxu0 %v1898
    %v1929 = vpop.f32.mrf.mxu0
    %v1930 = vadd.f32 0.0, %v1929
    %1931 = vmatmul.f32.gmra.mxu0 %v1901
    %v1932 = vpop.f32.mrf.mxu0
    %v1933 = vadd.f32 0.0, %v1932
    %1934 = vmatmul.f32.gmra.mxu0 %v1904
    %v1935 = vpop.f32.mrf.mxu0
    %v1936 = vadd.f32 0.0, %v1935
    %1937 = vdwg.mxu0
    %v1938 = vadd.f32 %v1881, %v1924
    %v1939 = vadd.f32 %v1882, %v1927
    %v1940 = vadd.f32 %v1883, %v1930
    %v1941 = vadd.f32 %v1884, %v1933
    %v1942 = vadd.f32 %v1885, %v1936
    %1943 = vmatpush.msra.mxu0 0.0
    %1944 = vmatpush.msra.mxu0 0.0
    %1945 = vmatpush.msra.mxu0 0.0
    %1946 = vmatpush.msra.mxu0 0.0
    %1947 = vmatpush.msra.mxu0 0.0
    %1948 = vmatpush.msra.mxu0 0.0
    %1949 = vmatpush.msra.mxu0 0.0
    %1950 = vmatpush.msra.mxu0 0.0
    %1951 = vmatpush.msra.mxu0 0.0
    %1952 = vmatpush.msra.mxu0 0.0
    %1953 = vmatpush.msra.mxu0 0.0
    %1954 = vmatpush.msra.mxu0 0.0
    %1955 = vmatpush.msra.mxu0 %v1514
    %1956 = vmatpush.msra.mxu0 %v1513
    %1957 = vmatpush.msra.mxu0 %v1512
    %1958 = vmatpush.msra.mxu0 %v1511
    %1959 = vmatmul.f32.gmra.mxu0 %v1578
    %v1960 = vpop.f32.mrf.mxu0
    %v1961 = vadd.f32 0.0, %v1960
    %1962 = vmatmul.f32.gmra.mxu0 %v1581
    %v1963 = vpop.f32.mrf.mxu0
    %v1964 = vadd.f32 0.0, %v1963
    %1965 = vmatmul.f32.gmra.mxu0 %v1584
    %v1966 = vpop.f32.mrf.mxu0
    %v1967 = vadd.f32 0.0, %v1966
    %1968 = vmatmul.f32.gmra.mxu0 %v1587
    %v1969 = vpop.f32.mrf.mxu0
    %v1970 = vadd.f32 0.0, %v1969
    %1971 = vmatmul.f32.gmra.mxu0 %v1590
    %v1972 = vpop.f32.mrf.mxu0
    %v1973 = vadd.f32 0.0, %v1972
    %1974 = vdwg.mxu0
    %v1975 = vadd.f32 %v1938, %v1961
    %v1976 = vadd.f32 %v1939, %v1964
    %v1977 = vadd.f32 %v1940, %v1967
    %v1978 = vadd.f32 %v1941, %v1970
    %v1979 = vadd.f32 %v1942, %v1973
    %1980 = vmatpush.msra.mxu0 0.0
    %1981 = vmatpush.msra.mxu0 0.0
    %1982 = vmatpush.msra.mxu0 0.0
    %1983 = vmatpush.msra.mxu0 0.0
    %1984 = vmatpush.msra.mxu0 0.0
    %1985 = vmatpush.msra.mxu0 0.0
    %1986 = vmatpush.msra.mxu0 0.0
    %1987 = vmatpush.msra.mxu0 0.0
    %1988 = vmatpush.msra.mxu0 0.0
    %1989 = vmatpush.msra.mxu0 0.0
    %1990 = vmatpush.msra.mxu0 0.0
    %1991 = vmatpush.msra.mxu0 0.0
    %1992 = vmatpush.msra.mxu0 %v1576
    %1993 = vmatpush.msra.mxu0 %v1575
    %1994 = vmatpush.msra.mxu0 %v1574
    %1995 = vmatpush.msra.mxu0 %v1573
    %1996 = vmatmul.f32.gmra.mxu0 %v1640
    %v1997 = vpop.f32.mrf.mxu0
    %v1998 = vadd.f32 0.0, %v1997
    %1999 = vmatmul.f32.gmra.mxu0 %v1643
    %v2000 = vpop.f32.mrf.mxu0
    %v2001 = vadd.f32 0.0, %v2000
    %2002 = vmatmul.f32.gmra.mxu0 %v1646
    %v2003 = vpop.f32.mrf.mxu0
    %v2004 = vadd.f32 0.0, %v2003
    %2005 = vmatmul.f32.gmra.mxu0 %v1649
    %v2006 = vpop.f32.mrf.mxu0
    %v2007 = vadd.f32 0.0, %v2006
    %2008 = vmatmul.f32.gmra.mxu0 %v1652
    %v2009 = vpop.f32.mrf.mxu0
    %v2010 = vadd.f32 0.0, %v2009
    %2011 = vdwg.mxu0
    %v2012 = vadd.f32 %v1975, %v1998
    %v2013 = vadd.f32 %v1976, %v2001
    %v2014 = vadd.f32 %v1977, %v2004
    %v2015 = vadd.f32 %v1978, %v2007
    %v2016 = vadd.f32 %v1979, %v2010
    %v2017 = vld [vmem:[#allocation2 + $0x3e] sm:$0xff]
    %v2018 = vld [vmem:[#allocation2 + $0x46] sm:$0xff]
    %v2019 = vld [vmem:[#allocation2 + $0x4e] sm:$0xff]
    %v2020 = vld [vmem:[#allocation2 + $0x56] sm:$0xff]
    %v2021 = vld [vmem:[#allocation2 + $0x5e] sm:$0x3f]
    %v2023 = vsel %vm1118, %v2017, 0
    %v2026 = vsel %vm1118, %v2018, 0
    %v2029 = vsel %vm1118, %v2019, 0
    %v2032 = vsel %vm1118, %v2020, 0
    %v2035 = vsel %vm1118, %v2021, 0
    %2037 = vmatpush.msra.mxu0 0.0
    %2038 = vmatpush.msra.mxu0 0.0
    %2039 = vmatpush.msra.mxu0 0.0
    %2040 = vmatpush.msra.mxu0 0.0
    %2041 = vmatpush.msra.mxu0 0.0
    %2042 = vmatpush.msra.mxu0 0.0
    %2043 = vmatpush.msra.mxu0 0.0
    %2044 = vmatpush.msra.mxu0 0.0
    %2045 = vmatpush.msra.mxu0 0.0
    %2046 = vmatpush.msra.mxu0 0.0
    %2047 = vmatpush.msra.mxu0 0.0
    %2048 = vmatpush.msra.mxu0 0.0
    %2049 = vmatpush.msra.mxu0 %v1638
    %2050 = vmatpush.msra.mxu0 %v1637
    %2051 = vmatpush.msra.mxu0 %v1636
    %2052 = vmatpush.msra.mxu0 %v1635
    %2053 = vmatmul.f32.gmra.mxu0 %v2023
    %v2054 = vpop.f32.mrf.mxu0
    %v2055 = vadd.f32 0.0, %v2054
    %2056 = vmatmul.f32.gmra.mxu0 %v2026
    %v2057 = vpop.f32.mrf.mxu0
    %v2058 = vadd.f32 0.0, %v2057
    %2059 = vmatmul.f32.gmra.mxu0 %v2029
    %v2060 = vpop.f32.mrf.mxu0
    %v2061 = vadd.f32 0.0, %v2060
    %2062 = vmatmul.f32.gmra.mxu0 %v2032
    %v2063 = vpop.f32.mrf.mxu0
    %v2064 = vadd.f32 0.0, %v2063
    %2065 = vmatmul.f32.gmra.mxu0 %v2035
    %v2066 = vpop.f32.mrf.mxu0
    %v2067 = vadd.f32 0.0, %v2066
    %2068 = vdwg.mxu0
    %v2069 = vadd.f32 %v2012, %v2055
    %v2070 = vadd.f32 %v2013, %v2058
    %v2071 = vadd.f32 %v2014, %v2061
    %v2072 = vadd.f32 %v2015, %v2064
    %v2073 = vadd.f32 %v2016, %v2067
    %v2074 = vmax.f32 %v1686, %v2069
    %v2075 = vmax.f32 %v1687, %v2070
    %v2076 = vmax.f32 %v1688, %v2071
    %v2077 = vmax.f32 %v1689, %v2072
    %v2078 = vmax.f32 %v1690, %v2073
    %2079 = vmatpush.msra.mxu0 0.0
    %2080 = vmatpush.msra.mxu0 0.0
    %2081 = vmatpush.msra.mxu0 0.0
    %2082 = vmatpush.msra.mxu0 0.0
    %2083 = vmatpush.msra.mxu0 0.0
    %2084 = vmatpush.msra.mxu0 0.0
    %2085 = vmatpush.msra.mxu0 0.0
    %2086 = vmatpush.msra.mxu0 0.0
    %2087 = vmatpush.msra.mxu0 0.0
    %2088 = vmatpush.msra.mxu0 0.0
    %2089 = vmatpush.msra.mxu0 0.0
    %2090 = vmatpush.msra.mxu0 0.0
    %2091 = vmatpush.msra.mxu0 %v1162
    %2092 = vmatpush.msra.mxu0 %v1161
    %2093 = vmatpush.msra.mxu0 %v1160
    %2094 = vmatpush.msra.mxu0 %v1159
    %2095 = vmatmul.f32.gmra.mxu0 %v1392
    %v2096 = vpop.f32.mrf.mxu0
    %v2097 = vadd.f32 0.0, %v2096
    %2098 = vmatmul.f32.gmra.mxu0 %v1395
    %v2099 = vpop.f32.mrf.mxu0
    %v2100 = vadd.f32 0.0, %v2099
    %2101 = vmatmul.f32.gmra.mxu0 %v1398
    %v2102 = vpop.f32.mrf.mxu0
    %v2103 = vadd.f32 0.0, %v2102
    %2104 = vmatmul.f32.gmra.mxu0 %v1401
    %v2105 = vpop.f32.mrf.mxu0
    %v2106 = vadd.f32 0.0, %v2105
    %2107 = vmatmul.f32.gmra.mxu0 %v1404
    %v2108 = vpop.f32.mrf.mxu0
    %v2109 = vadd.f32 0.0, %v2108
    %2110 = vdwg.mxu0
    %2111 = vmatpush.msra.mxu0 0.0
    %2112 = vmatpush.msra.mxu0 0.0
    %2113 = vmatpush.msra.mxu0 0.0
    %2114 = vmatpush.msra.mxu0 0.0
    %2115 = vmatpush.msra.mxu0 0.0
    %2116 = vmatpush.msra.mxu0 0.0
    %2117 = vmatpush.msra.mxu0 0.0
    %2118 = vmatpush.msra.mxu0 0.0
    %2119 = vmatpush.msra.mxu0 0.0
    %2120 = vmatpush.msra.mxu0 0.0
    %2121 = vmatpush.msra.mxu0 0.0
    %2122 = vmatpush.msra.mxu0 0.0
    %2123 = vmatpush.msra.mxu0 %v1152
    %2124 = vmatpush.msra.mxu0 %v1151
    %2125 = vmatpush.msra.mxu0 %v1150
    %2126 = vmatpush.msra.mxu0 %v1149
    %2127 = vmatmul.f32.gmra.mxu0 %v1330
    %v2128 = vpop.f32.mrf.mxu0
    %v2129 = vadd.f32 %v2097, %v2128
    %2130 = vmatmul.f32.gmra.mxu0 %v1333
    %v2131 = vpop.f32.mrf.mxu0
    %v2132 = vadd.f32 %v2100, %v2131
    %2133 = vmatmul.f32.gmra.mxu0 %v1336
    %v2134 = vpop.f32.mrf.mxu0
    %v2135 = vadd.f32 %v2103, %v2134
    %2136 = vmatmul.f32.gmra.mxu0 %v1339
    %v2137 = vpop.f32.mrf.mxu0
    %v2138 = vadd.f32 %v2106, %v2137
    %2139 = vmatmul.f32.gmra.mxu0 %v1342
    %v2140 = vpop.f32.mrf.mxu0
    %v2141 = vadd.f32 %v2109, %v2140
    %2142 = vdwg.mxu0
    %2143 = vmatpush.msra.mxu0 0.0
    %2144 = vmatpush.msra.mxu0 0.0
    %2145 = vmatpush.msra.mxu0 0.0
    %2146 = vmatpush.msra.mxu0 0.0
    %2147 = vmatpush.msra.mxu0 0.0
    %2148 = vmatpush.msra.mxu0 0.0
    %2149 = vmatpush.msra.mxu0 0.0
    %2150 = vmatpush.msra.mxu0 0.0
    %2151 = vmatpush.msra.mxu0 0.0
    %2152 = vmatpush.msra.mxu0 0.0
    %2153 = vmatpush.msra.mxu0 0.0
    %2154 = vmatpush.msra.mxu0 0.0
    %2155 = vmatpush.msra.mxu0 %v1266
    %2156 = vmatpush.msra.mxu0 %v1265
    %2157 = vmatpush.msra.mxu0 %v1264
    %2158 = vmatpush.msra.mxu0 %v1263
    %2159 = vmatmul.f32.gmra.mxu0 %v1454
    %v2160 = vpop.f32.mrf.mxu0
    %v2161 = vadd.f32 0.0, %v2160
    %2162 = vmatmul.f32.gmra.mxu0 %v1457
    %v2163 = vpop.f32.mrf.mxu0
    %v2164 = vadd.f32 0.0, %v2163
    %2165 = vmatmul.f32.gmra.mxu0 %v1460
    %v2166 = vpop.f32.mrf.mxu0
    %v2167 = vadd.f32 0.0, %v2166
    %2168 = vmatmul.f32.gmra.mxu0 %v1463
    %v2169 = vpop.f32.mrf.mxu0
    %v2170 = vadd.f32 0.0, %v2169
    %2171 = vmatmul.f32.gmra.mxu0 %v1466
    %v2172 = vpop.f32.mrf.mxu0
    %v2173 = vadd.f32 0.0, %v2172
    %2174 = vdwg.mxu0
    %v2175 = vadd.f32 %v2129, %v2161
    %v2176 = vadd.f32 %v2132, %v2164
    %v2177 = vadd.f32 %v2135, %v2167
    %v2178 = vadd.f32 %v2138, %v2170
    %v2179 = vadd.f32 %v2141, %v2173
    %2180 = vmatpush.msra.mxu0 0.0
    %2181 = vmatpush.msra.mxu0 0.0
    %2182 = vmatpush.msra.mxu0 0.0
    %2183 = vmatpush.msra.mxu0 0.0
    %2184 = vmatpush.msra.mxu0 0.0
    %2185 = vmatpush.msra.mxu0 0.0
    %2186 = vmatpush.msra.mxu0 0.0
    %2187 = vmatpush.msra.mxu0 0.0
    %2188 = vmatpush.msra.mxu0 0.0
    %2189 = vmatpush.msra.mxu0 0.0
    %2190 = vmatpush.msra.mxu0 0.0
    %2191 = vmatpush.msra.mxu0 0.0
    %2192 = vmatpush.msra.mxu0 %v1328
    %2193 = vmatpush.msra.mxu0 %v1327
    %2194 = vmatpush.msra.mxu0 %v1326
    %2195 = vmatpush.msra.mxu0 %v1325
    %2196 = vmatmul.f32.gmra.mxu0 %v1516
    %v2197 = vpop.f32.mrf.mxu0
    %v2198 = vadd.f32 0.0, %v2197
    %2199 = vmatmul.f32.gmra.mxu0 %v1519
    %v2200 = vpop.f32.mrf.mxu0
    %v2201 = vadd.f32 0.0, %v2200
    %2202 = vmatmul.f32.gmra.mxu0 %v1522
    %v2203 = vpop.f32.mrf.mxu0
    %v2204 = vadd.f32 0.0, %v2203
    %2205 = vmatmul.f32.gmra.mxu0 %v1525
    %v2206 = vpop.f32.mrf.mxu0
    %v2207 = vadd.f32 0.0, %v2206
    %2208 = vmatmul.f32.gmra.mxu0 %v1528
    %v2209 = vpop.f32.mrf.mxu0
    %v2210 = vadd.f32 0.0, %v2209
    %2211 = vdwg.mxu0
    %v2212 = vadd.f32 %v2175, %v2198
    %v2213 = vadd.f32 %v2176, %v2201
    %v2214 = vadd.f32 %v2177, %v2204
    %v2215 = vadd.f32 %v2178, %v2207
    %v2216 = vadd.f32 %v2179, %v2210
    %2217 = vmatpush.msra.mxu0 0.0
    %2218 = vmatpush.msra.mxu0 0.0
    %2219 = vmatpush.msra.mxu0 0.0
    %2220 = vmatpush.msra.mxu0 0.0
    %2221 = vmatpush.msra.mxu0 0.0
    %2222 = vmatpush.msra.mxu0 0.0
    %2223 = vmatpush.msra.mxu0 0.0
    %2224 = vmatpush.msra.mxu0 0.0
    %2225 = vmatpush.msra.mxu0 0.0
    %2226 = vmatpush.msra.mxu0 0.0
    %2227 = vmatpush.msra.mxu0 0.0
    %2228 = vmatpush.msra.mxu0 0.0
    %2229 = vmatpush.msra.mxu0 %v1390
    %2230 = vmatpush.msra.mxu0 %v1389
    %2231 = vmatpush.msra.mxu0 %v1388
    %2232 = vmatpush.msra.mxu0 %v1387
    %2233 = vmatmul.f32.gmra.mxu0 %v1578
    %v2234 = vpop.f32.mrf.mxu0
    %v2235 = vadd.f32 0.0, %v2234
    %2236 = vmatmul.f32.gmra.mxu0 %v1581
    %v2237 = vpop.f32.mrf.mxu0
    %v2238 = vadd.f32 0.0, %v2237
    %2239 = vmatmul.f32.gmra.mxu0 %v1584
    %v2240 = vpop.f32.mrf.mxu0
    %v2241 = vadd.f32 0.0, %v2240
    %2242 = vmatmul.f32.gmra.mxu0 %v1587
    %v2243 = vpop.f32.mrf.mxu0
    %v2244 = vadd.f32 0.0, %v2243
    %2245 = vmatmul.f32.gmra.mxu0 %v1590
    %v2246 = vpop.f32.mrf.mxu0
    %v2247 = vadd.f32 0.0, %v2246
    %2248 = vdwg.mxu0
    %v2249 = vadd.f32 %v2212, %v2235
    %v2250 = vadd.f32 %v2213, %v2238
    %v2251 = vadd.f32 %v2214, %v2241
    %v2252 = vadd.f32 %v2215, %v2244
    %v2253 = vadd.f32 %v2216, %v2247
    %2254 = vmatpush.msra.mxu0 0.0
    %2255 = vmatpush.msra.mxu0 0.0
    %2256 = vmatpush.msra.mxu0 0.0
    %2257 = vmatpush.msra.mxu0 0.0
    %2258 = vmatpush.msra.mxu0 0.0
    %2259 = vmatpush.msra.mxu0 0.0
    %2260 = vmatpush.msra.mxu0 0.0
    %2261 = vmatpush.msra.mxu0 0.0
    %2262 = vmatpush.msra.mxu0 0.0
    %2263 = vmatpush.msra.mxu0 0.0
    %2264 = vmatpush.msra.mxu0 0.0
    %2265 = vmatpush.msra.mxu0 0.0
    %2266 = vmatpush.msra.mxu0 %v1452
    %2267 = vmatpush.msra.mxu0 %v1451
    %2268 = vmatpush.msra.mxu0 %v1450
    %2269 = vmatpush.msra.mxu0 %v1449
    %2270 = vmatmul.f32.gmra.mxu0 %v1640
    %v2271 = vpop.f32.mrf.mxu0
    %v2272 = vadd.f32 0.0, %v2271
    %2273 = vmatmul.f32.gmra.mxu0 %v1643
    %v2274 = vpop.f32.mrf.mxu0
    %v2275 = vadd.f32 0.0, %v2274
    %2276 = vmatmul.f32.gmra.mxu0 %v1646
    %v2277 = vpop.f32.mrf.mxu0
    %v2278 = vadd.f32 0.0, %v2277
    %2279 = vmatmul.f32.gmra.mxu0 %v1649
    %v2280 = vpop.f32.mrf.mxu0
    %v2281 = vadd.f32 0.0, %v2280
    %2282 = vmatmul.f32.gmra.mxu0 %v1652
    %v2283 = vpop.f32.mrf.mxu0
    %v2284 = vadd.f32 0.0, %v2283
    %2285 = vdwg.mxu0
    %v2286 = vadd.f32 %v2249, %v2272
    %v2287 = vadd.f32 %v2250, %v2275
    %v2288 = vadd.f32 %v2251, %v2278
    %v2289 = vadd.f32 %v2252, %v2281
    %v2290 = vadd.f32 %v2253, %v2284
    %v2291 = vld [vmem:[#allocation2 + $0x6e] sm:$0xff]
    %v2292 = vld [vmem:[#allocation2 + $0x76] sm:$0xff]
    %v2293 = vld [vmem:[#allocation2 + $0x7e] sm:$0xff]
    %v2294 = vld [vmem:[#allocation2 + $0x86] sm:$0xff]
    %v2295 = vld [vmem:[#allocation2 + $0x8e] sm:$0x3f]
    %v2297 = vsel %vm1118, %v2291, 0
    %v2300 = vsel %vm1118, %v2292, 0
    %v2303 = vsel %vm1118, %v2293, 0
    %v2306 = vsel %vm1118, %v2294, 0
    %v2309 = vsel %vm1118, %v2295, 0
    %2311 = vmatpush.msra.mxu0 0.0
    %2312 = vmatpush.msra.mxu0 0.0
    %2313 = vmatpush.msra.mxu0 0.0
    %2314 = vmatpush.msra.mxu0 0.0
    %2315 = vmatpush.msra.mxu0 0.0
    %2316 = vmatpush.msra.mxu0 0.0
    %2317 = vmatpush.msra.mxu0 0.0
    %2318 = vmatpush.msra.mxu0 0.0
    %2319 = vmatpush.msra.mxu0 0.0
    %2320 = vmatpush.msra.mxu0 0.0
    %2321 = vmatpush.msra.mxu0 0.0
    %2322 = vmatpush.msra.mxu0 0.0
    %2323 = vmatpush.msra.mxu0 %v1514
    %2324 = vmatpush.msra.mxu0 %v1513
    %2325 = vmatpush.msra.mxu0 %v1512
    %2326 = vmatpush.msra.mxu0 %v1511
    %2327 = vmatmul.f32.gmra.mxu0 %v2297
    %v2328 = vpop.f32.mrf.mxu0
    %v2329 = vadd.f32 0.0, %v2328
    %2330 = vmatmul.f32.gmra.mxu0 %v2300
    %v2331 = vpop.f32.mrf.mxu0
    %v2332 = vadd.f32 0.0, %v2331
    %2333 = vmatmul.f32.gmra.mxu0 %v2303
    %v2334 = vpop.f32.mrf.mxu0
    %v2335 = vadd.f32 0.0, %v2334
    %2336 = vmatmul.f32.gmra.mxu0 %v2306
    %v2337 = vpop.f32.mrf.mxu0
    %v2338 = vadd.f32 0.0, %v2337
    %2339 = vmatmul.f32.gmra.mxu0 %v2309
    %v2340 = vpop.f32.mrf.mxu0
    %v2341 = vadd.f32 0.0, %v2340
    %2342 = vdwg.mxu0
    %v2343 = vadd.f32 %v2286, %v2329
    %v2344 = vadd.f32 %v2287, %v2332
    %v2345 = vadd.f32 %v2288, %v2335
    %v2346 = vadd.f32 %v2289, %v2338
    %v2347 = vadd.f32 %v2290, %v2341
    %v2348 = vld [vmem:[#allocation2 + $0xa0] sm:$0xff]
    %v2349 = vld [vmem:[#allocation2 + $0xa8] sm:$0xff]
    %v2350 = vld [vmem:[#allocation2 + $0xb0] sm:$0xff]
    %v2351 = vld [vmem:[#allocation2 + $0xb8] sm:$0xff]
    %v2352 = vld [vmem:[#allocation2 + $0xc0] sm:$0x3f]
    %v2354 = vsel %vm1118, %v2348, 0
    %v2357 = vsel %vm1118, %v2349, 0
    %v2360 = vsel %vm1118, %v2350, 0
    %v2363 = vsel %vm1118, %v2351, 0
    %v2366 = vsel %vm1118, %v2352, 0
    %2368 = vmatpush.msra.mxu0 0.0
    %2369 = vmatpush.msra.mxu0 0.0
    %2370 = vmatpush.msra.mxu0 0.0
    %2371 = vmatpush.msra.mxu0 0.0
    %2372 = vmatpush.msra.mxu0 0.0
    %2373 = vmatpush.msra.mxu0 0.0
    %2374 = vmatpush.msra.mxu0 0.0
    %2375 = vmatpush.msra.mxu0 0.0
    %2376 = vmatpush.msra.mxu0 0.0
    %2377 = vmatpush.msra.mxu0 0.0
    %2378 = vmatpush.msra.mxu0 0.0
    %2379 = vmatpush.msra.mxu0 0.0
    %2380 = vmatpush.msra.mxu0 %v1576
    %2381 = vmatpush.msra.mxu0 %v1575
    %2382 = vmatpush.msra.mxu0 %v1574
    %2383 = vmatpush.msra.mxu0 %v1573
    %2384 = vmatmul.f32.gmra.mxu0 %v2354
    %v2385 = vpop.f32.mrf.mxu0
    %v2386 = vadd.f32 0.0, %v2385
    %2387 = vmatmul.f32.gmra.mxu0 %v2357
    %v2388 = vpop.f32.mrf.mxu0
    %v2389 = vadd.f32 0.0, %v2388
    %2390 = vmatmul.f32.gmra.mxu0 %v2360
    %v2391 = vpop.f32.mrf.mxu0
    %v2392 = vadd.f32 0.0, %v2391
    %2393 = vmatmul.f32.gmra.mxu0 %v2363
    %v2394 = vpop.f32.mrf.mxu0
    %v2395 = vadd.f32 0.0, %v2394
    %2396 = vmatmul.f32.gmra.mxu0 %v2366
    %v2397 = vpop.f32.mrf.mxu0
    %v2398 = vadd.f32 0.0, %v2397
    %2399 = vdwg.mxu0
    %v2400 = vadd.f32 %v2343, %v2386
    %v2401 = vadd.f32 %v2344, %v2389
    %v2402 = vadd.f32 %v2345, %v2392
    %v2403 = vadd.f32 %v2346, %v2395
    %v2404 = vadd.f32 %v2347, %v2398
    %v2405 = vld [vmem:[#allocation2 + $0x70] sm:$0xff]
    %v2406 = vld [vmem:[#allocation2 + $0x78] sm:$0xff]
    %v2407 = vld [vmem:[#allocation2 + $0x80] sm:$0xff]
    %v2408 = vld [vmem:[#allocation2 + $0x88] sm:$0xff]
    %v2409 = vld [vmem:[#allocation2 + $0x90] sm:$0x3f]
    %v2411 = vsel %vm1118, %v2405, 0
    %v2414 = vsel %vm1118, %v2406, 0
    %v2417 = vsel %vm1118, %v2407, 0
    %v2420 = vsel %vm1118, %v2408, 0
    %v2423 = vsel %vm1118, %v2409, 0
    %2425 = vmatpush.msra.mxu0 0.0
    %2426 = vmatpush.msra.mxu0 0.0
    %2427 = vmatpush.msra.mxu0 0.0
    %2428 = vmatpush.msra.mxu0 0.0
    %2429 = vmatpush.msra.mxu0 0.0
    %2430 = vmatpush.msra.mxu0 0.0
    %2431 = vmatpush.msra.mxu0 0.0
    %2432 = vmatpush.msra.mxu0 0.0
    %2433 = vmatpush.msra.mxu0 0.0
    %2434 = vmatpush.msra.mxu0 0.0
    %2435 = vmatpush.msra.mxu0 0.0
    %2436 = vmatpush.msra.mxu0 0.0
    %2437 = vmatpush.msra.mxu0 %v1638
    %2438 = vmatpush.msra.mxu0 %v1637
    %2439 = vmatpush.msra.mxu0 %v1636
    %2440 = vmatpush.msra.mxu0 %v1635
    %2441 = vmatmul.f32.gmra.mxu0 %v2411
    %v2442 = vpop.f32.mrf.mxu0
    %v2443 = vadd.f32 0.0, %v2442
    %2444 = vmatmul.f32.gmra.mxu0 %v2414
    %v2445 = vpop.f32.mrf.mxu0
    %v2446 = vadd.f32 0.0, %v2445
    %2447 = vmatmul.f32.gmra.mxu0 %v2417
    %v2448 = vpop.f32.mrf.mxu0
    %v2449 = vadd.f32 0.0, %v2448
    %2450 = vmatmul.f32.gmra.mxu0 %v2420
    %v2451 = vpop.f32.mrf.mxu0
    %v2452 = vadd.f32 0.0, %v2451
    %2453 = vmatmul.f32.gmra.mxu0 %v2423
    %v2454 = vpop.f32.mrf.mxu0
    %v2455 = vadd.f32 0.0, %v2454
    %2456 = vdwg.mxu0
    %v2457 = vadd.f32 %v2400, %v2443
    %v2458 = vadd.f32 %v2401, %v2446
    %v2459 = vadd.f32 %v2402, %v2449
    %v2460 = vadd.f32 %v2403, %v2452
    %v2461 = vadd.f32 %v2404, %v2455
    %v2462 = vmax.f32 %v2074, %v2457
    %v2463 = vmax.f32 %v2075, %v2458
    %v2464 = vmax.f32 %v2076, %v2459
    %v2465 = vmax.f32 %v2077, %v2460
    %v2466 = vmax.f32 %v2078, %v2461
    %2467 = vmatpush.msra.mxu0 0.0
    %2468 = vmatpush.msra.mxu0 0.0
    %2469 = vmatpush.msra.mxu0 0.0
    %2470 = vmatpush.msra.mxu0 0.0
    %2471 = vmatpush.msra.mxu0 0.0
    %2472 = vmatpush.msra.mxu0 0.0
    %2473 = vmatpush.msra.mxu0 0.0
    %2474 = vmatpush.msra.mxu0 0.0
    %2475 = vmatpush.msra.mxu0 0.0
    %2476 = vmatpush.msra.mxu0 0.0
    %2477 = vmatpush.msra.mxu0 0.0
    %2478 = vmatpush.msra.mxu0 0.0
    %2479 = vmatpush.msra.mxu0 %v1162
    %2480 = vmatpush.msra.mxu0 %v1161
    %2481 = vmatpush.msra.mxu0 %v1160
    %2482 = vmatpush.msra.mxu0 %v1159
    %2483 = vmatmul.f32.gmra.mxu0 %v1454
    %v2484 = vpop.f32.mrf.mxu0
    %v2485 = vadd.f32 0.0, %v2484
    %2486 = vmatmul.f32.gmra.mxu0 %v1457
    %v2487 = vpop.f32.mrf.mxu0
    %v2488 = vadd.f32 0.0, %v2487
    %2489 = vmatmul.f32.gmra.mxu0 %v1460
    %v2490 = vpop.f32.mrf.mxu0
    %v2491 = vadd.f32 0.0, %v2490
    %2492 = vmatmul.f32.gmra.mxu0 %v1463
    %v2493 = vpop.f32.mrf.mxu0
    %v2494 = vadd.f32 0.0, %v2493
    %2495 = vmatmul.f32.gmra.mxu0 %v1466
    %v2496 = vpop.f32.mrf.mxu0
    %v2497 = vadd.f32 0.0, %v2496
    %2498 = vdwg.mxu0
    %2499 = vmatpush.msra.mxu0 0.0
    %2500 = vmatpush.msra.mxu0 0.0
    %2501 = vmatpush.msra.mxu0 0.0
    %2502 = vmatpush.msra.mxu0 0.0
    %2503 = vmatpush.msra.mxu0 0.0
    %2504 = vmatpush.msra.mxu0 0.0
    %2505 = vmatpush.msra.mxu0 0.0
    %2506 = vmatpush.msra.mxu0 0.0
    %2507 = vmatpush.msra.mxu0 0.0
    %2508 = vmatpush.msra.mxu0 0.0
    %2509 = vmatpush.msra.mxu0 0.0
    %2510 = vmatpush.msra.mxu0 0.0
    %2511 = vmatpush.msra.mxu0 %v1152
    %2512 = vmatpush.msra.mxu0 %v1151
    %2513 = vmatpush.msra.mxu0 %v1150
    %2514 = vmatpush.msra.mxu0 %v1149
    %2515 = vmatmul.f32.gmra.mxu0 %v1392
    %v2516 = vpop.f32.mrf.mxu0
    %v2517 = vadd.f32 %v2485, %v2516
    %2518 = vmatmul.f32.gmra.mxu0 %v1395
    %v2519 = vpop.f32.mrf.mxu0
    %v2520 = vadd.f32 %v2488, %v2519
    %2521 = vmatmul.f32.gmra.mxu0 %v1398
    %v2522 = vpop.f32.mrf.mxu0
    %v2523 = vadd.f32 %v2491, %v2522
    %2524 = vmatmul.f32.gmra.mxu0 %v1401
    %v2525 = vpop.f32.mrf.mxu0
    %v2526 = vadd.f32 %v2494, %v2525
    %2527 = vmatmul.f32.gmra.mxu0 %v1404
    %v2528 = vpop.f32.mrf.mxu0
    %v2529 = vadd.f32 %v2497, %v2528
    %2530 = vdwg.mxu0
    %2531 = vmatpush.msra.mxu0 0.0
    %2532 = vmatpush.msra.mxu0 0.0
    %2533 = vmatpush.msra.mxu0 0.0
    %2534 = vmatpush.msra.mxu0 0.0
    %2535 = vmatpush.msra.mxu0 0.0
    %2536 = vmatpush.msra.mxu0 0.0
    %2537 = vmatpush.msra.mxu0 0.0
    %2538 = vmatpush.msra.mxu0 0.0
    %2539 = vmatpush.msra.mxu0 0.0
    %2540 = vmatpush.msra.mxu0 0.0
    %2541 = vmatpush.msra.mxu0 0.0
    %2542 = vmatpush.msra.mxu0 0.0
    %2543 = vmatpush.msra.mxu0 %v1266
    %2544 = vmatpush.msra.mxu0 %v1265
    %2545 = vmatpush.msra.mxu0 %v1264
    %2546 = vmatpush.msra.mxu0 %v1263
    %2547 = vmatmul.f32.gmra.mxu0 %v1892
    %v2548 = vpop.f32.mrf.mxu0
    %v2549 = vadd.f32 0.0, %v2548
    %2550 = vmatmul.f32.gmra.mxu0 %v1895
    %v2551 = vpop.f32.mrf.mxu0
    %v2552 = vadd.f32 0.0, %v2551
    %2553 = vmatmul.f32.gmra.mxu0 %v1898
    %v2554 = vpop.f32.mrf.mxu0
    %v2555 = vadd.f32 0.0, %v2554
    %2556 = vmatmul.f32.gmra.mxu0 %v1901
    %v2557 = vpop.f32.mrf.mxu0
    %v2558 = vadd.f32 0.0, %v2557
    %2559 = vmatmul.f32.gmra.mxu0 %v1904
    %v2560 = vpop.f32.mrf.mxu0
    %v2561 = vadd.f32 0.0, %v2560
    %2562 = vdwg.mxu0
    %v2563 = vadd.f32 %v2517, %v2549
    %v2564 = vadd.f32 %v2520, %v2552
    %v2565 = vadd.f32 %v2523, %v2555
    %v2566 = vadd.f32 %v2526, %v2558
    %v2567 = vadd.f32 %v2529, %v2561
    %2568 = vmatpush.msra.mxu0 0.0
    %2569 = vmatpush.msra.mxu0 0.0
    %2570 = vmatpush.msra.mxu0 0.0
    %2571 = vmatpush.msra.mxu0 0.0
    %2572 = vmatpush.msra.mxu0 0.0
    %2573 = vmatpush.msra.mxu0 0.0
    %2574 = vmatpush.msra.mxu0 0.0
    %2575 = vmatpush.msra.mxu0 0.0
    %2576 = vmatpush.msra.mxu0 0.0
    %2577 = vmatpush.msra.mxu0 0.0
    %2578 = vmatpush.msra.mxu0 0.0
    %2579 = vmatpush.msra.mxu0 0.0
    %2580 = vmatpush.msra.mxu0 %v1328
    %2581 = vmatpush.msra.mxu0 %v1327
    %2582 = vmatpush.msra.mxu0 %v1326
    %2583 = vmatpush.msra.mxu0 %v1325
    %2584 = vmatmul.f32.gmra.mxu0 %v1578
    %v2585 = vpop.f32.mrf.mxu0
    %v2586 = vadd.f32 0.0, %v2585
    %2587 = vmatmul.f32.gmra.mxu0 %v1581
    %v2588 = vpop.f32.mrf.mxu0
    %v2589 = vadd.f32 0.0, %v2588
    %2590 = vmatmul.f32.gmra.mxu0 %v1584
    %v2591 = vpop.f32.mrf.mxu0
    %v2592 = vadd.f32 0.0, %v2591
    %2593 = vmatmul.f32.gmra.mxu0 %v1587
    %v2594 = vpop.f32.mrf.mxu0
    %v2595 = vadd.f32 0.0, %v2594
    %2596 = vmatmul.f32.gmra.mxu0 %v1590
    %v2597 = vpop.f32.mrf.mxu0
    %v2598 = vadd.f32 0.0, %v2597
    %2599 = vdwg.mxu0
    %v2600 = vadd.f32 %v2563, %v2586
    %v2601 = vadd.f32 %v2564, %v2589
    %v2602 = vadd.f32 %v2565, %v2592
    %v2603 = vadd.f32 %v2566, %v2595
    %v2604 = vadd.f32 %v2567, %v2598
    %2605 = vmatpush.msra.mxu0 0.0
    %2606 = vmatpush.msra.mxu0 0.0
    %2607 = vmatpush.msra.mxu0 0.0
    %2608 = vmatpush.msra.mxu0 0.0
    %2609 = vmatpush.msra.mxu0 0.0
    %2610 = vmatpush.msra.mxu0 0.0
    %2611 = vmatpush.msra.mxu0 0.0
    %2612 = vmatpush.msra.mxu0 0.0
    %2613 = vmatpush.msra.mxu0 0.0
    %2614 = vmatpush.msra.mxu0 0.0
    %2615 = vmatpush.msra.mxu0 0.0
    %2616 = vmatpush.msra.mxu0 0.0
    %2617 = vmatpush.msra.mxu0 %v1390
    %2618 = vmatpush.msra.mxu0 %v1389
    %2619 = vmatpush.msra.mxu0 %v1388
    %2620 = vmatpush.msra.mxu0 %v1387
    %2621 = vmatmul.f32.gmra.mxu0 %v1640
    %v2622 = vpop.f32.mrf.mxu0
    %v2623 = vadd.f32 0.0, %v2622
    %2624 = vmatmul.f32.gmra.mxu0 %v1643
    %v2625 = vpop.f32.mrf.mxu0
    %v2626 = vadd.f32 0.0, %v2625
    %2627 = vmatmul.f32.gmra.mxu0 %v1646
    %v2628 = vpop.f32.mrf.mxu0
    %v2629 = vadd.f32 0.0, %v2628
    %2630 = vmatmul.f32.gmra.mxu0 %v1649
    %v2631 = vpop.f32.mrf.mxu0
    %v2632 = vadd.f32 0.0, %v2631
    %2633 = vmatmul.f32.gmra.mxu0 %v1652
    %v2634 = vpop.f32.mrf.mxu0
    %v2635 = vadd.f32 0.0, %v2634
    %2636 = vdwg.mxu0
    %v2637 = vadd.f32 %v2600, %v2623
    %v2638 = vadd.f32 %v2601, %v2626
    %v2639 = vadd.f32 %v2602, %v2629
    %v2640 = vadd.f32 %v2603, %v2632
    %v2641 = vadd.f32 %v2604, %v2635
    %2642 = vmatpush.msra.mxu0 0.0
    %2643 = vmatpush.msra.mxu0 0.0
    %2644 = vmatpush.msra.mxu0 0.0
    %2645 = vmatpush.msra.mxu0 0.0
    %2646 = vmatpush.msra.mxu0 0.0
    %2647 = vmatpush.msra.mxu0 0.0
    %2648 = vmatpush.msra.mxu0 0.0
    %2649 = vmatpush.msra.mxu0 0.0
    %2650 = vmatpush.msra.mxu0 0.0
    %2651 = vmatpush.msra.mxu0 0.0
    %2652 = vmatpush.msra.mxu0 0.0
    %2653 = vmatpush.msra.mxu0 0.0
    %2654 = vmatpush.msra.mxu0 %v1452
    %2655 = vmatpush.msra.mxu0 %v1451
    %2656 = vmatpush.msra.mxu0 %v1450
    %2657 = vmatpush.msra.mxu0 %v1449
    %2658 = vmatmul.f32.gmra.mxu0 %v2023
    %v2659 = vpop.f32.mrf.mxu0
    %v2660 = vadd.f32 0.0, %v2659
    %2661 = vmatmul.f32.gmra.mxu0 %v2026
    %v2662 = vpop.f32.mrf.mxu0
    %v2663 = vadd.f32 0.0, %v2662
    %2664 = vmatmul.f32.gmra.mxu0 %v2029
    %v2665 = vpop.f32.mrf.mxu0
    %v2666 = vadd.f32 0.0, %v2665
    %2667 = vmatmul.f32.gmra.mxu0 %v2032
    %v2668 = vpop.f32.mrf.mxu0
    %v2669 = vadd.f32 0.0, %v2668
    %2670 = vmatmul.f32.gmra.mxu0 %v2035
    %v2671 = vpop.f32.mrf.mxu0
    %v2672 = vadd.f32 0.0, %v2671
    %2673 = vdwg.mxu0
    %v2674 = vadd.f32 %v2637, %v2660
    %v2675 = vadd.f32 %v2638, %v2663
    %v2676 = vadd.f32 %v2639, %v2666
    %v2677 = vadd.f32 %v2640, %v2669
    %v2678 = vadd.f32 %v2641, %v2672
    %2679 = vmatpush.msra.mxu0 0.0
    %2680 = vmatpush.msra.mxu0 0.0
    %2681 = vmatpush.msra.mxu0 0.0
    %2682 = vmatpush.msra.mxu0 0.0
    %2683 = vmatpush.msra.mxu0 0.0
    %2684 = vmatpush.msra.mxu0 0.0
    %2685 = vmatpush.msra.mxu0 0.0
    %2686 = vmatpush.msra.mxu0 0.0
    %2687 = vmatpush.msra.mxu0 0.0
    %2688 = vmatpush.msra.mxu0 0.0
    %2689 = vmatpush.msra.mxu0 0.0
    %2690 = vmatpush.msra.mxu0 0.0
    %2691 = vmatpush.msra.mxu0 %v1514
    %2692 = vmatpush.msra.mxu0 %v1513
    %2693 = vmatpush.msra.mxu0 %v1512
    %2694 = vmatpush.msra.mxu0 %v1511
    %2695 = vmatmul.f32.gmra.mxu0 %v2354
    %v2696 = vpop.f32.mrf.mxu0
    %v2697 = vadd.f32 0.0, %v2696
    %2698 = vmatmul.f32.gmra.mxu0 %v2357
    %v2699 = vpop.f32.mrf.mxu0
    %v2700 = vadd.f32 0.0, %v2699
    %2701 = vmatmul.f32.gmra.mxu0 %v2360
    %v2702 = vpop.f32.mrf.mxu0
    %v2703 = vadd.f32 0.0, %v2702
    %2704 = vmatmul.f32.gmra.mxu0 %v2363
    %v2705 = vpop.f32.mrf.mxu0
    %v2706 = vadd.f32 0.0, %v2705
    %2707 = vmatmul.f32.gmra.mxu0 %v2366
    %v2708 = vpop.f32.mrf.mxu0
    %v2709 = vadd.f32 0.0, %v2708
    %2710 = vdwg.mxu0
    %v2711 = vadd.f32 %v2674, %v2697
    %v2712 = vadd.f32 %v2675, %v2700
    %v2713 = vadd.f32 %v2676, %v2703
    %v2714 = vadd.f32 %v2677, %v2706
    %v2715 = vadd.f32 %v2678, %v2709
    %2716 = vmatpush.msra.mxu0 0.0
    %2717 = vmatpush.msra.mxu0 0.0
    %2718 = vmatpush.msra.mxu0 0.0
    %2719 = vmatpush.msra.mxu0 0.0
    %2720 = vmatpush.msra.mxu0 0.0
    %2721 = vmatpush.msra.mxu0 0.0
    %2722 = vmatpush.msra.mxu0 0.0
    %2723 = vmatpush.msra.mxu0 0.0
    %2724 = vmatpush.msra.mxu0 0.0
    %2725 = vmatpush.msra.mxu0 0.0
    %2726 = vmatpush.msra.mxu0 0.0
    %2727 = vmatpush.msra.mxu0 0.0
    %2728 = vmatpush.msra.mxu0 %v1576
    %2729 = vmatpush.msra.mxu0 %v1575
    %2730 = vmatpush.msra.mxu0 %v1574
    %2731 = vmatpush.msra.mxu0 %v1573
    %2732 = vmatmul.f32.gmra.mxu0 %v2411
    %v2733 = vpop.f32.mrf.mxu0
    %v2734 = vadd.f32 0.0, %v2733
    %2735 = vmatmul.f32.gmra.mxu0 %v2414
    %v2736 = vpop.f32.mrf.mxu0
    %v2737 = vadd.f32 0.0, %v2736
    %2738 = vmatmul.f32.gmra.mxu0 %v2417
    %v2739 = vpop.f32.mrf.mxu0
    %v2740 = vadd.f32 0.0, %v2739
    %2741 = vmatmul.f32.gmra.mxu0 %v2420
    %v2742 = vpop.f32.mrf.mxu0
    %v2743 = vadd.f32 0.0, %v2742
    %2744 = vmatmul.f32.gmra.mxu0 %v2423
    %v2745 = vpop.f32.mrf.mxu0
    %v2746 = vadd.f32 0.0, %v2745
    %2747 = vdwg.mxu0
    %v2748 = vadd.f32 %v2711, %v2734
    %v2749 = vadd.f32 %v2712, %v2737
    %v2750 = vadd.f32 %v2713, %v2740
    %v2751 = vadd.f32 %v2714, %v2743
    %v2752 = vadd.f32 %v2715, %v2746
    %v2753 = vld [vmem:[#allocation2 + $0xa2] sm:$0xff]
    %v2754 = vld [vmem:[#allocation2 + $0xaa] sm:$0xff]
    %v2755 = vld [vmem:[#allocation2 + $0xb2] sm:$0xff]
    %v2756 = vld [vmem:[#allocation2 + $0xba] sm:$0xff]
    %v2757 = vld [vmem:[#allocation2 + $0xc2] sm:$0x3f]
    %v2759 = vsel %vm1118, %v2753, 0
    %v2762 = vsel %vm1118, %v2754, 0
    %v2765 = vsel %vm1118, %v2755, 0
    %v2768 = vsel %vm1118, %v2756, 0
    %v2771 = vsel %vm1118, %v2757, 0
    %2773 = vmatpush.msra.mxu0 0.0
    %2774 = vmatpush.msra.mxu0 0.0
    %2775 = vmatpush.msra.mxu0 0.0
    %2776 = vmatpush.msra.mxu0 0.0
    %2777 = vmatpush.msra.mxu0 0.0
    %2778 = vmatpush.msra.mxu0 0.0
    %2779 = vmatpush.msra.mxu0 0.0
    %2780 = vmatpush.msra.mxu0 0.0
    %2781 = vmatpush.msra.mxu0 0.0
    %2782 = vmatpush.msra.mxu0 0.0
    %2783 = vmatpush.msra.mxu0 0.0
    %2784 = vmatpush.msra.mxu0 0.0
    %2785 = vmatpush.msra.mxu0 %v1638
    %2786 = vmatpush.msra.mxu0 %v1637
    %2787 = vmatpush.msra.mxu0 %v1636
    %2788 = vmatpush.msra.mxu0 %v1635
    %2789 = vmatmul.f32.gmra.mxu0 %v2759
    %v2790 = vpop.f32.mrf.mxu0
    %v2791 = vadd.f32 0.0, %v2790
    %2792 = vmatmul.f32.gmra.mxu0 %v2762
    %v2793 = vpop.f32.mrf.mxu0
    %v2794 = vadd.f32 0.0, %v2793
    %2795 = vmatmul.f32.gmra.mxu0 %v2765
    %v2796 = vpop.f32.mrf.mxu0
    %v2797 = vadd.f32 0.0, %v2796
    %2798 = vmatmul.f32.gmra.mxu0 %v2768
    %v2799 = vpop.f32.mrf.mxu0
    %v2800 = vadd.f32 0.0, %v2799
    %2801 = vmatmul.f32.gmra.mxu0 %v2771
    %v2802 = vpop.f32.mrf.mxu0
    %v2803 = vadd.f32 0.0, %v2802
    %2804 = vdwg.mxu0
    %v2805 = vadd.f32 %v2748, %v2791
    %v2806 = vadd.f32 %v2749, %v2794
    %v2807 = vadd.f32 %v2750, %v2797
    %v2808 = vadd.f32 %v2751, %v2800
    %v2809 = vadd.f32 %v2752, %v2803
    %v2810 = vmax.f32 %v2462, %v2805
    %v2811 = vmax.f32 %v2463, %v2806
    %v2812 = vmax.f32 %v2464, %v2807
    %v2813 = vmax.f32 %v2465, %v2808
    %v2814 = vmax.f32 %v2466, %v2809
    %v2815 = vld [vmem:[%s5] sm:$0x1]
    %v2817 = vperm.slane %v2815, 0
    %v2819 = vadd.f32 %v2810, %v2817
    %v2820 = vadd.f32 %v2811, %v2817
    %v2821 = vadd.f32 %v2812, %v2817
    %v2822 = vadd.f32 %v2813, %v2817
    %v2823 = vadd.f32 %v2814, %v2817
    %v2824 = vmax.f32 %v2819, 0.0
    %v2825 = vmax.f32 %v2820, 0.0
    %v2826 = vmax.f32 %v2821, 0.0
    %v2827 = vmax.f32 %v2822, 0.0
    %v2828 = vmax.f32 %v2823, 0.0
    %vm2829 = vcmask 523264
    %2830 = vst.msk [vmem:[#allocation3] sm:$0xff] %vm2829, %v2824
    %2831 = vst.msk [vmem:[#allocation3 + $0x8] sm:$0xff] %vm2829, %v2825
    %2832 = vst.msk [vmem:[#allocation3 + $0x10] sm:$0xff] %vm2829, %v2826
    %2833 = vst.msk [vmem:[#allocation3 + $0x18] sm:$0xff] %vm2829, %v2827
    %vm2834 = vcmask 521216
    %2835 = vst.msk [vmem:[#allocation3 + $0x20] sm:$0x3f] %vm2834, %v2828
    %v2836 = vld [vmem:[#allocation3] sm:$0x3]
    %v2837 = vld [vmem:[%s6] sm:$0xff]
    %v2838 = vld [vmem:[%s6 + $0x8] sm:$0xff]
    %v2839 = vld [vmem:[%s6 + $0x10] sm:$0xff]
    %v2840 = vld [vmem:[%s6 + $0x18] sm:$0xff]
    %v2841 = vld [vmem:[%s6 + $0x20] sm:$0xff]
    %v2842 = vld [vmem:[%s6 + $0x28] sm:$0xff]
    %v2843 = vld [vmem:[%s6 + $0x30] sm:$0xff]
    %v2844 = vld [vmem:[%s6 + $0x38] sm:$0xff]
    %v2845 = vld [vmem:[%s6 + $0x40] sm:$0xff]
    %v2846 = vld [vmem:[%s6 + $0x48] sm:$0xff]
    %v2847 = vld [vmem:[%s6 + $0x50] sm:$0xff]
    %v2848 = vld [vmem:[%s6 + $0x58] sm:$0xff]
    %v2849 = vld [vmem:[%s6 + $0x60] sm:$0xff]
    %v2850 = vld [vmem:[%s6 + $0x68] sm:$0xff]
    %v2851 = vld [vmem:[%s6 + $0x70] sm:$0xff]
    %v2852 = vld [vmem:[%s6 + $0x78] sm:$0xff]
    %v2853 = vld [vmem:[%s6 + $0x80] sm:$0xff]
    %v2854 = vld [vmem:[%s6 + $0x88] sm:$0xff]
    %v2855 = vld [vmem:[%s6 + $0x90] sm:$0xff]
    %v2856 = vld [vmem:[%s6 + $0x98] sm:$0xff]
    %v2857 = vld [vmem:[%s6 + $0xa0] sm:$0xff]
    %v2858 = vld [vmem:[%s6 + $0xa8] sm:$0xff]
    %v2859 = vld [vmem:[%s6 + $0xb0] sm:$0xff]
    %v2860 = vld [vmem:[%s6 + $0xb8] sm:$0xff]
    %v2861 = vld [vmem:[%s6 + $0xc0] sm:$0xff]
    %v2862 = vld [vmem:[%s6 + $0xc8] sm:$0xff]
    %v2863 = vld [vmem:[%s6 + $0xd0] sm:$0xff]
    %v2864 = vld [vmem:[%s6 + $0xd8] sm:$0xff]
    %v2865 = vld [vmem:[%s6 + $0xe0] sm:$0xff]
    %v2866 = vld [vmem:[%s6 + $0xe8] sm:$0xff]
    %v2867 = vld [vmem:[%s6 + $0xf0] sm:$0xff]
    %v2868 = vld [vmem:[%s6 + $0xf8] sm:$0xff]
    %v2869 = vld [vmem:[#allocation3 + $0x2] sm:$0x3]
    %s2870 = scalar_lea.vmem %s6, 256
    %v2871 = vld [vmem:[%s2870] sm:$0xff]
    %v2872 = vld [vmem:[%s2870 + $0x8] sm:$0xff]
    %v2873 = vld [vmem:[%s2870 + $0x10] sm:$0xff]
    %v2874 = vld [vmem:[%s2870 + $0x18] sm:$0xff]
    %v2875 = vld [vmem:[%s2870 + $0x20] sm:$0xff]
    %v2876 = vld [vmem:[%s2870 + $0x28] sm:$0xff]
    %v2877 = vld [vmem:[%s2870 + $0x30] sm:$0xff]
    %v2878 = vld [vmem:[%s2870 + $0x38] sm:$0xff]
    %v2879 = vld [vmem:[%s2870 + $0x40] sm:$0xff]
    %v2880 = vld [vmem:[%s2870 + $0x48] sm:$0xff]
    %v2881 = vld [vmem:[%s2870 + $0x50] sm:$0xff]
    %v2882 = vld [vmem:[%s2870 + $0x58] sm:$0xff]
    %v2883 = vld [vmem:[%s2870 + $0x60] sm:$0xff]
    %v2884 = vld [vmem:[%s2870 + $0x68] sm:$0xff]
    %v2885 = vld [vmem:[%s2870 + $0x70] sm:$0xff]
    %v2886 = vld [vmem:[%s2870 + $0x78] sm:$0xff]
    %v2887 = vld [vmem:[%s2870 + $0x80] sm:$0xff]
    %v2888 = vld [vmem:[%s2870 + $0x88] sm:$0xff]
    %v2889 = vld [vmem:[%s2870 + $0x90] sm:$0xff]
    %v2890 = vld [vmem:[%s2870 + $0x98] sm:$0xff]
    %v2891 = vld [vmem:[%s2870 + $0xa0] sm:$0xff]
    %v2892 = vld [vmem:[%s2870 + $0xa8] sm:$0xff]
    %v2893 = vld [vmem:[%s2870 + $0xb0] sm:$0xff]
    %v2894 = vld [vmem:[%s2870 + $0xb8] sm:$0xff]
    %v2895 = vld [vmem:[%s2870 + $0xc0] sm:$0xff]
    %v2896 = vld [vmem:[%s2870 + $0xc8] sm:$0xff]
    %v2897 = vld [vmem:[%s2870 + $0xd0] sm:$0xff]
    %v2898 = vld [vmem:[%s2870 + $0xd8] sm:$0xff]
    %v2899 = vld [vmem:[%s2870 + $0xe0] sm:$0xff]
    %v2900 = vld [vmem:[%s2870 + $0xe8] sm:$0xff]
    %v2901 = vld [vmem:[%s2870 + $0xf0] sm:$0xff]
    %v2902 = vld [vmem:[%s2870 + $0xf8] sm:$0xff]
    %v2904 = vsel %vm2829, %v2869, 0
    %2906 = vmatpush.msra.mxu0 0.0
    %2907 = vmatpush.msra.mxu0 0.0
    %2908 = vmatpush.msra.mxu0 0.0
    %2909 = vmatpush.msra.mxu0 0.0
    %2910 = vmatpush.msra.mxu0 0.0
    %2911 = vmatpush.msra.mxu0 0.0
    %2912 = vmatpush.msra.mxu0 0.0
    %2913 = vmatpush.msra.mxu0 0.0
    %2914 = vmatpush.msra.mxu0 %v2899
    %2915 = vmatpush.msra.mxu0 %v2895
    %2916 = vmatpush.msra.mxu0 %v2891
    %2917 = vmatpush.msra.mxu0 %v2887
    %2918 = vmatpush.msra.mxu0 %v2883
    %2919 = vmatpush.msra.mxu0 %v2879
    %2920 = vmatpush.msra.mxu0 %v2875
    %2921 = vmatpush.msra.mxu0 %v2871
    %2922 = vmatmul.f32.gmra.mxu0 %v2904
    %v2923 = vpop.f32.mrf.mxu0
    %v2924 = vadd.f32 0.0, %v2923
    %2925 = vdwg.mxu0
    %2926 = vmatpush.msra.mxu0 0.0
    %2927 = vmatpush.msra.mxu0 0.0
    %2928 = vmatpush.msra.mxu0 0.0
    %2929 = vmatpush.msra.mxu0 0.0
    %2930 = vmatpush.msra.mxu0 0.0
    %2931 = vmatpush.msra.mxu0 0.0
    %2932 = vmatpush.msra.mxu0 0.0
    %2933 = vmatpush.msra.mxu0 0.0
    %2934 = vmatpush.msra.mxu0 %v2900
    %2935 = vmatpush.msra.mxu0 %v2896
    %2936 = vmatpush.msra.mxu0 %v2892
    %2937 = vmatpush.msra.mxu0 %v2888
    %2938 = vmatpush.msra.mxu0 %v2884
    %2939 = vmatpush.msra.mxu0 %v2880
    %2940 = vmatpush.msra.mxu0 %v2876
    %2941 = vmatpush.msra.mxu0 %v2872
    %2942 = vmatmul.f32.gmra.mxu0 %v2904
    %v2943 = vpop.f32.mrf.mxu0
    %v2944 = vadd.f32 0.0, %v2943
    %2945 = vdwg.mxu0
    %2946 = vmatpush.msra.mxu0 0.0
    %2947 = vmatpush.msra.mxu0 0.0
    %2948 = vmatpush.msra.mxu0 0.0
    %2949 = vmatpush.msra.mxu0 0.0
    %2950 = vmatpush.msra.mxu0 0.0
    %2951 = vmatpush.msra.mxu0 0.0
    %2952 = vmatpush.msra.mxu0 0.0
    %2953 = vmatpush.msra.mxu0 0.0
    %2954 = vmatpush.msra.mxu0 %v2901
    %2955 = vmatpush.msra.mxu0 %v2897
    %2956 = vmatpush.msra.mxu0 %v2893
    %2957 = vmatpush.msra.mxu0 %v2889
    %2958 = vmatpush.msra.mxu0 %v2885
    %2959 = vmatpush.msra.mxu0 %v2881
    %2960 = vmatpush.msra.mxu0 %v2877
    %2961 = vmatpush.msra.mxu0 %v2873
    %2962 = vmatmul.f32.gmra.mxu0 %v2904
    %v2963 = vpop.f32.mrf.mxu0
    %v2964 = vadd.f32 0.0, %v2963
    %2965 = vdwg.mxu0
    %2966 = vmatpush.msra.mxu0 0.0
    %2967 = vmatpush.msra.mxu0 0.0
    %2968 = vmatpush.msra.mxu0 0.0
    %2969 = vmatpush.msra.mxu0 0.0
    %2970 = vmatpush.msra.mxu0 0.0
    %2971 = vmatpush.msra.mxu0 0.0
    %2972 = vmatpush.msra.mxu0 0.0
    %2973 = vmatpush.msra.mxu0 0.0
    %2974 = vmatpush.msra.mxu0 %v2902
    %2975 = vmatpush.msra.mxu0 %v2898
    %2976 = vmatpush.msra.mxu0 %v2894
    %2977 = vmatpush.msra.mxu0 %v2890
    %2978 = vmatpush.msra.mxu0 %v2886
    %2979 = vmatpush.msra.mxu0 %v2882
    %2980 = vmatpush.msra.mxu0 %v2878
    %2981 = vmatpush.msra.mxu0 %v2874
    %2982 = vmatmul.f32.gmra.mxu0 %v2904
    %v2983 = vpop.f32.mrf.mxu0
    %v2984 = vadd.f32 0.0, %v2983
    %2985 = vdwg.mxu0
    %v2987 = vsel %vm2829, %v2836, 0
    %2989 = vmatpush.msra.mxu0 0.0
    %2990 = vmatpush.msra.mxu0 0.0
    %2991 = vmatpush.msra.mxu0 0.0
    %2992 = vmatpush.msra.mxu0 0.0
    %2993 = vmatpush.msra.mxu0 0.0
    %2994 = vmatpush.msra.mxu0 0.0
    %2995 = vmatpush.msra.mxu0 0.0
    %2996 = vmatpush.msra.mxu0 0.0
    %2997 = vmatpush.msra.mxu0 %v2865
    %2998 = vmatpush.msra.mxu0 %v2861
    %2999 = vmatpush.msra.mxu0 %v2857
    %3000 = vmatpush.msra.mxu0 %v2853
    %3001 = vmatpush.msra.mxu0 %v2849
    %3002 = vmatpush.msra.mxu0 %v2845
    %3003 = vmatpush.msra.mxu0 %v2841
    %3004 = vmatpush.msra.mxu0 %v2837
    %3005 = vmatmul.f32.gmra.mxu0 %v2987
    %v3006 = vpop.f32.mrf.mxu0
    %v3007 = vadd.f32 %v2924, %v3006
    %3008 = vdwg.mxu0
    %3009 = vmatpush.msra.mxu0 0.0
    %3010 = vmatpush.msra.mxu0 0.0
    %3011 = vmatpush.msra.mxu0 0.0
    %3012 = vmatpush.msra.mxu0 0.0
    %3013 = vmatpush.msra.mxu0 0.0
    %3014 = vmatpush.msra.mxu0 0.0
    %3015 = vmatpush.msra.mxu0 0.0
    %3016 = vmatpush.msra.mxu0 0.0
    %3017 = vmatpush.msra.mxu0 %v2866
    %3018 = vmatpush.msra.mxu0 %v2862
    %3019 = vmatpush.msra.mxu0 %v2858
    %3020 = vmatpush.msra.mxu0 %v2854
    %3021 = vmatpush.msra.mxu0 %v2850
    %3022 = vmatpush.msra.mxu0 %v2846
    %3023 = vmatpush.msra.mxu0 %v2842
    %3024 = vmatpush.msra.mxu0 %v2838
    %3025 = vmatmul.f32.gmra.mxu0 %v2987
    %v3026 = vpop.f32.mrf.mxu0
    %v3027 = vadd.f32 %v2944, %v3026
    %3028 = vdwg.mxu0
    %3029 = vmatpush.msra.mxu0 0.0
    %3030 = vmatpush.msra.mxu0 0.0
    %3031 = vmatpush.msra.mxu0 0.0
    %3032 = vmatpush.msra.mxu0 0.0
    %3033 = vmatpush.msra.mxu0 0.0
    %3034 = vmatpush.msra.mxu0 0.0
    %3035 = vmatpush.msra.mxu0 0.0
    %3036 = vmatpush.msra.mxu0 0.0
    %3037 = vmatpush.msra.mxu0 %v2867
    %3038 = vmatpush.msra.mxu0 %v2863
    %3039 = vmatpush.msra.mxu0 %v2859
    %3040 = vmatpush.msra.mxu0 %v2855
    %3041 = vmatpush.msra.mxu0 %v2851
    %3042 = vmatpush.msra.mxu0 %v2847
    %3043 = vmatpush.msra.mxu0 %v2843
    %3044 = vmatpush.msra.mxu0 %v2839
    %3045 = vmatmul.f32.gmra.mxu0 %v2987
    %v3046 = vpop.f32.mrf.mxu0
    %v3047 = vadd.f32 %v2964, %v3046
    %3048 = vdwg.mxu0
    %3049 = vmatpush.msra.mxu0 0.0
    %3050 = vmatpush.msra.mxu0 0.0
    %3051 = vmatpush.msra.mxu0 0.0
    %3052 = vmatpush.msra.mxu0 0.0
    %3053 = vmatpush.msra.mxu0 0.0
    %3054 = vmatpush.msra.mxu0 0.0
    %3055 = vmatpush.msra.mxu0 0.0
    %3056 = vmatpush.msra.mxu0 0.0
    %3057 = vmatpush.msra.mxu0 %v2868
    %3058 = vmatpush.msra.mxu0 %v2864
    %3059 = vmatpush.msra.mxu0 %v2860
    %3060 = vmatpush.msra.mxu0 %v2856
    %3061 = vmatpush.msra.mxu0 %v2852
    %3062 = vmatpush.msra.mxu0 %v2848
    %3063 = vmatpush.msra.mxu0 %v2844
    %3064 = vmatpush.msra.mxu0 %v2840
    %3065 = vmatmul.f32.gmra.mxu0 %v2987
    %v3066 = vpop.f32.mrf.mxu0
    %v3067 = vadd.f32 %v2984, %v3066
    %3068 = vdwg.mxu0
    %v3069 = vld [vmem:[#allocation3 + $0x4] sm:$0x3]
    %s3070 = scalar_lea.vmem %s6, 512
    %v3071 = vld [vmem:[%s3070] sm:$0xff]
    %v3072 = vld [vmem:[%s3070 + $0x8] sm:$0xff]
    %v3073 = vld [vmem:[%s3070 + $0x10] sm:$0xff]
    %v3074 = vld [vmem:[%s3070 + $0x18] sm:$0xff]
    %v3075 = vld [vmem:[%s3070 + $0x20] sm:$0xff]
    %v3076 = vld [vmem:[%s3070 + $0x28] sm:$0xff]
    %v3077 = vld [vmem:[%s3070 + $0x30] sm:$0xff]
    %v3078 = vld [vmem:[%s3070 + $0x38] sm:$0xff]
    %v3079 = vld [vmem:[%s3070 + $0x40] sm:$0xff]
    %v3080 = vld [vmem:[%s3070 + $0x48] sm:$0xff]
    %v3081 = vld [vmem:[%s3070 + $0x50] sm:$0xff]
    %v3082 = vld [vmem:[%s3070 + $0x58] sm:$0xff]
    %v3083 = vld [vmem:[%s3070 + $0x60] sm:$0xff]
    %v3084 = vld [vmem:[%s3070 + $0x68] sm:$0xff]
    %v3085 = vld [vmem:[%s3070 + $0x70] sm:$0xff]
    %v3086 = vld [vmem:[%s3070 + $0x78] sm:$0xff]
    %v3087 = vld [vmem:[%s3070 + $0x80] sm:$0xff]
    %v3088 = vld [vmem:[%s3070 + $0x88] sm:$0xff]
    %v3089 = vld [vmem:[%s3070 + $0x90] sm:$0xff]
    %v3090 = vld [vmem:[%s3070 + $0x98] sm:$0xff]
    %v3091 = vld [vmem:[%s3070 + $0xa0] sm:$0xff]
    %v3092 = vld [vmem:[%s3070 + $0xa8] sm:$0xff]
    %v3093 = vld [vmem:[%s3070 + $0xb0] sm:$0xff]
    %v3094 = vld [vmem:[%s3070 + $0xb8] sm:$0xff]
    %v3095 = vld [vmem:[%s3070 + $0xc0] sm:$0xff]
    %v3096 = vld [vmem:[%s3070 + $0xc8] sm:$0xff]
    %v3097 = vld [vmem:[%s3070 + $0xd0] sm:$0xff]
    %v3098 = vld [vmem:[%s3070 + $0xd8] sm:$0xff]
    %v3099 = vld [vmem:[%s3070 + $0xe0] sm:$0xff]
    %v3100 = vld [vmem:[%s3070 + $0xe8] sm:$0xff]
    %v3101 = vld [vmem:[%s3070 + $0xf0] sm:$0xff]
    %v3102 = vld [vmem:[%s3070 + $0xf8] sm:$0xff]
    %v3104 = vsel %vm2829, %v3069, 0
    %3106 = vmatpush.msra.mxu0 0.0
    %3107 = vmatpush.msra.mxu0 0.0
    %3108 = vmatpush.msra.mxu0 0.0
    %3109 = vmatpush.msra.mxu0 0.0
    %3110 = vmatpush.msra.mxu0 0.0
    %3111 = vmatpush.msra.mxu0 0.0
    %3112 = vmatpush.msra.mxu0 0.0
    %3113 = vmatpush.msra.mxu0 0.0
    %3114 = vmatpush.msra.mxu0 %v3099
    %3115 = vmatpush.msra.mxu0 %v3095
    %3116 = vmatpush.msra.mxu0 %v3091
    %3117 = vmatpush.msra.mxu0 %v3087
    %3118 = vmatpush.msra.mxu0 %v3083
    %3119 = vmatpush.msra.mxu0 %v3079
    %3120 = vmatpush.msra.mxu0 %v3075
    %3121 = vmatpush.msra.mxu0 %v3071
    %3122 = vmatmul.f32.gmra.mxu0 %v3104
    %v3123 = vpop.f32.mrf.mxu0
    %v3124 = vadd.f32 0.0, %v3123
    %3125 = vdwg.mxu0
    %3126 = vmatpush.msra.mxu0 0.0
    %3127 = vmatpush.msra.mxu0 0.0
    %3128 = vmatpush.msra.mxu0 0.0
    %3129 = vmatpush.msra.mxu0 0.0
    %3130 = vmatpush.msra.mxu0 0.0
    %3131 = vmatpush.msra.mxu0 0.0
    %3132 = vmatpush.msra.mxu0 0.0
    %3133 = vmatpush.msra.mxu0 0.0
    %3134 = vmatpush.msra.mxu0 %v3100
    %3135 = vmatpush.msra.mxu0 %v3096
    %3136 = vmatpush.msra.mxu0 %v3092
    %3137 = vmatpush.msra.mxu0 %v3088
    %3138 = vmatpush.msra.mxu0 %v3084
    %3139 = vmatpush.msra.mxu0 %v3080
    %3140 = vmatpush.msra.mxu0 %v3076
    %3141 = vmatpush.msra.mxu0 %v3072
    %3142 = vmatmul.f32.gmra.mxu0 %v3104
    %v3143 = vpop.f32.mrf.mxu0
    %v3144 = vadd.f32 0.0, %v3143
    %3145 = vdwg.mxu0
    %3146 = vmatpush.msra.mxu0 0.0
    %3147 = vmatpush.msra.mxu0 0.0
    %3148 = vmatpush.msra.mxu0 0.0
    %3149 = vmatpush.msra.mxu0 0.0
    %3150 = vmatpush.msra.mxu0 0.0
    %3151 = vmatpush.msra.mxu0 0.0
    %3152 = vmatpush.msra.mxu0 0.0
    %3153 = vmatpush.msra.mxu0 0.0
    %3154 = vmatpush.msra.mxu0 %v3101
    %3155 = vmatpush.msra.mxu0 %v3097
    %3156 = vmatpush.msra.mxu0 %v3093
    %3157 = vmatpush.msra.mxu0 %v3089
    %3158 = vmatpush.msra.mxu0 %v3085
    %3159 = vmatpush.msra.mxu0 %v3081
    %3160 = vmatpush.msra.mxu0 %v3077
    %3161 = vmatpush.msra.mxu0 %v3073
    %3162 = vmatmul.f32.gmra.mxu0 %v3104
    %v3163 = vpop.f32.mrf.mxu0
    %v3164 = vadd.f32 0.0, %v3163
    %3165 = vdwg.mxu0
    %3166 = vmatpush.msra.mxu0 0.0
    %3167 = vmatpush.msra.mxu0 0.0
    %3168 = vmatpush.msra.mxu0 0.0
    %3169 = vmatpush.msra.mxu0 0.0
    %3170 = vmatpush.msra.mxu0 0.0
    %3171 = vmatpush.msra.mxu0 0.0
    %3172 = vmatpush.msra.mxu0 0.0
    %3173 = vmatpush.msra.mxu0 0.0
    %3174 = vmatpush.msra.mxu0 %v3102
    %3175 = vmatpush.msra.mxu0 %v3098
    %3176 = vmatpush.msra.mxu0 %v3094
    %3177 = vmatpush.msra.mxu0 %v3090
    %3178 = vmatpush.msra.mxu0 %v3086
    %3179 = vmatpush.msra.mxu0 %v3082
    %3180 = vmatpush.msra.mxu0 %v3078
    %3181 = vmatpush.msra.mxu0 %v3074
    %3182 = vmatmul.f32.gmra.mxu0 %v3104
    %v3183 = vpop.f32.mrf.mxu0
    %v3184 = vadd.f32 0.0, %v3183
    %3185 = vdwg.mxu0
    %v3186 = vadd.f32 %v3007, %v3124
    %v3187 = vadd.f32 %v3027, %v3144
    %v3188 = vadd.f32 %v3047, %v3164
    %v3189 = vadd.f32 %v3067, %v3184
    %v3190 = vld [vmem:[#allocation3 + $0x6] sm:$0x3]
    %s3191 = scalar_lea.vmem %s6, 768
    %v3192 = vld [vmem:[%s3191] sm:$0xff]
    %v3193 = vld [vmem:[%s3191 + $0x8] sm:$0xff]
    %v3194 = vld [vmem:[%s3191 + $0x10] sm:$0xff]
    %v3195 = vld [vmem:[%s3191 + $0x18] sm:$0xff]
    %v3196 = vld [vmem:[%s3191 + $0x20] sm:$0xff]
    %v3197 = vld [vmem:[%s3191 + $0x28] sm:$0xff]
    %v3198 = vld [vmem:[%s3191 + $0x30] sm:$0xff]
    %v3199 = vld [vmem:[%s3191 + $0x38] sm:$0xff]
    %v3200 = vld [vmem:[%s3191 + $0x40] sm:$0xff]
    %v3201 = vld [vmem:[%s3191 + $0x48] sm:$0xff]
    %v3202 = vld [vmem:[%s3191 + $0x50] sm:$0xff]
    %v3203 = vld [vmem:[%s3191 + $0x58] sm:$0xff]
    %v3204 = vld [vmem:[%s3191 + $0x60] sm:$0xff]
    %v3205 = vld [vmem:[%s3191 + $0x68] sm:$0xff]
    %v3206 = vld [vmem:[%s3191 + $0x70] sm:$0xff]
    %v3207 = vld [vmem:[%s3191 + $0x78] sm:$0xff]
    %v3208 = vld [vmem:[%s3191 + $0x80] sm:$0xff]
    %v3209 = vld [vmem:[%s3191 + $0x88] sm:$0xff]
    %v3210 = vld [vmem:[%s3191 + $0x90] sm:$0xff]
    %v3211 = vld [vmem:[%s3191 + $0x98] sm:$0xff]
    %v3212 = vld [vmem:[%s3191 + $0xa0] sm:$0xff]
    %v3213 = vld [vmem:[%s3191 + $0xa8] sm:$0xff]
    %v3214 = vld [vmem:[%s3191 + $0xb0] sm:$0xff]
    %v3215 = vld [vmem:[%s3191 + $0xb8] sm:$0xff]
    %v3216 = vld [vmem:[%s3191 + $0xc0] sm:$0xff]
    %v3217 = vld [vmem:[%s3191 + $0xc8] sm:$0xff]
    %v3218 = vld [vmem:[%s3191 + $0xd0] sm:$0xff]
    %v3219 = vld [vmem:[%s3191 + $0xd8] sm:$0xff]
    %v3220 = vld [vmem:[%s3191 + $0xe0] sm:$0xff]
    %v3221 = vld [vmem:[%s3191 + $0xe8] sm:$0xff]
    %v3222 = vld [vmem:[%s3191 + $0xf0] sm:$0xff]
    %v3223 = vld [vmem:[%s3191 + $0xf8] sm:$0xff]
    %v3225 = vsel %vm2829, %v3190, 0
    %3227 = vmatpush.msra.mxu0 0.0
    %3228 = vmatpush.msra.mxu0 0.0
    %3229 = vmatpush.msra.mxu0 0.0
    %3230 = vmatpush.msra.mxu0 0.0
    %3231 = vmatpush.msra.mxu0 0.0
    %3232 = vmatpush.msra.mxu0 0.0
    %3233 = vmatpush.msra.mxu0 0.0
    %3234 = vmatpush.msra.mxu0 0.0
    %3235 = vmatpush.msra.mxu0 %v3220
    %3236 = vmatpush.msra.mxu0 %v3216
    %3237 = vmatpush.msra.mxu0 %v3212
    %3238 = vmatpush.msra.mxu0 %v3208
    %3239 = vmatpush.msra.mxu0 %v3204
    %3240 = vmatpush.msra.mxu0 %v3200
    %3241 = vmatpush.msra.mxu0 %v3196
    %3242 = vmatpush.msra.mxu0 %v3192
    %3243 = vmatmul.f32.gmra.mxu0 %v3225
    %v3244 = vpop.f32.mrf.mxu0
    %v3245 = vadd.f32 0.0, %v3244
    %3246 = vdwg.mxu0
    %3247 = vmatpush.msra.mxu0 0.0
    %3248 = vmatpush.msra.mxu0 0.0
    %3249 = vmatpush.msra.mxu0 0.0
    %3250 = vmatpush.msra.mxu0 0.0
    %3251 = vmatpush.msra.mxu0 0.0
    %3252 = vmatpush.msra.mxu0 0.0
    %3253 = vmatpush.msra.mxu0 0.0
    %3254 = vmatpush.msra.mxu0 0.0
    %3255 = vmatpush.msra.mxu0 %v3221
    %3256 = vmatpush.msra.mxu0 %v3217
    %3257 = vmatpush.msra.mxu0 %v3213
    %3258 = vmatpush.msra.mxu0 %v3209
    %3259 = vmatpush.msra.mxu0 %v3205
    %3260 = vmatpush.msra.mxu0 %v3201
    %3261 = vmatpush.msra.mxu0 %v3197
    %3262 = vmatpush.msra.mxu0 %v3193
    %3263 = vmatmul.f32.gmra.mxu0 %v3225
    %v3264 = vpop.f32.mrf.mxu0
    %v3265 = vadd.f32 0.0, %v3264
    %3266 = vdwg.mxu0
    %3267 = vmatpush.msra.mxu0 0.0
    %3268 = vmatpush.msra.mxu0 0.0
    %3269 = vmatpush.msra.mxu0 0.0
    %3270 = vmatpush.msra.mxu0 0.0
    %3271 = vmatpush.msra.mxu0 0.0
    %3272 = vmatpush.msra.mxu0 0.0
    %3273 = vmatpush.msra.mxu0 0.0
    %3274 = vmatpush.msra.mxu0 0.0
    %3275 = vmatpush.msra.mxu0 %v3222
    %3276 = vmatpush.msra.mxu0 %v3218
    %3277 = vmatpush.msra.mxu0 %v3214
    %3278 = vmatpush.msra.mxu0 %v3210
    %3279 = vmatpush.msra.mxu0 %v3206
    %3280 = vmatpush.msra.mxu0 %v3202
    %3281 = vmatpush.msra.mxu0 %v3198
    %3282 = vmatpush.msra.mxu0 %v3194
    %3283 = vmatmul.f32.gmra.mxu0 %v3225
    %v3284 = vpop.f32.mrf.mxu0
    %v3285 = vadd.f32 0.0, %v3284
    %3286 = vdwg.mxu0
    %3287 = vmatpush.msra.mxu0 0.0
    %3288 = vmatpush.msra.mxu0 0.0
    %3289 = vmatpush.msra.mxu0 0.0
    %3290 = vmatpush.msra.mxu0 0.0
    %3291 = vmatpush.msra.mxu0 0.0
    %3292 = vmatpush.msra.mxu0 0.0
    %3293 = vmatpush.msra.mxu0 0.0
    %3294 = vmatpush.msra.mxu0 0.0
    %3295 = vmatpush.msra.mxu0 %v3223
    %3296 = vmatpush.msra.mxu0 %v3219
    %3297 = vmatpush.msra.mxu0 %v3215
    %3298 = vmatpush.msra.mxu0 %v3211
    %3299 = vmatpush.msra.mxu0 %v3207
    %3300 = vmatpush.msra.mxu0 %v3203
    %3301 = vmatpush.msra.mxu0 %v3199
    %3302 = vmatpush.msra.mxu0 %v3195
    %3303 = vmatmul.f32.gmra.mxu0 %v3225
    %v3304 = vpop.f32.mrf.mxu0
    %v3305 = vadd.f32 0.0, %v3304
    %3306 = vdwg.mxu0
    %v3307 = vadd.f32 %v3186, %v3245
    %v3308 = vadd.f32 %v3187, %v3265
    %v3309 = vadd.f32 %v3188, %v3285
    %v3310 = vadd.f32 %v3189, %v3305
    %v3311 = vld [vmem:[#allocation3 + $0xa] sm:$0x3]
    %s3312 = scalar_lea.vmem %s6, 1024
    %v3313 = vld [vmem:[%s3312] sm:$0xff]
    %v3314 = vld [vmem:[%s3312 + $0x8] sm:$0xff]
    %v3315 = vld [vmem:[%s3312 + $0x10] sm:$0xff]
    %v3316 = vld [vmem:[%s3312 + $0x18] sm:$0xff]
    %v3317 = vld [vmem:[%s3312 + $0x20] sm:$0xff]
    %v3318 = vld [vmem:[%s3312 + $0x28] sm:$0xff]
    %v3319 = vld [vmem:[%s3312 + $0x30] sm:$0xff]
    %v3320 = vld [vmem:[%s3312 + $0x38] sm:$0xff]
    %v3321 = vld [vmem:[%s3312 + $0x40] sm:$0xff]
    %v3322 = vld [vmem:[%s3312 + $0x48] sm:$0xff]
    %v3323 = vld [vmem:[%s3312 + $0x50] sm:$0xff]
    %v3324 = vld [vmem:[%s3312 + $0x58] sm:$0xff]
    %v3325 = vld [vmem:[%s3312 + $0x60] sm:$0xff]
    %v3326 = vld [vmem:[%s3312 + $0x68] sm:$0xff]
    %v3327 = vld [vmem:[%s3312 + $0x70] sm:$0xff]
    %v3328 = vld [vmem:[%s3312 + $0x78] sm:$0xff]
    %v3329 = vld [vmem:[%s3312 + $0x80] sm:$0xff]
    %v3330 = vld [vmem:[%s3312 + $0x88] sm:$0xff]
    %v3331 = vld [vmem:[%s3312 + $0x90] sm:$0xff]
    %v3332 = vld [vmem:[%s3312 + $0x98] sm:$0xff]
    %v3333 = vld [vmem:[%s3312 + $0xa0] sm:$0xff]
    %v3334 = vld [vmem:[%s3312 + $0xa8] sm:$0xff]
    %v3335 = vld [vmem:[%s3312 + $0xb0] sm:$0xff]
    %v3336 = vld [vmem:[%s3312 + $0xb8] sm:$0xff]
    %v3337 = vld [vmem:[%s3312 + $0xc0] sm:$0xff]
    %v3338 = vld [vmem:[%s3312 + $0xc8] sm:$0xff]
    %v3339 = vld [vmem:[%s3312 + $0xd0] sm:$0xff]
    %v3340 = vld [vmem:[%s3312 + $0xd8] sm:$0xff]
    %v3341 = vld [vmem:[%s3312 + $0xe0] sm:$0xff]
    %v3342 = vld [vmem:[%s3312 + $0xe8] sm:$0xff]
    %v3343 = vld [vmem:[%s3312 + $0xf0] sm:$0xff]
    %v3344 = vld [vmem:[%s3312 + $0xf8] sm:$0xff]
    %v3346 = vsel %vm2829, %v3311, 0
    %3348 = vmatpush.msra.mxu0 0.0
    %3349 = vmatpush.msra.mxu0 0.0
    %3350 = vmatpush.msra.mxu0 0.0
    %3351 = vmatpush.msra.mxu0 0.0
    %3352 = vmatpush.msra.mxu0 0.0
    %3353 = vmatpush.msra.mxu0 0.0
    %3354 = vmatpush.msra.mxu0 0.0
    %3355 = vmatpush.msra.mxu0 0.0
    %3356 = vmatpush.msra.mxu0 %v3341
    %3357 = vmatpush.msra.mxu0 %v3337
    %3358 = vmatpush.msra.mxu0 %v3333
    %3359 = vmatpush.msra.mxu0 %v3329
    %3360 = vmatpush.msra.mxu0 %v3325
    %3361 = vmatpush.msra.mxu0 %v3321
    %3362 = vmatpush.msra.mxu0 %v3317
    %3363 = vmatpush.msra.mxu0 %v3313
    %3364 = vmatmul.f32.gmra.mxu0 %v3346
    %v3365 = vpop.f32.mrf.mxu0
    %v3366 = vadd.f32 0.0, %v3365
    %3367 = vdwg.mxu0
    %3368 = vmatpush.msra.mxu0 0.0
    %3369 = vmatpush.msra.mxu0 0.0
    %3370 = vmatpush.msra.mxu0 0.0
    %3371 = vmatpush.msra.mxu0 0.0
    %3372 = vmatpush.msra.mxu0 0.0
    %3373 = vmatpush.msra.mxu0 0.0
    %3374 = vmatpush.msra.mxu0 0.0
    %3375 = vmatpush.msra.mxu0 0.0
    %3376 = vmatpush.msra.mxu0 %v3342
    %3377 = vmatpush.msra.mxu0 %v3338
    %3378 = vmatpush.msra.mxu0 %v3334
    %3379 = vmatpush.msra.mxu0 %v3330
    %3380 = vmatpush.msra.mxu0 %v3326
    %3381 = vmatpush.msra.mxu0 %v3322
    %3382 = vmatpush.msra.mxu0 %v3318
    %3383 = vmatpush.msra.mxu0 %v3314
    %3384 = vmatmul.f32.gmra.mxu0 %v3346
    %v3385 = vpop.f32.mrf.mxu0
    %v3386 = vadd.f32 0.0, %v3385
    %3387 = vdwg.mxu0
    %3388 = vmatpush.msra.mxu0 0.0
    %3389 = vmatpush.msra.mxu0 0.0
    %3390 = vmatpush.msra.mxu0 0.0
    %3391 = vmatpush.msra.mxu0 0.0
    %3392 = vmatpush.msra.mxu0 0.0
    %3393 = vmatpush.msra.mxu0 0.0
    %3394 = vmatpush.msra.mxu0 0.0
    %3395 = vmatpush.msra.mxu0 0.0
    %3396 = vmatpush.msra.mxu0 %v3343
    %3397 = vmatpush.msra.mxu0 %v3339
    %3398 = vmatpush.msra.mxu0 %v3335
    %3399 = vmatpush.msra.mxu0 %v3331
    %3400 = vmatpush.msra.mxu0 %v3327
    %3401 = vmatpush.msra.mxu0 %v3323
    %3402 = vmatpush.msra.mxu0 %v3319
    %3403 = vmatpush.msra.mxu0 %v3315
    %3404 = vmatmul.f32.gmra.mxu0 %v3346
    %v3405 = vpop.f32.mrf.mxu0
    %v3406 = vadd.f32 0.0, %v3405
    %3407 = vdwg.mxu0
    %3408 = vmatpush.msra.mxu0 0.0
    %3409 = vmatpush.msra.mxu0 0.0
    %3410 = vmatpush.msra.mxu0 0.0
    %3411 = vmatpush.msra.mxu0 0.0
    %3412 = vmatpush.msra.mxu0 0.0
    %3413 = vmatpush.msra.mxu0 0.0
    %3414 = vmatpush.msra.mxu0 0.0
    %3415 = vmatpush.msra.mxu0 0.0
    %3416 = vmatpush.msra.mxu0 %v3344
    %3417 = vmatpush.msra.mxu0 %v3340
    %3418 = vmatpush.msra.mxu0 %v3336
    %3419 = vmatpush.msra.mxu0 %v3332
    %3420 = vmatpush.msra.mxu0 %v3328
    %3421 = vmatpush.msra.mxu0 %v3324
    %3422 = vmatpush.msra.mxu0 %v3320
    %3423 = vmatpush.msra.mxu0 %v3316
    %3424 = vmatmul.f32.gmra.mxu0 %v3346
    %v3425 = vpop.f32.mrf.mxu0
    %v3426 = vadd.f32 0.0, %v3425
    %3427 = vdwg.mxu0
    %v3428 = vadd.f32 %v3307, %v3366
    %v3429 = vadd.f32 %v3308, %v3386
    %v3430 = vadd.f32 %v3309, %v3406
    %v3431 = vadd.f32 %v3310, %v3426
    %v3432 = vld [vmem:[#allocation3 + $0xc] sm:$0x3]
    %s3433 = scalar_lea.vmem %s6, 1280
    %v3434 = vld [vmem:[%s3433] sm:$0xff]
    %v3435 = vld [vmem:[%s3433 + $0x8] sm:$0xff]
    %v3436 = vld [vmem:[%s3433 + $0x10] sm:$0xff]
    %v3437 = vld [vmem:[%s3433 + $0x18] sm:$0xff]
    %v3438 = vld [vmem:[%s3433 + $0x20] sm:$0xff]
    %v3439 = vld [vmem:[%s3433 + $0x28] sm:$0xff]
    %v3440 = vld [vmem:[%s3433 + $0x30] sm:$0xff]
    %v3441 = vld [vmem:[%s3433 + $0x38] sm:$0xff]
    %v3442 = vld [vmem:[%s3433 + $0x40] sm:$0xff]
    %v3443 = vld [vmem:[%s3433 + $0x48] sm:$0xff]
    %v3444 = vld [vmem:[%s3433 + $0x50] sm:$0xff]
    %v3445 = vld [vmem:[%s3433 + $0x58] sm:$0xff]
    %v3446 = vld [vmem:[%s3433 + $0x60] sm:$0xff]
    %v3447 = vld [vmem:[%s3433 + $0x68] sm:$0xff]
    %v3448 = vld [vmem:[%s3433 + $0x70] sm:$0xff]
    %v3449 = vld [vmem:[%s3433 + $0x78] sm:$0xff]
    %v3450 = vld [vmem:[%s3433 + $0x80] sm:$0xff]
    %v3451 = vld [vmem:[%s3433 + $0x88] sm:$0xff]
    %v3452 = vld [vmem:[%s3433 + $0x90] sm:$0xff]
    %v3453 = vld [vmem:[%s3433 + $0x98] sm:$0xff]
    %v3454 = vld [vmem:[%s3433 + $0xa0] sm:$0xff]
    %v3455 = vld [vmem:[%s3433 + $0xa8] sm:$0xff]
    %v3456 = vld [vmem:[%s3433 + $0xb0] sm:$0xff]
    %v3457 = vld [vmem:[%s3433 + $0xb8] sm:$0xff]
    %v3458 = vld [vmem:[%s3433 + $0xc0] sm:$0xff]
    %v3459 = vld [vmem:[%s3433 + $0xc8] sm:$0xff]
    %v3460 = vld [vmem:[%s3433 + $0xd0] sm:$0xff]
    %v3461 = vld [vmem:[%s3433 + $0xd8] sm:$0xff]
    %v3462 = vld [vmem:[%s3433 + $0xe0] sm:$0xff]
    %v3463 = vld [vmem:[%s3433 + $0xe8] sm:$0xff]
    %v3464 = vld [vmem:[%s3433 + $0xf0] sm:$0xff]
    %v3465 = vld [vmem:[%s3433 + $0xf8] sm:$0xff]
    %v3467 = vsel %vm2829, %v3432, 0
    %3469 = vmatpush.msra.mxu0 0.0
    %3470 = vmatpush.msra.mxu0 0.0
    %3471 = vmatpush.msra.mxu0 0.0
    %3472 = vmatpush.msra.mxu0 0.0
    %3473 = vmatpush.msra.mxu0 0.0
    %3474 = vmatpush.msra.mxu0 0.0
    %3475 = vmatpush.msra.mxu0 0.0
    %3476 = vmatpush.msra.mxu0 0.0
    %3477 = vmatpush.msra.mxu0 %v3462
    %3478 = vmatpush.msra.mxu0 %v3458
    %3479 = vmatpush.msra.mxu0 %v3454
    %3480 = vmatpush.msra.mxu0 %v3450
    %3481 = vmatpush.msra.mxu0 %v3446
    %3482 = vmatpush.msra.mxu0 %v3442
    %3483 = vmatpush.msra.mxu0 %v3438
    %3484 = vmatpush.msra.mxu0 %v3434
    %3485 = vmatmul.f32.gmra.mxu0 %v3467
    %v3486 = vpop.f32.mrf.mxu0
    %v3487 = vadd.f32 0.0, %v3486
    %3488 = vdwg.mxu0
    %3489 = vmatpush.msra.mxu0 0.0
    %3490 = vmatpush.msra.mxu0 0.0
    %3491 = vmatpush.msra.mxu0 0.0
    %3492 = vmatpush.msra.mxu0 0.0
    %3493 = vmatpush.msra.mxu0 0.0
    %3494 = vmatpush.msra.mxu0 0.0
    %3495 = vmatpush.msra.mxu0 0.0
    %3496 = vmatpush.msra.mxu0 0.0
    %3497 = vmatpush.msra.mxu0 %v3463
    %3498 = vmatpush.msra.mxu0 %v3459
    %3499 = vmatpush.msra.mxu0 %v3455
    %3500 = vmatpush.msra.mxu0 %v3451
    %3501 = vmatpush.msra.mxu0 %v3447
    %3502 = vmatpush.msra.mxu0 %v3443
    %3503 = vmatpush.msra.mxu0 %v3439
    %3504 = vmatpush.msra.mxu0 %v3435
    %3505 = vmatmul.f32.gmra.mxu0 %v3467
    %v3506 = vpop.f32.mrf.mxu0
    %v3507 = vadd.f32 0.0, %v3506
    %3508 = vdwg.mxu0
    %3509 = vmatpush.msra.mxu0 0.0
    %3510 = vmatpush.msra.mxu0 0.0
    %3511 = vmatpush.msra.mxu0 0.0
    %3512 = vmatpush.msra.mxu0 0.0
    %3513 = vmatpush.msra.mxu0 0.0
    %3514 = vmatpush.msra.mxu0 0.0
    %3515 = vmatpush.msra.mxu0 0.0
    %3516 = vmatpush.msra.mxu0 0.0
    %3517 = vmatpush.msra.mxu0 %v3464
    %3518 = vmatpush.msra.mxu0 %v3460
    %3519 = vmatpush.msra.mxu0 %v3456
    %3520 = vmatpush.msra.mxu0 %v3452
    %3521 = vmatpush.msra.mxu0 %v3448
    %3522 = vmatpush.msra.mxu0 %v3444
    %3523 = vmatpush.msra.mxu0 %v3440
    %3524 = vmatpush.msra.mxu0 %v3436
    %3525 = vmatmul.f32.gmra.mxu0 %v3467
    %v3526 = vpop.f32.mrf.mxu0
    %v3527 = vadd.f32 0.0, %v3526
    %3528 = vdwg.mxu0
    %3529 = vmatpush.msra.mxu0 0.0
    %3530 = vmatpush.msra.mxu0 0.0
    %3531 = vmatpush.msra.mxu0 0.0
    %3532 = vmatpush.msra.mxu0 0.0
    %3533 = vmatpush.msra.mxu0 0.0
    %3534 = vmatpush.msra.mxu0 0.0
    %3535 = vmatpush.msra.mxu0 0.0
    %3536 = vmatpush.msra.mxu0 0.0
    %3537 = vmatpush.msra.mxu0 %v3465
    %3538 = vmatpush.msra.mxu0 %v3461
    %3539 = vmatpush.msra.mxu0 %v3457
    %3540 = vmatpush.msra.mxu0 %v3453
    %3541 = vmatpush.msra.mxu0 %v3449
    %3542 = vmatpush.msra.mxu0 %v3445
    %3543 = vmatpush.msra.mxu0 %v3441
    %3544 = vmatpush.msra.mxu0 %v3437
    %3545 = vmatmul.f32.gmra.mxu0 %v3467
    %v3546 = vpop.f32.mrf.mxu0
    %v3547 = vadd.f32 0.0, %v3546
    %3548 = vdwg.mxu0
    %v3549 = vadd.f32 %v3428, %v3487
    %v3550 = vadd.f32 %v3429, %v3507
    %v3551 = vadd.f32 %v3430, %v3527
    %v3552 = vadd.f32 %v3431, %v3547
    %v3553 = vld [vmem:[#allocation3 + $0xe] sm:$0x3]
    %s3554 = scalar_lea.vmem %s6, 1536
    %v3555 = vld [vmem:[%s3554] sm:$0xff]
    %v3556 = vld [vmem:[%s3554 + $0x8] sm:$0xff]
    %v3557 = vld [vmem:[%s3554 + $0x10] sm:$0xff]
    %v3558 = vld [vmem:[%s3554 + $0x18] sm:$0xff]
    %v3559 = vld [vmem:[%s3554 + $0x20] sm:$0xff]
    %v3560 = vld [vmem:[%s3554 + $0x28] sm:$0xff]
    %v3561 = vld [vmem:[%s3554 + $0x30] sm:$0xff]
    %v3562 = vld [vmem:[%s3554 + $0x38] sm:$0xff]
    %v3563 = vld [vmem:[%s3554 + $0x40] sm:$0xff]
    %v3564 = vld [vmem:[%s3554 + $0x48] sm:$0xff]
    %v3565 = vld [vmem:[%s3554 + $0x50] sm:$0xff]
    %v3566 = vld [vmem:[%s3554 + $0x58] sm:$0xff]
    %v3567 = vld [vmem:[%s3554 + $0x60] sm:$0xff]
    %v3568 = vld [vmem:[%s3554 + $0x68] sm:$0xff]
    %v3569 = vld [vmem:[%s3554 + $0x70] sm:$0xff]
    %v3570 = vld [vmem:[%s3554 + $0x78] sm:$0xff]
    %v3571 = vld [vmem:[%s3554 + $0x80] sm:$0xff]
    %v3572 = vld [vmem:[%s3554 + $0x88] sm:$0xff]
    %v3573 = vld [vmem:[%s3554 + $0x90] sm:$0xff]
    %v3574 = vld [vmem:[%s3554 + $0x98] sm:$0xff]
    %v3575 = vld [vmem:[%s3554 + $0xa0] sm:$0xff]
    %v3576 = vld [vmem:[%s3554 + $0xa8] sm:$0xff]
    %v3577 = vld [vmem:[%s3554 + $0xb0] sm:$0xff]
    %v3578 = vld [vmem:[%s3554 + $0xb8] sm:$0xff]
    %v3579 = vld [vmem:[%s3554 + $0xc0] sm:$0xff]
    %v3580 = vld [vmem:[%s3554 + $0xc8] sm:$0xff]
    %v3581 = vld [vmem:[%s3554 + $0xd0] sm:$0xff]
    %v3582 = vld [vmem:[%s3554 + $0xd8] sm:$0xff]
    %v3583 = vld [vmem:[%s3554 + $0xe0] sm:$0xff]
    %v3584 = vld [vmem:[%s3554 + $0xe8] sm:$0xff]
    %v3585 = vld [vmem:[%s3554 + $0xf0] sm:$0xff]
    %v3586 = vld [vmem:[%s3554 + $0xf8] sm:$0xff]
    %v3588 = vsel %vm2829, %v3553, 0
    %3590 = vmatpush.msra.mxu0 0.0
    %3591 = vmatpush.msra.mxu0 0.0
    %3592 = vmatpush.msra.mxu0 0.0
    %3593 = vmatpush.msra.mxu0 0.0
    %3594 = vmatpush.msra.mxu0 0.0
    %3595 = vmatpush.msra.mxu0 0.0
    %3596 = vmatpush.msra.mxu0 0.0
    %3597 = vmatpush.msra.mxu0 0.0
    %3598 = vmatpush.msra.mxu0 %v3583
    %3599 = vmatpush.msra.mxu0 %v3579
    %3600 = vmatpush.msra.mxu0 %v3575
    %3601 = vmatpush.msra.mxu0 %v3571
    %3602 = vmatpush.msra.mxu0 %v3567
    %3603 = vmatpush.msra.mxu0 %v3563
    %3604 = vmatpush.msra.mxu0 %v3559
    %3605 = vmatpush.msra.mxu0 %v3555
    %3606 = vmatmul.f32.gmra.mxu0 %v3588
    %v3607 = vpop.f32.mrf.mxu0
    %v3608 = vadd.f32 0.0, %v3607
    %3609 = vdwg.mxu0
    %3610 = vmatpush.msra.mxu0 0.0
    %3611 = vmatpush.msra.mxu0 0.0
    %3612 = vmatpush.msra.mxu0 0.0
    %3613 = vmatpush.msra.mxu0 0.0
    %3614 = vmatpush.msra.mxu0 0.0
    %3615 = vmatpush.msra.mxu0 0.0
    %3616 = vmatpush.msra.mxu0 0.0
    %3617 = vmatpush.msra.mxu0 0.0
    %3618 = vmatpush.msra.mxu0 %v3584
    %3619 = vmatpush.msra.mxu0 %v3580
    %3620 = vmatpush.msra.mxu0 %v3576
    %3621 = vmatpush.msra.mxu0 %v3572
    %3622 = vmatpush.msra.mxu0 %v3568
    %3623 = vmatpush.msra.mxu0 %v3564
    %3624 = vmatpush.msra.mxu0 %v3560
    %3625 = vmatpush.msra.mxu0 %v3556
    %3626 = vmatmul.f32.gmra.mxu0 %v3588
    %v3627 = vpop.f32.mrf.mxu0
    %v3628 = vadd.f32 0.0, %v3627
    %3629 = vdwg.mxu0
    %3630 = vmatpush.msra.mxu0 0.0
    %3631 = vmatpush.msra.mxu0 0.0
    %3632 = vmatpush.msra.mxu0 0.0
    %3633 = vmatpush.msra.mxu0 0.0
    %3634 = vmatpush.msra.mxu0 0.0
    %3635 = vmatpush.msra.mxu0 0.0
    %3636 = vmatpush.msra.mxu0 0.0
    %3637 = vmatpush.msra.mxu0 0.0
    %3638 = vmatpush.msra.mxu0 %v3585
    %3639 = vmatpush.msra.mxu0 %v3581
    %3640 = vmatpush.msra.mxu0 %v3577
    %3641 = vmatpush.msra.mxu0 %v3573
    %3642 = vmatpush.msra.mxu0 %v3569
    %3643 = vmatpush.msra.mxu0 %v3565
    %3644 = vmatpush.msra.mxu0 %v3561
    %3645 = vmatpush.msra.mxu0 %v3557
    %3646 = vmatmul.f32.gmra.mxu0 %v3588
    %v3647 = vpop.f32.mrf.mxu0
    %v3648 = vadd.f32 0.0, %v3647
    %3649 = vdwg.mxu0
    %3650 = vmatpush.msra.mxu0 0.0
    %3651 = vmatpush.msra.mxu0 0.0
    %3652 = vmatpush.msra.mxu0 0.0
    %3653 = vmatpush.msra.mxu0 0.0
    %3654 = vmatpush.msra.mxu0 0.0
    %3655 = vmatpush.msra.mxu0 0.0
    %3656 = vmatpush.msra.mxu0 0.0
    %3657 = vmatpush.msra.mxu0 0.0
    %3658 = vmatpush.msra.mxu0 %v3586
    %3659 = vmatpush.msra.mxu0 %v3582
    %3660 = vmatpush.msra.mxu0 %v3578
    %3661 = vmatpush.msra.mxu0 %v3574
    %3662 = vmatpush.msra.mxu0 %v3570
    %3663 = vmatpush.msra.mxu0 %v3566
    %3664 = vmatpush.msra.mxu0 %v3562
    %3665 = vmatpush.msra.mxu0 %v3558
    %3666 = vmatmul.f32.gmra.mxu0 %v3588
    %v3667 = vpop.f32.mrf.mxu0
    %v3668 = vadd.f32 0.0, %v3667
    %3669 = vdwg.mxu0
    %v3670 = vadd.f32 %v3549, %v3608
    %v3671 = vadd.f32 %v3550, %v3628
    %v3672 = vadd.f32 %v3551, %v3648
    %v3673 = vadd.f32 %v3552, %v3668
    %v3674 = vld [vmem:[#allocation3 + $0x10] sm:$0x3]
    %s3675 = scalar_lea.vmem %s6, 1792
    %v3676 = vld [vmem:[%s3675] sm:$0xff]
    %v3677 = vld [vmem:[%s3675 + $0x8] sm:$0xff]
    %v3678 = vld [vmem:[%s3675 + $0x10] sm:$0xff]
    %v3679 = vld [vmem:[%s3675 + $0x18] sm:$0xff]
    %v3680 = vld [vmem:[%s3675 + $0x20] sm:$0xff]
    %v3681 = vld [vmem:[%s3675 + $0x28] sm:$0xff]
    %v3682 = vld [vmem:[%s3675 + $0x30] sm:$0xff]
    %v3683 = vld [vmem:[%s3675 + $0x38] sm:$0xff]
    %v3684 = vld [vmem:[%s3675 + $0x40] sm:$0xff]
    %v3685 = vld [vmem:[%s3675 + $0x48] sm:$0xff]
    %v3686 = vld [vmem:[%s3675 + $0x50] sm:$0xff]
    %v3687 = vld [vmem:[%s3675 + $0x58] sm:$0xff]
    %v3688 = vld [vmem:[%s3675 + $0x60] sm:$0xff]
    %v3689 = vld [vmem:[%s3675 + $0x68] sm:$0xff]
    %v3690 = vld [vmem:[%s3675 + $0x70] sm:$0xff]
    %v3691 = vld [vmem:[%s3675 + $0x78] sm:$0xff]
    %v3692 = vld [vmem:[%s3675 + $0x80] sm:$0xff]
    %v3693 = vld [vmem:[%s3675 + $0x88] sm:$0xff]
    %v3694 = vld [vmem:[%s3675 + $0x90] sm:$0xff]
    %v3695 = vld [vmem:[%s3675 + $0x98] sm:$0xff]
    %v3696 = vld [vmem:[%s3675 + $0xa0] sm:$0xff]
    %v3697 = vld [vmem:[%s3675 + $0xa8] sm:$0xff]
    %v3698 = vld [vmem:[%s3675 + $0xb0] sm:$0xff]
    %v3699 = vld [vmem:[%s3675 + $0xb8] sm:$0xff]
    %v3700 = vld [vmem:[%s3675 + $0xc0] sm:$0xff]
    %v3701 = vld [vmem:[%s3675 + $0xc8] sm:$0xff]
    %v3702 = vld [vmem:[%s3675 + $0xd0] sm:$0xff]
    %v3703 = vld [vmem:[%s3675 + $0xd8] sm:$0xff]
    %v3704 = vld [vmem:[%s3675 + $0xe0] sm:$0xff]
    %v3705 = vld [vmem:[%s3675 + $0xe8] sm:$0xff]
    %v3706 = vld [vmem:[%s3675 + $0xf0] sm:$0xff]
    %v3707 = vld [vmem:[%s3675 + $0xf8] sm:$0xff]
    %v3709 = vsel %vm2829, %v3674, 0
    %3711 = vmatpush.msra.mxu0 0.0
    %3712 = vmatpush.msra.mxu0 0.0
    %3713 = vmatpush.msra.mxu0 0.0
    %3714 = vmatpush.msra.mxu0 0.0
    %3715 = vmatpush.msra.mxu0 0.0
    %3716 = vmatpush.msra.mxu0 0.0
    %3717 = vmatpush.msra.mxu0 0.0
    %3718 = vmatpush.msra.mxu0 0.0
    %3719 = vmatpush.msra.mxu0 %v3704
    %3720 = vmatpush.msra.mxu0 %v3700
    %3721 = vmatpush.msra.mxu0 %v3696
    %3722 = vmatpush.msra.mxu0 %v3692
    %3723 = vmatpush.msra.mxu0 %v3688
    %3724 = vmatpush.msra.mxu0 %v3684
    %3725 = vmatpush.msra.mxu0 %v3680
    %3726 = vmatpush.msra.mxu0 %v3676
    %3727 = vmatmul.f32.gmra.mxu0 %v3709
    %v3728 = vpop.f32.mrf.mxu0
    %v3729 = vadd.f32 0.0, %v3728
    %3730 = vdwg.mxu0
    %3731 = vmatpush.msra.mxu0 0.0
    %3732 = vmatpush.msra.mxu0 0.0
    %3733 = vmatpush.msra.mxu0 0.0
    %3734 = vmatpush.msra.mxu0 0.0
    %3735 = vmatpush.msra.mxu0 0.0
    %3736 = vmatpush.msra.mxu0 0.0
    %3737 = vmatpush.msra.mxu0 0.0
    %3738 = vmatpush.msra.mxu0 0.0
    %3739 = vmatpush.msra.mxu0 %v3705
    %3740 = vmatpush.msra.mxu0 %v3701
    %3741 = vmatpush.msra.mxu0 %v3697
    %3742 = vmatpush.msra.mxu0 %v3693
    %3743 = vmatpush.msra.mxu0 %v3689
    %3744 = vmatpush.msra.mxu0 %v3685
    %3745 = vmatpush.msra.mxu0 %v3681
    %3746 = vmatpush.msra.mxu0 %v3677
    %3747 = vmatmul.f32.gmra.mxu0 %v3709
    %v3748 = vpop.f32.mrf.mxu0
    %v3749 = vadd.f32 0.0, %v3748
    %3750 = vdwg.mxu0
    %3751 = vmatpush.msra.mxu0 0.0
    %3752 = vmatpush.msra.mxu0 0.0
    %3753 = vmatpush.msra.mxu0 0.0
    %3754 = vmatpush.msra.mxu0 0.0
    %3755 = vmatpush.msra.mxu0 0.0
    %3756 = vmatpush.msra.mxu0 0.0
    %3757 = vmatpush.msra.mxu0 0.0
    %3758 = vmatpush.msra.mxu0 0.0
    %3759 = vmatpush.msra.mxu0 %v3706
    %3760 = vmatpush.msra.mxu0 %v3702
    %3761 = vmatpush.msra.mxu0 %v3698
    %3762 = vmatpush.msra.mxu0 %v3694
    %3763 = vmatpush.msra.mxu0 %v3690
    %3764 = vmatpush.msra.mxu0 %v3686
    %3765 = vmatpush.msra.mxu0 %v3682
    %3766 = vmatpush.msra.mxu0 %v3678
    %3767 = vmatmul.f32.gmra.mxu0 %v3709
    %v3768 = vpop.f32.mrf.mxu0
    %v3769 = vadd.f32 0.0, %v3768
    %3770 = vdwg.mxu0
    %3771 = vmatpush.msra.mxu0 0.0
    %3772 = vmatpush.msra.mxu0 0.0
    %3773 = vmatpush.msra.mxu0 0.0
    %3774 = vmatpush.msra.mxu0 0.0
    %3775 = vmatpush.msra.mxu0 0.0
    %3776 = vmatpush.msra.mxu0 0.0
    %3777 = vmatpush.msra.mxu0 0.0
    %3778 = vmatpush.msra.mxu0 0.0
    %3779 = vmatpush.msra.mxu0 %v3707
    %3780 = vmatpush.msra.mxu0 %v3703
    %3781 = vmatpush.msra.mxu0 %v3699
    %3782 = vmatpush.msra.mxu0 %v3695
    %3783 = vmatpush.msra.mxu0 %v3691
    %3784 = vmatpush.msra.mxu0 %v3687
    %3785 = vmatpush.msra.mxu0 %v3683
    %3786 = vmatpush.msra.mxu0 %v3679
    %3787 = vmatmul.f32.gmra.mxu0 %v3709
    %v3788 = vpop.f32.mrf.mxu0
    %v3789 = vadd.f32 0.0, %v3788
    %3790 = vdwg.mxu0
    %v3791 = vadd.f32 %v3670, %v3729
    %v3792 = vadd.f32 %v3671, %v3749
    %v3793 = vadd.f32 %v3672, %v3769
    %v3794 = vadd.f32 %v3673, %v3789
    %v3795 = vld [vmem:[#allocation3 + $0x14] sm:$0x3]
    %s3796 = scalar_lea.vmem %s6, 2048
    %v3797 = vld [vmem:[%s3796] sm:$0xff]
    %v3798 = vld [vmem:[%s3796 + $0x8] sm:$0xff]
    %v3799 = vld [vmem:[%s3796 + $0x10] sm:$0xff]
    %v3800 = vld [vmem:[%s3796 + $0x18] sm:$0xff]
    %v3801 = vld [vmem:[%s3796 + $0x20] sm:$0xff]
    %v3802 = vld [vmem:[%s3796 + $0x28] sm:$0xff]
    %v3803 = vld [vmem:[%s3796 + $0x30] sm:$0xff]
    %v3804 = vld [vmem:[%s3796 + $0x38] sm:$0xff]
    %v3805 = vld [vmem:[%s3796 + $0x40] sm:$0xff]
    %v3806 = vld [vmem:[%s3796 + $0x48] sm:$0xff]
    %v3807 = vld [vmem:[%s3796 + $0x50] sm:$0xff]
    %v3808 = vld [vmem:[%s3796 + $0x58] sm:$0xff]
    %v3809 = vld [vmem:[%s3796 + $0x60] sm:$0xff]
    %v3810 = vld [vmem:[%s3796 + $0x68] sm:$0xff]
    %v3811 = vld [vmem:[%s3796 + $0x70] sm:$0xff]
    %v3812 = vld [vmem:[%s3796 + $0x78] sm:$0xff]
    %v3813 = vld [vmem:[%s3796 + $0x80] sm:$0xff]
    %v3814 = vld [vmem:[%s3796 + $0x88] sm:$0xff]
    %v3815 = vld [vmem:[%s3796 + $0x90] sm:$0xff]
    %v3816 = vld [vmem:[%s3796 + $0x98] sm:$0xff]
    %v3817 = vld [vmem:[%s3796 + $0xa0] sm:$0xff]
    %v3818 = vld [vmem:[%s3796 + $0xa8] sm:$0xff]
    %v3819 = vld [vmem:[%s3796 + $0xb0] sm:$0xff]
    %v3820 = vld [vmem:[%s3796 + $0xb8] sm:$0xff]
    %v3821 = vld [vmem:[%s3796 + $0xc0] sm:$0xff]
    %v3822 = vld [vmem:[%s3796 + $0xc8] sm:$0xff]
    %v3823 = vld [vmem:[%s3796 + $0xd0] sm:$0xff]
    %v3824 = vld [vmem:[%s3796 + $0xd8] sm:$0xff]
    %v3825 = vld [vmem:[%s3796 + $0xe0] sm:$0xff]
    %v3826 = vld [vmem:[%s3796 + $0xe8] sm:$0xff]
    %v3827 = vld [vmem:[%s3796 + $0xf0] sm:$0xff]
    %v3828 = vld [vmem:[%s3796 + $0xf8] sm:$0xff]
    %v3830 = vsel %vm2829, %v3795, 0
    %3832 = vmatpush.msra.mxu0 0.0
    %3833 = vmatpush.msra.mxu0 0.0
    %3834 = vmatpush.msra.mxu0 0.0
    %3835 = vmatpush.msra.mxu0 0.0
    %3836 = vmatpush.msra.mxu0 0.0
    %3837 = vmatpush.msra.mxu0 0.0
    %3838 = vmatpush.msra.mxu0 0.0
    %3839 = vmatpush.msra.mxu0 0.0
    %3840 = vmatpush.msra.mxu0 %v3825
    %3841 = vmatpush.msra.mxu0 %v3821
    %3842 = vmatpush.msra.mxu0 %v3817
    %3843 = vmatpush.msra.mxu0 %v3813
    %3844 = vmatpush.msra.mxu0 %v3809
    %3845 = vmatpush.msra.mxu0 %v3805
    %3846 = vmatpush.msra.mxu0 %v3801
    %3847 = vmatpush.msra.mxu0 %v3797
    %3848 = vmatmul.f32.gmra.mxu0 %v3830
    %v3849 = vpop.f32.mrf.mxu0
    %v3850 = vadd.f32 0.0, %v3849
    %3851 = vdwg.mxu0
    %3852 = vmatpush.msra.mxu0 0.0
    %3853 = vmatpush.msra.mxu0 0.0
    %3854 = vmatpush.msra.mxu0 0.0
    %3855 = vmatpush.msra.mxu0 0.0
    %3856 = vmatpush.msra.mxu0 0.0
    %3857 = vmatpush.msra.mxu0 0.0
    %3858 = vmatpush.msra.mxu0 0.0
    %3859 = vmatpush.msra.mxu0 0.0
    %3860 = vmatpush.msra.mxu0 %v3826
    %3861 = vmatpush.msra.mxu0 %v3822
    %3862 = vmatpush.msra.mxu0 %v3818
    %3863 = vmatpush.msra.mxu0 %v3814
    %3864 = vmatpush.msra.mxu0 %v3810
    %3865 = vmatpush.msra.mxu0 %v3806
    %3866 = vmatpush.msra.mxu0 %v3802
    %3867 = vmatpush.msra.mxu0 %v3798
    %3868 = vmatmul.f32.gmra.mxu0 %v3830
    %v3869 = vpop.f32.mrf.mxu0
    %v3870 = vadd.f32 0.0, %v3869
    %3871 = vdwg.mxu0
    %3872 = vmatpush.msra.mxu0 0.0
    %3873 = vmatpush.msra.mxu0 0.0
    %3874 = vmatpush.msra.mxu0 0.0
    %3875 = vmatpush.msra.mxu0 0.0
    %3876 = vmatpush.msra.mxu0 0.0
    %3877 = vmatpush.msra.mxu0 0.0
    %3878 = vmatpush.msra.mxu0 0.0
    %3879 = vmatpush.msra.mxu0 0.0
    %3880 = vmatpush.msra.mxu0 %v3827
    %3881 = vmatpush.msra.mxu0 %v3823
    %3882 = vmatpush.msra.mxu0 %v3819
    %3883 = vmatpush.msra.mxu0 %v3815
    %3884 = vmatpush.msra.mxu0 %v3811
    %3885 = vmatpush.msra.mxu0 %v3807
    %3886 = vmatpush.msra.mxu0 %v3803
    %3887 = vmatpush.msra.mxu0 %v3799
    %3888 = vmatmul.f32.gmra.mxu0 %v3830
    %v3889 = vpop.f32.mrf.mxu0
    %v3890 = vadd.f32 0.0, %v3889
    %3891 = vdwg.mxu0
    %3892 = vmatpush.msra.mxu0 0.0
    %3893 = vmatpush.msra.mxu0 0.0
    %3894 = vmatpush.msra.mxu0 0.0
    %3895 = vmatpush.msra.mxu0 0.0
    %3896 = vmatpush.msra.mxu0 0.0
    %3897 = vmatpush.msra.mxu0 0.0
    %3898 = vmatpush.msra.mxu0 0.0
    %3899 = vmatpush.msra.mxu0 0.0
    %3900 = vmatpush.msra.mxu0 %v3828
    %3901 = vmatpush.msra.mxu0 %v3824
    %3902 = vmatpush.msra.mxu0 %v3820
    %3903 = vmatpush.msra.mxu0 %v3816
    %3904 = vmatpush.msra.mxu0 %v3812
    %3905 = vmatpush.msra.mxu0 %v3808
    %3906 = vmatpush.msra.mxu0 %v3804
    %3907 = vmatpush.msra.mxu0 %v3800
    %3908 = vmatmul.f32.gmra.mxu0 %v3830
    %v3909 = vpop.f32.mrf.mxu0
    %v3910 = vadd.f32 0.0, %v3909
    %3911 = vdwg.mxu0
    %v3912 = vadd.f32 %v3791, %v3850
    %v3913 = vadd.f32 %v3792, %v3870
    %v3914 = vadd.f32 %v3793, %v3890
    %v3915 = vadd.f32 %v3794, %v3910
    %v3916 = vld [vmem:[#allocation3 + $0x16] sm:$0x3]
    %s3917 = scalar_lea.vmem %s6, 2304
    %v3918 = vld [vmem:[%s3917] sm:$0xff]
    %v3919 = vld [vmem:[%s3917 + $0x8] sm:$0xff]
    %v3920 = vld [vmem:[%s3917 + $0x10] sm:$0xff]
    %v3921 = vld [vmem:[%s3917 + $0x18] sm:$0xff]
    %v3922 = vld [vmem:[%s3917 + $0x20] sm:$0xff]
    %v3923 = vld [vmem:[%s3917 + $0x28] sm:$0xff]
    %v3924 = vld [vmem:[%s3917 + $0x30] sm:$0xff]
    %v3925 = vld [vmem:[%s3917 + $0x38] sm:$0xff]
    %v3926 = vld [vmem:[%s3917 + $0x40] sm:$0xff]
    %v3927 = vld [vmem:[%s3917 + $0x48] sm:$0xff]
    %v3928 = vld [vmem:[%s3917 + $0x50] sm:$0xff]
    %v3929 = vld [vmem:[%s3917 + $0x58] sm:$0xff]
    %v3930 = vld [vmem:[%s3917 + $0x60] sm:$0xff]
    %v3931 = vld [vmem:[%s3917 + $0x68] sm:$0xff]
    %v3932 = vld [vmem:[%s3917 + $0x70] sm:$0xff]
    %v3933 = vld [vmem:[%s3917 + $0x78] sm:$0xff]
    %v3934 = vld [vmem:[%s3917 + $0x80] sm:$0xff]
    %v3935 = vld [vmem:[%s3917 + $0x88] sm:$0xff]
    %v3936 = vld [vmem:[%s3917 + $0x90] sm:$0xff]
    %v3937 = vld [vmem:[%s3917 + $0x98] sm:$0xff]
    %v3938 = vld [vmem:[%s3917 + $0xa0] sm:$0xff]
    %v3939 = vld [vmem:[%s3917 + $0xa8] sm:$0xff]
    %v3940 = vld [vmem:[%s3917 + $0xb0] sm:$0xff]
    %v3941 = vld [vmem:[%s3917 + $0xb8] sm:$0xff]
    %v3942 = vld [vmem:[%s3917 + $0xc0] sm:$0xff]
    %v3943 = vld [vmem:[%s3917 + $0xc8] sm:$0xff]
    %v3944 = vld [vmem:[%s3917 + $0xd0] sm:$0xff]
    %v3945 = vld [vmem:[%s3917 + $0xd8] sm:$0xff]
    %v3946 = vld [vmem:[%s3917 + $0xe0] sm:$0xff]
    %v3947 = vld [vmem:[%s3917 + $0xe8] sm:$0xff]
    %v3948 = vld [vmem:[%s3917 + $0xf0] sm:$0xff]
    %v3949 = vld [vmem:[%s3917 + $0xf8] sm:$0xff]
    %v3951 = vsel %vm2829, %v3916, 0
    %3953 = vmatpush.msra.mxu0 0.0
    %3954 = vmatpush.msra.mxu0 0.0
    %3955 = vmatpush.msra.mxu0 0.0
    %3956 = vmatpush.msra.mxu0 0.0
    %3957 = vmatpush.msra.mxu0 0.0
    %3958 = vmatpush.msra.mxu0 0.0
    %3959 = vmatpush.msra.mxu0 0.0
    %3960 = vmatpush.msra.mxu0 0.0
    %3961 = vmatpush.msra.mxu0 %v3946
    %3962 = vmatpush.msra.mxu0 %v3942
    %3963 = vmatpush.msra.mxu0 %v3938
    %3964 = vmatpush.msra.mxu0 %v3934
    %3965 = vmatpush.msra.mxu0 %v3930
    %3966 = vmatpush.msra.mxu0 %v3926
    %3967 = vmatpush.msra.mxu0 %v3922
    %3968 = vmatpush.msra.mxu0 %v3918
    %3969 = vmatmul.f32.gmra.mxu0 %v3951
    %v3970 = vpop.f32.mrf.mxu0
    %v3971 = vadd.f32 0.0, %v3970
    %3972 = vdwg.mxu0
    %3973 = vmatpush.msra.mxu0 0.0
    %3974 = vmatpush.msra.mxu0 0.0
    %3975 = vmatpush.msra.mxu0 0.0
    %3976 = vmatpush.msra.mxu0 0.0
    %3977 = vmatpush.msra.mxu0 0.0
    %3978 = vmatpush.msra.mxu0 0.0
    %3979 = vmatpush.msra.mxu0 0.0
    %3980 = vmatpush.msra.mxu0 0.0
    %3981 = vmatpush.msra.mxu0 %v3947
    %3982 = vmatpush.msra.mxu0 %v3943
    %3983 = vmatpush.msra.mxu0 %v3939
    %3984 = vmatpush.msra.mxu0 %v3935
    %3985 = vmatpush.msra.mxu0 %v3931
    %3986 = vmatpush.msra.mxu0 %v3927
    %3987 = vmatpush.msra.mxu0 %v3923
    %3988 = vmatpush.msra.mxu0 %v3919
    %3989 = vmatmul.f32.gmra.mxu0 %v3951
    %v3990 = vpop.f32.mrf.mxu0
    %v3991 = vadd.f32 0.0, %v3990
    %3992 = vdwg.mxu0
    %3993 = vmatpush.msra.mxu0 0.0
    %3994 = vmatpush.msra.mxu0 0.0
    %3995 = vmatpush.msra.mxu0 0.0
    %3996 = vmatpush.msra.mxu0 0.0
    %3997 = vmatpush.msra.mxu0 0.0
    %3998 = vmatpush.msra.mxu0 0.0
    %3999 = vmatpush.msra.mxu0 0.0
    %4000 = vmatpush.msra.mxu0 0.0
    %4001 = vmatpush.msra.mxu0 %v3948
    %4002 = vmatpush.msra.mxu0 %v3944
    %4003 = vmatpush.msra.mxu0 %v3940
    %4004 = vmatpush.msra.mxu0 %v3936
    %4005 = vmatpush.msra.mxu0 %v3932
    %4006 = vmatpush.msra.mxu0 %v3928
    %4007 = vmatpush.msra.mxu0 %v3924
    %4008 = vmatpush.msra.mxu0 %v3920
    %4009 = vmatmul.f32.gmra.mxu0 %v3951
    %v4010 = vpop.f32.mrf.mxu0
    %v4011 = vadd.f32 0.0, %v4010
    %4012 = vdwg.mxu0
    %4013 = vmatpush.msra.mxu0 0.0
    %4014 = vmatpush.msra.mxu0 0.0
    %4015 = vmatpush.msra.mxu0 0.0
    %4016 = vmatpush.msra.mxu0 0.0
    %4017 = vmatpush.msra.mxu0 0.0
    %4018 = vmatpush.msra.mxu0 0.0
    %4019 = vmatpush.msra.mxu0 0.0
    %4020 = vmatpush.msra.mxu0 0.0
    %4021 = vmatpush.msra.mxu0 %v3949
    %4022 = vmatpush.msra.mxu0 %v3945
    %4023 = vmatpush.msra.mxu0 %v3941
    %4024 = vmatpush.msra.mxu0 %v3937
    %4025 = vmatpush.msra.mxu0 %v3933
    %4026 = vmatpush.msra.mxu0 %v3929
    %4027 = vmatpush.msra.mxu0 %v3925
    %4028 = vmatpush.msra.mxu0 %v3921
    %4029 = vmatmul.f32.gmra.mxu0 %v3951
    %v4030 = vpop.f32.mrf.mxu0
    %v4031 = vadd.f32 0.0, %v4030
    %4032 = vdwg.mxu0
    %v4033 = vadd.f32 %v3912, %v3971
    %v4034 = vadd.f32 %v3913, %v3991
    %v4035 = vadd.f32 %v3914, %v4011
    %v4036 = vadd.f32 %v3915, %v4031
    %v4037 = vld [vmem:[#allocation3 + $0x18] sm:$0x3]
    %s4038 = scalar_lea.vmem %s6, 2560
    %v4039 = vld [vmem:[%s4038] sm:$0xff]
    %v4040 = vld [vmem:[%s4038 + $0x8] sm:$0xff]
    %v4041 = vld [vmem:[%s4038 + $0x10] sm:$0xff]
    %v4042 = vld [vmem:[%s4038 + $0x18] sm:$0xff]
    %v4043 = vld [vmem:[%s4038 + $0x20] sm:$0xff]
    %v4044 = vld [vmem:[%s4038 + $0x28] sm:$0xff]
    %v4045 = vld [vmem:[%s4038 + $0x30] sm:$0xff]
    %v4046 = vld [vmem:[%s4038 + $0x38] sm:$0xff]
    %v4047 = vld [vmem:[%s4038 + $0x40] sm:$0xff]
    %v4048 = vld [vmem:[%s4038 + $0x48] sm:$0xff]
    %v4049 = vld [vmem:[%s4038 + $0x50] sm:$0xff]
    %v4050 = vld [vmem:[%s4038 + $0x58] sm:$0xff]
    %v4051 = vld [vmem:[%s4038 + $0x60] sm:$0xff]
    %v4052 = vld [vmem:[%s4038 + $0x68] sm:$0xff]
    %v4053 = vld [vmem:[%s4038 + $0x70] sm:$0xff]
    %v4054 = vld [vmem:[%s4038 + $0x78] sm:$0xff]
    %v4055 = vld [vmem:[%s4038 + $0x80] sm:$0xff]
    %v4056 = vld [vmem:[%s4038 + $0x88] sm:$0xff]
    %v4057 = vld [vmem:[%s4038 + $0x90] sm:$0xff]
    %v4058 = vld [vmem:[%s4038 + $0x98] sm:$0xff]
    %v4059 = vld [vmem:[%s4038 + $0xa0] sm:$0xff]
    %v4060 = vld [vmem:[%s4038 + $0xa8] sm:$0xff]
    %v4061 = vld [vmem:[%s4038 + $0xb0] sm:$0xff]
    %v4062 = vld [vmem:[%s4038 + $0xb8] sm:$0xff]
    %v4063 = vld [vmem:[%s4038 + $0xc0] sm:$0xff]
    %v4064 = vld [vmem:[%s4038 + $0xc8] sm:$0xff]
    %v4065 = vld [vmem:[%s4038 + $0xd0] sm:$0xff]
    %v4066 = vld [vmem:[%s4038 + $0xd8] sm:$0xff]
    %v4067 = vld [vmem:[%s4038 + $0xe0] sm:$0xff]
    %v4068 = vld [vmem:[%s4038 + $0xe8] sm:$0xff]
    %v4069 = vld [vmem:[%s4038 + $0xf0] sm:$0xff]
    %v4070 = vld [vmem:[%s4038 + $0xf8] sm:$0xff]
    %v4072 = vsel %vm2829, %v4037, 0
    %4074 = vmatpush.msra.mxu0 0.0
    %4075 = vmatpush.msra.mxu0 0.0
    %4076 = vmatpush.msra.mxu0 0.0
    %4077 = vmatpush.msra.mxu0 0.0
    %4078 = vmatpush.msra.mxu0 0.0
    %4079 = vmatpush.msra.mxu0 0.0
    %4080 = vmatpush.msra.mxu0 0.0
    %4081 = vmatpush.msra.mxu0 0.0
    %4082 = vmatpush.msra.mxu0 %v4067
    %4083 = vmatpush.msra.mxu0 %v4063
    %4084 = vmatpush.msra.mxu0 %v4059
    %4085 = vmatpush.msra.mxu0 %v4055
    %4086 = vmatpush.msra.mxu0 %v4051
    %4087 = vmatpush.msra.mxu0 %v4047
    %4088 = vmatpush.msra.mxu0 %v4043
    %4089 = vmatpush.msra.mxu0 %v4039
    %4090 = vmatmul.f32.gmra.mxu0 %v4072
    %v4091 = vpop.f32.mrf.mxu0
    %v4092 = vadd.f32 0.0, %v4091
    %4093 = vdwg.mxu0
    %4094 = vmatpush.msra.mxu0 0.0
    %4095 = vmatpush.msra.mxu0 0.0
    %4096 = vmatpush.msra.mxu0 0.0
    %4097 = vmatpush.msra.mxu0 0.0
    %4098 = vmatpush.msra.mxu0 0.0
    %4099 = vmatpush.msra.mxu0 0.0
    %4100 = vmatpush.msra.mxu0 0.0
    %4101 = vmatpush.msra.mxu0 0.0
    %4102 = vmatpush.msra.mxu0 %v4068
    %4103 = vmatpush.msra.mxu0 %v4064
    %4104 = vmatpush.msra.mxu0 %v4060
    %4105 = vmatpush.msra.mxu0 %v4056
    %4106 = vmatpush.msra.mxu0 %v4052
    %4107 = vmatpush.msra.mxu0 %v4048
    %4108 = vmatpush.msra.mxu0 %v4044
    %4109 = vmatpush.msra.mxu0 %v4040
    %4110 = vmatmul.f32.gmra.mxu0 %v4072
    %v4111 = vpop.f32.mrf.mxu0
    %v4112 = vadd.f32 0.0, %v4111
    %4113 = vdwg.mxu0
    %4114 = vmatpush.msra.mxu0 0.0
    %4115 = vmatpush.msra.mxu0 0.0
    %4116 = vmatpush.msra.mxu0 0.0
    %4117 = vmatpush.msra.mxu0 0.0
    %4118 = vmatpush.msra.mxu0 0.0
    %4119 = vmatpush.msra.mxu0 0.0
    %4120 = vmatpush.msra.mxu0 0.0
    %4121 = vmatpush.msra.mxu0 0.0
    %4122 = vmatpush.msra.mxu0 %v4069
    %4123 = vmatpush.msra.mxu0 %v4065
    %4124 = vmatpush.msra.mxu0 %v4061
    %4125 = vmatpush.msra.mxu0 %v4057
    %4126 = vmatpush.msra.mxu0 %v4053
    %4127 = vmatpush.msra.mxu0 %v4049
    %4128 = vmatpush.msra.mxu0 %v4045
    %4129 = vmatpush.msra.mxu0 %v4041
    %4130 = vmatmul.f32.gmra.mxu0 %v4072
    %v4131 = vpop.f32.mrf.mxu0
    %v4132 = vadd.f32 0.0, %v4131
    %4133 = vdwg.mxu0
    %4134 = vmatpush.msra.mxu0 0.0
    %4135 = vmatpush.msra.mxu0 0.0
    %4136 = vmatpush.msra.mxu0 0.0
    %4137 = vmatpush.msra.mxu0 0.0
    %4138 = vmatpush.msra.mxu0 0.0
    %4139 = vmatpush.msra.mxu0 0.0
    %4140 = vmatpush.msra.mxu0 0.0
    %4141 = vmatpush.msra.mxu0 0.0
    %4142 = vmatpush.msra.mxu0 %v4070
    %4143 = vmatpush.msra.mxu0 %v4066
    %4144 = vmatpush.msra.mxu0 %v4062
    %4145 = vmatpush.msra.mxu0 %v4058
    %4146 = vmatpush.msra.mxu0 %v4054
    %4147 = vmatpush.msra.mxu0 %v4050
    %4148 = vmatpush.msra.mxu0 %v4046
    %4149 = vmatpush.msra.mxu0 %v4042
    %4150 = vmatmul.f32.gmra.mxu0 %v4072
    %v4151 = vpop.f32.mrf.mxu0
    %v4152 = vadd.f32 0.0, %v4151
    %4153 = vdwg.mxu0
    %v4154 = vadd.f32 %v4033, %v4092
    %v4155 = vadd.f32 %v4034, %v4112
    %v4156 = vadd.f32 %v4035, %v4132
    %v4157 = vadd.f32 %v4036, %v4152
    %v4158 = vld [vmem:[#allocation3 + $0x1a] sm:$0x3]
    %s4159 = scalar_lea.vmem %s6, 2816
    %v4160 = vld [vmem:[%s4159] sm:$0xff]
    %v4161 = vld [vmem:[%s4159 + $0x8] sm:$0xff]
    %v4162 = vld [vmem:[%s4159 + $0x10] sm:$0xff]
    %v4163 = vld [vmem:[%s4159 + $0x18] sm:$0xff]
    %v4164 = vld [vmem:[%s4159 + $0x20] sm:$0xff]
    %v4165 = vld [vmem:[%s4159 + $0x28] sm:$0xff]
    %v4166 = vld [vmem:[%s4159 + $0x30] sm:$0xff]
    %v4167 = vld [vmem:[%s4159 + $0x38] sm:$0xff]
    %v4168 = vld [vmem:[%s4159 + $0x40] sm:$0xff]
    %v4169 = vld [vmem:[%s4159 + $0x48] sm:$0xff]
    %v4170 = vld [vmem:[%s4159 + $0x50] sm:$0xff]
    %v4171 = vld [vmem:[%s4159 + $0x58] sm:$0xff]
    %v4172 = vld [vmem:[%s4159 + $0x60] sm:$0xff]
    %v4173 = vld [vmem:[%s4159 + $0x68] sm:$0xff]
    %v4174 = vld [vmem:[%s4159 + $0x70] sm:$0xff]
    %v4175 = vld [vmem:[%s4159 + $0x78] sm:$0xff]
    %v4176 = vld [vmem:[%s4159 + $0x80] sm:$0xff]
    %v4177 = vld [vmem:[%s4159 + $0x88] sm:$0xff]
    %v4178 = vld [vmem:[%s4159 + $0x90] sm:$0xff]
    %v4179 = vld [vmem:[%s4159 + $0x98] sm:$0xff]
    %v4180 = vld [vmem:[%s4159 + $0xa0] sm:$0xff]
    %v4181 = vld [vmem:[%s4159 + $0xa8] sm:$0xff]
    %v4182 = vld [vmem:[%s4159 + $0xb0] sm:$0xff]
    %v4183 = vld [vmem:[%s4159 + $0xb8] sm:$0xff]
    %v4184 = vld [vmem:[%s4159 + $0xc0] sm:$0xff]
    %v4185 = vld [vmem:[%s4159 + $0xc8] sm:$0xff]
    %v4186 = vld [vmem:[%s4159 + $0xd0] sm:$0xff]
    %v4187 = vld [vmem:[%s4159 + $0xd8] sm:$0xff]
    %v4188 = vld [vmem:[%s4159 + $0xe0] sm:$0xff]
    %v4189 = vld [vmem:[%s4159 + $0xe8] sm:$0xff]
    %v4190 = vld [vmem:[%s4159 + $0xf0] sm:$0xff]
    %v4191 = vld [vmem:[%s4159 + $0xf8] sm:$0xff]
    %v4193 = vsel %vm2829, %v4158, 0
    %4195 = vmatpush.msra.mxu0 0.0
    %4196 = vmatpush.msra.mxu0 0.0
    %4197 = vmatpush.msra.mxu0 0.0
    %4198 = vmatpush.msra.mxu0 0.0
    %4199 = vmatpush.msra.mxu0 0.0
    %4200 = vmatpush.msra.mxu0 0.0
    %4201 = vmatpush.msra.mxu0 0.0
    %4202 = vmatpush.msra.mxu0 0.0
    %4203 = vmatpush.msra.mxu0 %v4188
    %4204 = vmatpush.msra.mxu0 %v4184
    %4205 = vmatpush.msra.mxu0 %v4180
    %4206 = vmatpush.msra.mxu0 %v4176
    %4207 = vmatpush.msra.mxu0 %v4172
    %4208 = vmatpush.msra.mxu0 %v4168
    %4209 = vmatpush.msra.mxu0 %v4164
    %4210 = vmatpush.msra.mxu0 %v4160
    %4211 = vmatmul.f32.gmra.mxu0 %v4193
    %v4212 = vpop.f32.mrf.mxu0
    %v4213 = vadd.f32 0.0, %v4212
    %4214 = vdwg.mxu0
    %4215 = vmatpush.msra.mxu0 0.0
    %4216 = vmatpush.msra.mxu0 0.0
    %4217 = vmatpush.msra.mxu0 0.0
    %4218 = vmatpush.msra.mxu0 0.0
    %4219 = vmatpush.msra.mxu0 0.0
    %4220 = vmatpush.msra.mxu0 0.0
    %4221 = vmatpush.msra.mxu0 0.0
    %4222 = vmatpush.msra.mxu0 0.0
    %4223 = vmatpush.msra.mxu0 %v4189
    %4224 = vmatpush.msra.mxu0 %v4185
    %4225 = vmatpush.msra.mxu0 %v4181
    %4226 = vmatpush.msra.mxu0 %v4177
    %4227 = vmatpush.msra.mxu0 %v4173
    %4228 = vmatpush.msra.mxu0 %v4169
    %4229 = vmatpush.msra.mxu0 %v4165
    %4230 = vmatpush.msra.mxu0 %v4161
    %4231 = vmatmul.f32.gmra.mxu0 %v4193
    %v4232 = vpop.f32.mrf.mxu0
    %v4233 = vadd.f32 0.0, %v4232
    %4234 = vdwg.mxu0
    %4235 = vmatpush.msra.mxu0 0.0
    %4236 = vmatpush.msra.mxu0 0.0
    %4237 = vmatpush.msra.mxu0 0.0
    %4238 = vmatpush.msra.mxu0 0.0
    %4239 = vmatpush.msra.mxu0 0.0
    %4240 = vmatpush.msra.mxu0 0.0
    %4241 = vmatpush.msra.mxu0 0.0
    %4242 = vmatpush.msra.mxu0 0.0
    %4243 = vmatpush.msra.mxu0 %v4190
    %4244 = vmatpush.msra.mxu0 %v4186
    %4245 = vmatpush.msra.mxu0 %v4182
    %4246 = vmatpush.msra.mxu0 %v4178
    %4247 = vmatpush.msra.mxu0 %v4174
    %4248 = vmatpush.msra.mxu0 %v4170
    %4249 = vmatpush.msra.mxu0 %v4166
    %4250 = vmatpush.msra.mxu0 %v4162
    %4251 = vmatmul.f32.gmra.mxu0 %v4193
    %v4252 = vpop.f32.mrf.mxu0
    %v4253 = vadd.f32 0.0, %v4252
    %4254 = vdwg.mxu0
    %4255 = vmatpush.msra.mxu0 0.0
    %4256 = vmatpush.msra.mxu0 0.0
    %4257 = vmatpush.msra.mxu0 0.0
    %4258 = vmatpush.msra.mxu0 0.0
    %4259 = vmatpush.msra.mxu0 0.0
    %4260 = vmatpush.msra.mxu0 0.0
    %4261 = vmatpush.msra.mxu0 0.0
    %4262 = vmatpush.msra.mxu0 0.0
    %4263 = vmatpush.msra.mxu0 %v4191
    %4264 = vmatpush.msra.mxu0 %v4187
    %4265 = vmatpush.msra.mxu0 %v4183
    %4266 = vmatpush.msra.mxu0 %v4179
    %4267 = vmatpush.msra.mxu0 %v4175
    %4268 = vmatpush.msra.mxu0 %v4171
    %4269 = vmatpush.msra.mxu0 %v4167
    %4270 = vmatpush.msra.mxu0 %v4163
    %4271 = vmatmul.f32.gmra.mxu0 %v4193
    %v4272 = vpop.f32.mrf.mxu0
    %v4273 = vadd.f32 0.0, %v4272
    %4274 = vdwg.mxu0
    %v4275 = vadd.f32 %v4154, %v4213
    %v4276 = vadd.f32 %v4155, %v4233
    %v4277 = vadd.f32 %v4156, %v4253
    %v4278 = vadd.f32 %v4157, %v4273
    %v4279 = vld [vmem:[#allocation3 + $0x1e] sm:$0x3]
    %s4280 = scalar_lea.vmem %s6, 3072
    %v4281 = vld [vmem:[%s4280] sm:$0xff]
    %v4282 = vld [vmem:[%s4280 + $0x8] sm:$0xff]
    %v4283 = vld [vmem:[%s4280 + $0x10] sm:$0xff]
    %v4284 = vld [vmem:[%s4280 + $0x18] sm:$0xff]
    %v4285 = vld [vmem:[%s4280 + $0x20] sm:$0xff]
    %v4286 = vld [vmem:[%s4280 + $0x28] sm:$0xff]
    %v4287 = vld [vmem:[%s4280 + $0x30] sm:$0xff]
    %v4288 = vld [vmem:[%s4280 + $0x38] sm:$0xff]
    %v4289 = vld [vmem:[%s4280 + $0x40] sm:$0xff]
    %v4290 = vld [vmem:[%s4280 + $0x48] sm:$0xff]
    %v4291 = vld [vmem:[%s4280 + $0x50] sm:$0xff]
    %v4292 = vld [vmem:[%s4280 + $0x58] sm:$0xff]
    %v4293 = vld [vmem:[%s4280 + $0x60] sm:$0xff]
    %v4294 = vld [vmem:[%s4280 + $0x68] sm:$0xff]
    %v4295 = vld [vmem:[%s4280 + $0x70] sm:$0xff]
    %v4296 = vld [vmem:[%s4280 + $0x78] sm:$0xff]
    %v4297 = vld [vmem:[%s4280 + $0x80] sm:$0xff]
    %v4298 = vld [vmem:[%s4280 + $0x88] sm:$0xff]
    %v4299 = vld [vmem:[%s4280 + $0x90] sm:$0xff]
    %v4300 = vld [vmem:[%s4280 + $0x98] sm:$0xff]
    %v4301 = vld [vmem:[%s4280 + $0xa0] sm:$0xff]
    %v4302 = vld [vmem:[%s4280 + $0xa8] sm:$0xff]
    %v4303 = vld [vmem:[%s4280 + $0xb0] sm:$0xff]
    %v4304 = vld [vmem:[%s4280 + $0xb8] sm:$0xff]
    %v4305 = vld [vmem:[%s4280 + $0xc0] sm:$0xff]
    %v4306 = vld [vmem:[%s4280 + $0xc8] sm:$0xff]
    %v4307 = vld [vmem:[%s4280 + $0xd0] sm:$0xff]
    %v4308 = vld [vmem:[%s4280 + $0xd8] sm:$0xff]
    %v4309 = vld [vmem:[%s4280 + $0xe0] sm:$0xff]
    %v4310 = vld [vmem:[%s4280 + $0xe8] sm:$0xff]
    %v4311 = vld [vmem:[%s4280 + $0xf0] sm:$0xff]
    %v4312 = vld [vmem:[%s4280 + $0xf8] sm:$0xff]
    %v4314 = vsel %vm2829, %v4279, 0
    %4316 = vmatpush.msra.mxu0 0.0
    %4317 = vmatpush.msra.mxu0 0.0
    %4318 = vmatpush.msra.mxu0 0.0
    %4319 = vmatpush.msra.mxu0 0.0
    %4320 = vmatpush.msra.mxu0 0.0
    %4321 = vmatpush.msra.mxu0 0.0
    %4322 = vmatpush.msra.mxu0 0.0
    %4323 = vmatpush.msra.mxu0 0.0
    %4324 = vmatpush.msra.mxu0 %v4309
    %4325 = vmatpush.msra.mxu0 %v4305
    %4326 = vmatpush.msra.mxu0 %v4301
    %4327 = vmatpush.msra.mxu0 %v4297
    %4328 = vmatpush.msra.mxu0 %v4293
    %4329 = vmatpush.msra.mxu0 %v4289
    %4330 = vmatpush.msra.mxu0 %v4285
    %4331 = vmatpush.msra.mxu0 %v4281
    %4332 = vmatmul.f32.gmra.mxu0 %v4314
    %v4333 = vpop.f32.mrf.mxu0
    %v4334 = vadd.f32 0.0, %v4333
    %4335 = vdwg.mxu0
    %4336 = vmatpush.msra.mxu0 0.0
    %4337 = vmatpush.msra.mxu0 0.0
    %4338 = vmatpush.msra.mxu0 0.0
    %4339 = vmatpush.msra.mxu0 0.0
    %4340 = vmatpush.msra.mxu0 0.0
    %4341 = vmatpush.msra.mxu0 0.0
    %4342 = vmatpush.msra.mxu0 0.0
    %4343 = vmatpush.msra.mxu0 0.0
    %4344 = vmatpush.msra.mxu0 %v4310
    %4345 = vmatpush.msra.mxu0 %v4306
    %4346 = vmatpush.msra.mxu0 %v4302
    %4347 = vmatpush.msra.mxu0 %v4298
    %4348 = vmatpush.msra.mxu0 %v4294
    %4349 = vmatpush.msra.mxu0 %v4290
    %4350 = vmatpush.msra.mxu0 %v4286
    %4351 = vmatpush.msra.mxu0 %v4282
    %4352 = vmatmul.f32.gmra.mxu0 %v4314
    %v4353 = vpop.f32.mrf.mxu0
    %v4354 = vadd.f32 0.0, %v4353
    %4355 = vdwg.mxu0
    %4356 = vmatpush.msra.mxu0 0.0
    %4357 = vmatpush.msra.mxu0 0.0
    %4358 = vmatpush.msra.mxu0 0.0
    %4359 = vmatpush.msra.mxu0 0.0
    %4360 = vmatpush.msra.mxu0 0.0
    %4361 = vmatpush.msra.mxu0 0.0
    %4362 = vmatpush.msra.mxu0 0.0
    %4363 = vmatpush.msra.mxu0 0.0
    %4364 = vmatpush.msra.mxu0 %v4311
    %4365 = vmatpush.msra.mxu0 %v4307
    %4366 = vmatpush.msra.mxu0 %v4303
    %4367 = vmatpush.msra.mxu0 %v4299
    %4368 = vmatpush.msra.mxu0 %v4295
    %4369 = vmatpush.msra.mxu0 %v4291
    %4370 = vmatpush.msra.mxu0 %v4287
    %4371 = vmatpush.msra.mxu0 %v4283
    %4372 = vmatmul.f32.gmra.mxu0 %v4314
    %v4373 = vpop.f32.mrf.mxu0
    %v4374 = vadd.f32 0.0, %v4373
    %4375 = vdwg.mxu0
    %4376 = vmatpush.msra.mxu0 0.0
    %4377 = vmatpush.msra.mxu0 0.0
    %4378 = vmatpush.msra.mxu0 0.0
    %4379 = vmatpush.msra.mxu0 0.0
    %4380 = vmatpush.msra.mxu0 0.0
    %4381 = vmatpush.msra.mxu0 0.0
    %4382 = vmatpush.msra.mxu0 0.0
    %4383 = vmatpush.msra.mxu0 0.0
    %4384 = vmatpush.msra.mxu0 %v4312
    %4385 = vmatpush.msra.mxu0 %v4308
    %4386 = vmatpush.msra.mxu0 %v4304
    %4387 = vmatpush.msra.mxu0 %v4300
    %4388 = vmatpush.msra.mxu0 %v4296
    %4389 = vmatpush.msra.mxu0 %v4292
    %4390 = vmatpush.msra.mxu0 %v4288
    %4391 = vmatpush.msra.mxu0 %v4284
    %4392 = vmatmul.f32.gmra.mxu0 %v4314
    %v4393 = vpop.f32.mrf.mxu0
    %v4394 = vadd.f32 0.0, %v4393
    %4395 = vdwg.mxu0
    %v4396 = vadd.f32 %v4275, %v4334
    %v4397 = vadd.f32 %v4276, %v4354
    %v4398 = vadd.f32 %v4277, %v4374
    %v4399 = vadd.f32 %v4278, %v4394
    %v4400 = vld [vmem:[#allocation3 + $0x20] sm:$0x3]
    %s4401 = scalar_lea.vmem %s6, 3328
    %v4402 = vld [vmem:[%s4401] sm:$0xff]
    %v4403 = vld [vmem:[%s4401 + $0x8] sm:$0xff]
    %v4404 = vld [vmem:[%s4401 + $0x10] sm:$0xff]
    %v4405 = vld [vmem:[%s4401 + $0x18] sm:$0xff]
    %v4406 = vld [vmem:[%s4401 + $0x20] sm:$0xff]
    %v4407 = vld [vmem:[%s4401 + $0x28] sm:$0xff]
    %v4408 = vld [vmem:[%s4401 + $0x30] sm:$0xff]
    %v4409 = vld [vmem:[%s4401 + $0x38] sm:$0xff]
    %v4410 = vld [vmem:[%s4401 + $0x40] sm:$0xff]
    %v4411 = vld [vmem:[%s4401 + $0x48] sm:$0xff]
    %v4412 = vld [vmem:[%s4401 + $0x50] sm:$0xff]
    %v4413 = vld [vmem:[%s4401 + $0x58] sm:$0xff]
    %v4414 = vld [vmem:[%s4401 + $0x60] sm:$0xff]
    %v4415 = vld [vmem:[%s4401 + $0x68] sm:$0xff]
    %v4416 = vld [vmem:[%s4401 + $0x70] sm:$0xff]
    %v4417 = vld [vmem:[%s4401 + $0x78] sm:$0xff]
    %v4418 = vld [vmem:[%s4401 + $0x80] sm:$0xff]
    %v4419 = vld [vmem:[%s4401 + $0x88] sm:$0xff]
    %v4420 = vld [vmem:[%s4401 + $0x90] sm:$0xff]
    %v4421 = vld [vmem:[%s4401 + $0x98] sm:$0xff]
    %v4422 = vld [vmem:[%s4401 + $0xa0] sm:$0xff]
    %v4423 = vld [vmem:[%s4401 + $0xa8] sm:$0xff]
    %v4424 = vld [vmem:[%s4401 + $0xb0] sm:$0xff]
    %v4425 = vld [vmem:[%s4401 + $0xb8] sm:$0xff]
    %v4426 = vld [vmem:[%s4401 + $0xc0] sm:$0xff]
    %v4427 = vld [vmem:[%s4401 + $0xc8] sm:$0xff]
    %v4428 = vld [vmem:[%s4401 + $0xd0] sm:$0xff]
    %v4429 = vld [vmem:[%s4401 + $0xd8] sm:$0xff]
    %v4430 = vld [vmem:[%s4401 + $0xe0] sm:$0xff]
    %v4431 = vld [vmem:[%s4401 + $0xe8] sm:$0xff]
    %v4432 = vld [vmem:[%s4401 + $0xf0] sm:$0xff]
    %v4433 = vld [vmem:[%s4401 + $0xf8] sm:$0xff]
    %v4435 = vsel %vm2829, %v4400, 0
    %4437 = vmatpush.msra.mxu0 0.0
    %4438 = vmatpush.msra.mxu0 0.0
    %4439 = vmatpush.msra.mxu0 0.0
    %4440 = vmatpush.msra.mxu0 0.0
    %4441 = vmatpush.msra.mxu0 0.0
    %4442 = vmatpush.msra.mxu0 0.0
    %4443 = vmatpush.msra.mxu0 0.0
    %4444 = vmatpush.msra.mxu0 0.0
    %4445 = vmatpush.msra.mxu0 %v4430
    %4446 = vmatpush.msra.mxu0 %v4426
    %4447 = vmatpush.msra.mxu0 %v4422
    %4448 = vmatpush.msra.mxu0 %v4418
    %4449 = vmatpush.msra.mxu0 %v4414
    %4450 = vmatpush.msra.mxu0 %v4410
    %4451 = vmatpush.msra.mxu0 %v4406
    %4452 = vmatpush.msra.mxu0 %v4402
    %4453 = vmatmul.f32.gmra.mxu0 %v4435
    %v4454 = vpop.f32.mrf.mxu0
    %v4455 = vadd.f32 0.0, %v4454
    %4456 = vdwg.mxu0
    %4457 = vmatpush.msra.mxu0 0.0
    %4458 = vmatpush.msra.mxu0 0.0
    %4459 = vmatpush.msra.mxu0 0.0
    %4460 = vmatpush.msra.mxu0 0.0
    %4461 = vmatpush.msra.mxu0 0.0
    %4462 = vmatpush.msra.mxu0 0.0
    %4463 = vmatpush.msra.mxu0 0.0
    %4464 = vmatpush.msra.mxu0 0.0
    %4465 = vmatpush.msra.mxu0 %v4431
    %4466 = vmatpush.msra.mxu0 %v4427
    %4467 = vmatpush.msra.mxu0 %v4423
    %4468 = vmatpush.msra.mxu0 %v4419
    %4469 = vmatpush.msra.mxu0 %v4415
    %4470 = vmatpush.msra.mxu0 %v4411
    %4471 = vmatpush.msra.mxu0 %v4407
    %4472 = vmatpush.msra.mxu0 %v4403
    %4473 = vmatmul.f32.gmra.mxu0 %v4435
    %v4474 = vpop.f32.mrf.mxu0
    %v4475 = vadd.f32 0.0, %v4474
    %4476 = vdwg.mxu0
    %4477 = vmatpush.msra.mxu0 0.0
    %4478 = vmatpush.msra.mxu0 0.0
    %4479 = vmatpush.msra.mxu0 0.0
    %4480 = vmatpush.msra.mxu0 0.0
    %4481 = vmatpush.msra.mxu0 0.0
    %4482 = vmatpush.msra.mxu0 0.0
    %4483 = vmatpush.msra.mxu0 0.0
    %4484 = vmatpush.msra.mxu0 0.0
    %4485 = vmatpush.msra.mxu0 %v4432
    %4486 = vmatpush.msra.mxu0 %v4428
    %4487 = vmatpush.msra.mxu0 %v4424
    %4488 = vmatpush.msra.mxu0 %v4420
    %4489 = vmatpush.msra.mxu0 %v4416
    %4490 = vmatpush.msra.mxu0 %v4412
    %4491 = vmatpush.msra.mxu0 %v4408
    %4492 = vmatpush.msra.mxu0 %v4404
    %4493 = vmatmul.f32.gmra.mxu0 %v4435
    %v4494 = vpop.f32.mrf.mxu0
    %v4495 = vadd.f32 0.0, %v4494
    %4496 = vdwg.mxu0
    %4497 = vmatpush.msra.mxu0 0.0
    %4498 = vmatpush.msra.mxu0 0.0
    %4499 = vmatpush.msra.mxu0 0.0
    %4500 = vmatpush.msra.mxu0 0.0
    %4501 = vmatpush.msra.mxu0 0.0
    %4502 = vmatpush.msra.mxu0 0.0
    %4503 = vmatpush.msra.mxu0 0.0
    %4504 = vmatpush.msra.mxu0 0.0
    %4505 = vmatpush.msra.mxu0 %v4433
    %4506 = vmatpush.msra.mxu0 %v4429
    %4507 = vmatpush.msra.mxu0 %v4425
    %4508 = vmatpush.msra.mxu0 %v4421
    %4509 = vmatpush.msra.mxu0 %v4417
    %4510 = vmatpush.msra.mxu0 %v4413
    %4511 = vmatpush.msra.mxu0 %v4409
    %4512 = vmatpush.msra.mxu0 %v4405
    %4513 = vmatmul.f32.gmra.mxu0 %v4435
    %v4514 = vpop.f32.mrf.mxu0
    %v4515 = vadd.f32 0.0, %v4514
    %4516 = vdwg.mxu0
    %v4517 = vadd.f32 %v4396, %v4455
    %v4518 = vadd.f32 %v4397, %v4475
    %v4519 = vadd.f32 %v4398, %v4495
    %v4520 = vadd.f32 %v4399, %v4515
    %v4521 = vld [vmem:[#allocation3 + $0x22] sm:$0x3]
    %s4522 = scalar_lea.vmem %s6, 3584
    %v4523 = vld [vmem:[%s4522] sm:$0xff]
    %v4524 = vld [vmem:[%s4522 + $0x8] sm:$0xff]
    %v4525 = vld [vmem:[%s4522 + $0x10] sm:$0xff]
    %v4526 = vld [vmem:[%s4522 + $0x18] sm:$0xff]
    %v4527 = vld [vmem:[%s4522 + $0x20] sm:$0xff]
    %v4528 = vld [vmem:[%s4522 + $0x28] sm:$0xff]
    %v4529 = vld [vmem:[%s4522 + $0x30] sm:$0xff]
    %v4530 = vld [vmem:[%s4522 + $0x38] sm:$0xff]
    %v4531 = vld [vmem:[%s4522 + $0x40] sm:$0xff]
    %v4532 = vld [vmem:[%s4522 + $0x48] sm:$0xff]
    %v4533 = vld [vmem:[%s4522 + $0x50] sm:$0xff]
    %v4534 = vld [vmem:[%s4522 + $0x58] sm:$0xff]
    %v4535 = vld [vmem:[%s4522 + $0x60] sm:$0xff]
    %v4536 = vld [vmem:[%s4522 + $0x68] sm:$0xff]
    %v4537 = vld [vmem:[%s4522 + $0x70] sm:$0xff]
    %v4538 = vld [vmem:[%s4522 + $0x78] sm:$0xff]
    %v4539 = vld [vmem:[%s4522 + $0x80] sm:$0xff]
    %v4540 = vld [vmem:[%s4522 + $0x88] sm:$0xff]
    %v4541 = vld [vmem:[%s4522 + $0x90] sm:$0xff]
    %v4542 = vld [vmem:[%s4522 + $0x98] sm:$0xff]
    %v4543 = vld [vmem:[%s4522 + $0xa0] sm:$0xff]
    %v4544 = vld [vmem:[%s4522 + $0xa8] sm:$0xff]
    %v4545 = vld [vmem:[%s4522 + $0xb0] sm:$0xff]
    %v4546 = vld [vmem:[%s4522 + $0xb8] sm:$0xff]
    %v4547 = vld [vmem:[%s4522 + $0xc0] sm:$0xff]
    %v4548 = vld [vmem:[%s4522 + $0xc8] sm:$0xff]
    %v4549 = vld [vmem:[%s4522 + $0xd0] sm:$0xff]
    %v4550 = vld [vmem:[%s4522 + $0xd8] sm:$0xff]
    %v4551 = vld [vmem:[%s4522 + $0xe0] sm:$0xff]
    %v4552 = vld [vmem:[%s4522 + $0xe8] sm:$0xff]
    %v4553 = vld [vmem:[%s4522 + $0xf0] sm:$0xff]
    %v4554 = vld [vmem:[%s4522 + $0xf8] sm:$0xff]
    %v4556 = vsel %vm2829, %v4521, 0
    %4558 = vmatpush.msra.mxu0 0.0
    %4559 = vmatpush.msra.mxu0 0.0
    %4560 = vmatpush.msra.mxu0 0.0
    %4561 = vmatpush.msra.mxu0 0.0
    %4562 = vmatpush.msra.mxu0 0.0
    %4563 = vmatpush.msra.mxu0 0.0
    %4564 = vmatpush.msra.mxu0 0.0
    %4565 = vmatpush.msra.mxu0 0.0
    %4566 = vmatpush.msra.mxu0 %v4551
    %4567 = vmatpush.msra.mxu0 %v4547
    %4568 = vmatpush.msra.mxu0 %v4543
    %4569 = vmatpush.msra.mxu0 %v4539
    %4570 = vmatpush.msra.mxu0 %v4535
    %4571 = vmatpush.msra.mxu0 %v4531
    %4572 = vmatpush.msra.mxu0 %v4527
    %4573 = vmatpush.msra.mxu0 %v4523
    %4574 = vmatmul.f32.gmra.mxu0 %v4556
    %v4575 = vpop.f32.mrf.mxu0
    %v4576 = vadd.f32 0.0, %v4575
    %4577 = vdwg.mxu0
    %4578 = vmatpush.msra.mxu0 0.0
    %4579 = vmatpush.msra.mxu0 0.0
    %4580 = vmatpush.msra.mxu0 0.0
    %4581 = vmatpush.msra.mxu0 0.0
    %4582 = vmatpush.msra.mxu0 0.0
    %4583 = vmatpush.msra.mxu0 0.0
    %4584 = vmatpush.msra.mxu0 0.0
    %4585 = vmatpush.msra.mxu0 0.0
    %4586 = vmatpush.msra.mxu0 %v4552
    %4587 = vmatpush.msra.mxu0 %v4548
    %4588 = vmatpush.msra.mxu0 %v4544
    %4589 = vmatpush.msra.mxu0 %v4540
    %4590 = vmatpush.msra.mxu0 %v4536
    %4591 = vmatpush.msra.mxu0 %v4532
    %4592 = vmatpush.msra.mxu0 %v4528
    %4593 = vmatpush.msra.mxu0 %v4524
    %4594 = vmatmul.f32.gmra.mxu0 %v4556
    %v4595 = vpop.f32.mrf.mxu0
    %v4596 = vadd.f32 0.0, %v4595
    %4597 = vdwg.mxu0
    %4598 = vmatpush.msra.mxu0 0.0
    %4599 = vmatpush.msra.mxu0 0.0
    %4600 = vmatpush.msra.mxu0 0.0
    %4601 = vmatpush.msra.mxu0 0.0
    %4602 = vmatpush.msra.mxu0 0.0
    %4603 = vmatpush.msra.mxu0 0.0
    %4604 = vmatpush.msra.mxu0 0.0
    %4605 = vmatpush.msra.mxu0 0.0
    %4606 = vmatpush.msra.mxu0 %v4553
    %4607 = vmatpush.msra.mxu0 %v4549
    %4608 = vmatpush.msra.mxu0 %v4545
    %4609 = vmatpush.msra.mxu0 %v4541
    %4610 = vmatpush.msra.mxu0 %v4537
    %4611 = vmatpush.msra.mxu0 %v4533
    %4612 = vmatpush.msra.mxu0 %v4529
    %4613 = vmatpush.msra.mxu0 %v4525
    %4614 = vmatmul.f32.gmra.mxu0 %v4556
    %v4615 = vpop.f32.mrf.mxu0
    %v4616 = vadd.f32 0.0, %v4615
    %4617 = vdwg.mxu0
    %4618 = vmatpush.msra.mxu0 0.0
    %4619 = vmatpush.msra.mxu0 0.0
    %4620 = vmatpush.msra.mxu0 0.0
    %4621 = vmatpush.msra.mxu0 0.0
    %4622 = vmatpush.msra.mxu0 0.0
    %4623 = vmatpush.msra.mxu0 0.0
    %4624 = vmatpush.msra.mxu0 0.0
    %4625 = vmatpush.msra.mxu0 0.0
    %4626 = vmatpush.msra.mxu0 %v4554
    %4627 = vmatpush.msra.mxu0 %v4550
    %4628 = vmatpush.msra.mxu0 %v4546
    %4629 = vmatpush.msra.mxu0 %v4542
    %4630 = vmatpush.msra.mxu0 %v4538
    %4631 = vmatpush.msra.mxu0 %v4534
    %4632 = vmatpush.msra.mxu0 %v4530
    %4633 = vmatpush.msra.mxu0 %v4526
    %4634 = vmatmul.f32.gmra.mxu0 %v4556
    %v4635 = vpop.f32.mrf.mxu0
    %v4636 = vadd.f32 0.0, %v4635
    %4637 = vdwg.mxu0
    %v4638 = vadd.f32 %v4517, %v4576
    %v4639 = vadd.f32 %v4518, %v4596
    %v4640 = vadd.f32 %v4519, %v4616
    %v4641 = vadd.f32 %v4520, %v4636
    %v4642 = vld [vmem:[#allocation3 + $0x24] sm:$0x3]
    %s4643 = scalar_lea.vmem %s6, 3840
    %v4644 = vld [vmem:[%s4643] sm:$0xff]
    %v4645 = vld [vmem:[%s4643 + $0x8] sm:$0xff]
    %v4646 = vld [vmem:[%s4643 + $0x10] sm:$0xff]
    %v4647 = vld [vmem:[%s4643 + $0x18] sm:$0xff]
    %v4648 = vld [vmem:[%s4643 + $0x20] sm:$0xff]
    %v4649 = vld [vmem:[%s4643 + $0x28] sm:$0xff]
    %v4650 = vld [vmem:[%s4643 + $0x30] sm:$0xff]
    %v4651 = vld [vmem:[%s4643 + $0x38] sm:$0xff]
    %v4652 = vld [vmem:[%s4643 + $0x40] sm:$0xff]
    %v4653 = vld [vmem:[%s4643 + $0x48] sm:$0xff]
    %v4654 = vld [vmem:[%s4643 + $0x50] sm:$0xff]
    %v4655 = vld [vmem:[%s4643 + $0x58] sm:$0xff]
    %v4656 = vld [vmem:[%s4643 + $0x60] sm:$0xff]
    %v4657 = vld [vmem:[%s4643 + $0x68] sm:$0xff]
    %v4658 = vld [vmem:[%s4643 + $0x70] sm:$0xff]
    %v4659 = vld [vmem:[%s4643 + $0x78] sm:$0xff]
    %v4660 = vld [vmem:[%s4643 + $0x80] sm:$0xff]
    %v4661 = vld [vmem:[%s4643 + $0x88] sm:$0xff]
    %v4662 = vld [vmem:[%s4643 + $0x90] sm:$0xff]
    %v4663 = vld [vmem:[%s4643 + $0x98] sm:$0xff]
    %v4664 = vld [vmem:[%s4643 + $0xa0] sm:$0xff]
    %v4665 = vld [vmem:[%s4643 + $0xa8] sm:$0xff]
    %v4666 = vld [vmem:[%s4643 + $0xb0] sm:$0xff]
    %v4667 = vld [vmem:[%s4643 + $0xb8] sm:$0xff]
    %v4668 = vld [vmem:[%s4643 + $0xc0] sm:$0xff]
    %v4669 = vld [vmem:[%s4643 + $0xc8] sm:$0xff]
    %v4670 = vld [vmem:[%s4643 + $0xd0] sm:$0xff]
    %v4671 = vld [vmem:[%s4643 + $0xd8] sm:$0xff]
    %v4672 = vld [vmem:[%s4643 + $0xe0] sm:$0xff]
    %v4673 = vld [vmem:[%s4643 + $0xe8] sm:$0xff]
    %v4674 = vld [vmem:[%s4643 + $0xf0] sm:$0xff]
    %v4675 = vld [vmem:[%s4643 + $0xf8] sm:$0xff]
    %v4677 = vsel %vm2829, %v4642, 0
    %4679 = vmatpush.msra.mxu0 0.0
    %4680 = vmatpush.msra.mxu0 0.0
    %4681 = vmatpush.msra.mxu0 0.0
    %4682 = vmatpush.msra.mxu0 0.0
    %4683 = vmatpush.msra.mxu0 0.0
    %4684 = vmatpush.msra.mxu0 0.0
    %4685 = vmatpush.msra.mxu0 0.0
    %4686 = vmatpush.msra.mxu0 0.0
    %4687 = vmatpush.msra.mxu0 %v4672
    %4688 = vmatpush.msra.mxu0 %v4668
    %4689 = vmatpush.msra.mxu0 %v4664
    %4690 = vmatpush.msra.mxu0 %v4660
    %4691 = vmatpush.msra.mxu0 %v4656
    %4692 = vmatpush.msra.mxu0 %v4652
    %4693 = vmatpush.msra.mxu0 %v4648
    %4694 = vmatpush.msra.mxu0 %v4644
    %4695 = vmatmul.f32.gmra.mxu0 %v4677
    %v4696 = vpop.f32.mrf.mxu0
    %v4697 = vadd.f32 0.0, %v4696
    %4698 = vdwg.mxu0
    %4699 = vmatpush.msra.mxu0 0.0
    %4700 = vmatpush.msra.mxu0 0.0
    %4701 = vmatpush.msra.mxu0 0.0
    %4702 = vmatpush.msra.mxu0 0.0
    %4703 = vmatpush.msra.mxu0 0.0
    %4704 = vmatpush.msra.mxu0 0.0
    %4705 = vmatpush.msra.mxu0 0.0
    %4706 = vmatpush.msra.mxu0 0.0
    %4707 = vmatpush.msra.mxu0 %v4673
    %4708 = vmatpush.msra.mxu0 %v4669
    %4709 = vmatpush.msra.mxu0 %v4665
    %4710 = vmatpush.msra.mxu0 %v4661
    %4711 = vmatpush.msra.mxu0 %v4657
    %4712 = vmatpush.msra.mxu0 %v4653
    %4713 = vmatpush.msra.mxu0 %v4649
    %4714 = vmatpush.msra.mxu0 %v4645
    %4715 = vmatmul.f32.gmra.mxu0 %v4677
    %v4716 = vpop.f32.mrf.mxu0
    %v4717 = vadd.f32 0.0, %v4716
    %4718 = vdwg.mxu0
    %4719 = vmatpush.msra.mxu0 0.0
    %4720 = vmatpush.msra.mxu0 0.0
    %4721 = vmatpush.msra.mxu0 0.0
    %4722 = vmatpush.msra.mxu0 0.0
    %4723 = vmatpush.msra.mxu0 0.0
    %4724 = vmatpush.msra.mxu0 0.0
    %4725 = vmatpush.msra.mxu0 0.0
    %4726 = vmatpush.msra.mxu0 0.0
    %4727 = vmatpush.msra.mxu0 %v4674
    %4728 = vmatpush.msra.mxu0 %v4670
    %4729 = vmatpush.msra.mxu0 %v4666
    %4730 = vmatpush.msra.mxu0 %v4662
    %4731 = vmatpush.msra.mxu0 %v4658
    %4732 = vmatpush.msra.mxu0 %v4654
    %4733 = vmatpush.msra.mxu0 %v4650
    %4734 = vmatpush.msra.mxu0 %v4646
    %4735 = vmatmul.f32.gmra.mxu0 %v4677
    %v4736 = vpop.f32.mrf.mxu0
    %v4737 = vadd.f32 0.0, %v4736
    %4738 = vdwg.mxu0
    %4739 = vmatpush.msra.mxu0 0.0
    %4740 = vmatpush.msra.mxu0 0.0
    %4741 = vmatpush.msra.mxu0 0.0
    %4742 = vmatpush.msra.mxu0 0.0
    %4743 = vmatpush.msra.mxu0 0.0
    %4744 = vmatpush.msra.mxu0 0.0
    %4745 = vmatpush.msra.mxu0 0.0
    %4746 = vmatpush.msra.mxu0 0.0
    %4747 = vmatpush.msra.mxu0 %v4675
    %4748 = vmatpush.msra.mxu0 %v4671
    %4749 = vmatpush.msra.mxu0 %v4667
    %4750 = vmatpush.msra.mxu0 %v4663
    %4751 = vmatpush.msra.mxu0 %v4659
    %4752 = vmatpush.msra.mxu0 %v4655
    %4753 = vmatpush.msra.mxu0 %v4651
    %4754 = vmatpush.msra.mxu0 %v4647
    %4755 = vmatmul.f32.gmra.mxu0 %v4677
    %v4756 = vpop.f32.mrf.mxu0
    %v4757 = vadd.f32 0.0, %v4756
    %4758 = vdwg.mxu0
    %v4759 = vadd.f32 %v4638, %v4697
    %v4760 = vadd.f32 %v4639, %v4717
    %v4761 = vadd.f32 %v4640, %v4737
    %v4762 = vadd.f32 %v4641, %v4757
    %v4763 = vld [vmem:[%s7] sm:$0xf]
    %v4765 = vperm.slane %v4763, 0
    %v4766 = vperm.slane %v4763, 1
    %v4767 = vperm.slane %v4763, 2
    %v4768 = vperm.slane %v4763, 3
    %v4773 = vadd.f32 %v4759, %v4765
    %v4774 = vadd.f32 %v4760, %v4766
    %v4775 = vadd.f32 %v4761, %v4767
    %v4776 = vadd.f32 %v4762, %v4768
    %v4777 = vmax.f32 %v4773, 0.0
    %v4778 = vmax.f32 %v4774, 0.0
    %v4779 = vmax.f32 %v4775, 0.0
    %v4780 = vmax.f32 %v4776, 0.0
    %v4781 = vld [vmem:[%s8] sm:$0xff]
    %v4782 = vld [vmem:[%s8 + $0x8] sm:$0xff]
    %v4783 = vld [vmem:[%s8 + $0x10] sm:$0xff]
    %v4784 = vld [vmem:[%s8 + $0x18] sm:$0xff]
    %v4785 = vld [vmem:[%s8 + $0x20] sm:$0xff]
    %v4786 = vld [vmem:[%s8 + $0x28] sm:$0xff]
    %v4787 = vld [vmem:[%s8 + $0x30] sm:$0xff]
    %v4788 = vld [vmem:[%s8 + $0x38] sm:$0xff]
    %v4789 = vld [vmem:[%s8 + $0x40] sm:$0xff]
    %v4790 = vld [vmem:[%s8 + $0x48] sm:$0xff]
    %v4791 = vld [vmem:[%s8 + $0x50] sm:$0xff]
    %v4792 = vld [vmem:[%s8 + $0x58] sm:$0xff]
    %v4793 = vld [vmem:[%s8 + $0x60] sm:$0xff]
    %v4794 = vld [vmem:[%s8 + $0x68] sm:$0xff]
    %v4795 = vld [vmem:[%s8 + $0x70] sm:$0xff]
    %v4796 = vld [vmem:[%s8 + $0x78] sm:$0xff]
    %v4797 = vld [vmem:[%s8 + $0x80] sm:$0xff]
    %v4798 = vld [vmem:[%s8 + $0x88] sm:$0xff]
    %v4799 = vld [vmem:[%s8 + $0x90] sm:$0xff]
    %v4800 = vld [vmem:[%s8 + $0x98] sm:$0xff]
    %v4801 = vld [vmem:[%s8 + $0xa0] sm:$0xff]
    %v4802 = vld [vmem:[%s8 + $0xa8] sm:$0xff]
    %v4803 = vld [vmem:[%s8 + $0xb0] sm:$0xff]
    %v4804 = vld [vmem:[%s8 + $0xb8] sm:$0xff]
    %v4805 = vld [vmem:[%s8 + $0xc0] sm:$0xff]
    %v4806 = vld [vmem:[%s8 + $0xc8] sm:$0xff]
    %v4807 = vld [vmem:[%s8 + $0xd0] sm:$0xff]
    %v4808 = vld [vmem:[%s8 + $0xd8] sm:$0xff]
    %v4809 = vld [vmem:[%s8 + $0xe0] sm:$0xff]
    %v4810 = vld [vmem:[%s8 + $0xe8] sm:$0xff]
    %v4811 = vld [vmem:[%s8 + $0xf0] sm:$0xff]
    %v4812 = vld [vmem:[%s8 + $0xf8] sm:$0xff]
    %v4813 = vld [vmem:[%s8 + $0x100] sm:$0xff]
    %v4814 = vld [vmem:[%s8 + $0x108] sm:$0xff]
    %v4815 = vld [vmem:[%s8 + $0x110] sm:$0xff]
    %v4816 = vld [vmem:[%s8 + $0x118] sm:$0xff]
    %v4817 = vld [vmem:[%s8 + $0x120] sm:$0xff]
    %v4818 = vld [vmem:[%s8 + $0x128] sm:$0xff]
    %v4819 = vld [vmem:[%s8 + $0x130] sm:$0xff]
    %v4820 = vld [vmem:[%s8 + $0x138] sm:$0xff]
    %v4821 = vld [vmem:[%s8 + $0x140] sm:$0xff]
    %v4822 = vld [vmem:[%s8 + $0x148] sm:$0xff]
    %v4823 = vld [vmem:[%s8 + $0x150] sm:$0xff]
    %v4824 = vld [vmem:[%s8 + $0x158] sm:$0xff]
    %v4825 = vld [vmem:[%s8 + $0x160] sm:$0xff]
    %v4826 = vld [vmem:[%s8 + $0x168] sm:$0xff]
    %v4827 = vld [vmem:[%s8 + $0x170] sm:$0xff]
    %v4828 = vld [vmem:[%s8 + $0x178] sm:$0xff]
    %v4829 = vld [vmem:[%s8 + $0x180] sm:$0xff]
    %v4830 = vld [vmem:[%s8 + $0x188] sm:$0xff]
    %v4831 = vld [vmem:[%s8 + $0x190] sm:$0xff]
    %v4832 = vld [vmem:[%s8 + $0x198] sm:$0xff]
    %v4833 = vld [vmem:[%s8 + $0x1a0] sm:$0xff]
    %v4834 = vld [vmem:[%s8 + $0x1a8] sm:$0xff]
    %v4835 = vld [vmem:[%s8 + $0x1b0] sm:$0xff]
    %v4836 = vld [vmem:[%s8 + $0x1b8] sm:$0xff]
    %v4837 = vld [vmem:[%s8 + $0x1c0] sm:$0xff]
    %v4838 = vld [vmem:[%s8 + $0x1c8] sm:$0xff]
    %v4839 = vld [vmem:[%s8 + $0x1d0] sm:$0xff]
    %v4840 = vld [vmem:[%s8 + $0x1d8] sm:$0xff]
    %v4841 = vld [vmem:[%s8 + $0x1e0] sm:$0xff]
    %v4842 = vld [vmem:[%s8 + $0x1e8] sm:$0xff]
    %v4843 = vld [vmem:[%s8 + $0x1f0] sm:$0xff]
    %v4844 = vld [vmem:[%s8 + $0x1f8] sm:$0xff]
    %v4845 = vld [vmem:[%s9] sm:$0x1]
    %v4847 = vperm.slane %v4845, 0
    %4849 = vmatpush.msra.mxu0 %v4796
    %4850 = vmatpush.msra.mxu0 %v4795
    %4851 = vmatpush.msra.mxu0 %v4794
    %4852 = vmatpush.msra.mxu0 %v4793
    %4853 = vmatpush.msra.mxu0 %v4792
    %4854 = vmatpush.msra.mxu0 %v4791
    %4855 = vmatpush.msra.mxu0 %v4790
    %4856 = vmatpush.msra.mxu0 %v4789
    %4857 = vmatpush.msra.mxu0 %v4788
    %4858 = vmatpush.msra.mxu0 %v4787
    %4859 = vmatpush.msra.mxu0 %v4786
    %4860 = vmatpush.msra.mxu0 %v4785
    %4861 = vmatpush.msra.mxu0 %v4784
    %4862 = vmatpush.msra.mxu0 %v4783
    %4863 = vmatpush.msra.mxu0 %v4782
    %4864 = vmatpush.msra.mxu0 %v4781
    %4865 = vmatmul.f32.gmra.mxu0 %v4777
    %v4866 = vpop.f32.mrf.mxu0
    %v4867 = vadd.f32 %v4847, %v4866
    %4868 = vdwg.mxu0
    %4869 = vmatpush.msra.mxu0 %v4812
    %4870 = vmatpush.msra.mxu0 %v4811
    %4871 = vmatpush.msra.mxu0 %v4810
    %4872 = vmatpush.msra.mxu0 %v4809
    %4873 = vmatpush.msra.mxu0 %v4808
    %4874 = vmatpush.msra.mxu0 %v4807
    %4875 = vmatpush.msra.mxu0 %v4806
    %4876 = vmatpush.msra.mxu0 %v4805
    %4877 = vmatpush.msra.mxu0 %v4804
    %4878 = vmatpush.msra.mxu0 %v4803
    %4879 = vmatpush.msra.mxu0 %v4802
    %4880 = vmatpush.msra.mxu0 %v4801
    %4881 = vmatpush.msra.mxu0 %v4800
    %4882 = vmatpush.msra.mxu0 %v4799
    %4883 = vmatpush.msra.mxu0 %v4798
    %4884 = vmatpush.msra.mxu0 %v4797
    %4885 = vmatmul.f32.gmra.mxu0 %v4778
    %v4886 = vpop.f32.mrf.mxu0
    %v4887 = vadd.f32 %v4867, %v4886
    %4888 = vdwg.mxu0
    %4889 = vmatpush.msra.mxu0 %v4828
    %4890 = vmatpush.msra.mxu0 %v4827
    %4891 = vmatpush.msra.mxu0 %v4826
    %4892 = vmatpush.msra.mxu0 %v4825
    %4893 = vmatpush.msra.mxu0 %v4824
    %4894 = vmatpush.msra.mxu0 %v4823
    %4895 = vmatpush.msra.mxu0 %v4822
    %4896 = vmatpush.msra.mxu0 %v4821
    %4897 = vmatpush.msra.mxu0 %v4820
    %4898 = vmatpush.msra.mxu0 %v4819
    %4899 = vmatpush.msra.mxu0 %v4818
    %4900 = vmatpush.msra.mxu0 %v4817
    %4901 = vmatpush.msra.mxu0 %v4816
    %4902 = vmatpush.msra.mxu0 %v4815
    %4903 = vmatpush.msra.mxu0 %v4814
    %4904 = vmatpush.msra.mxu0 %v4813
    %4905 = vmatmul.f32.gmra.mxu0 %v4779
    %v4906 = vpop.f32.mrf.mxu0
    %v4907 = vadd.f32 %v4887, %v4906
    %4908 = vdwg.mxu0
    %4909 = vmatpush.msra.mxu0 %v4844
    %4910 = vmatpush.msra.mxu0 %v4843
    %4911 = vmatpush.msra.mxu0 %v4842
    %4912 = vmatpush.msra.mxu0 %v4841
    %4913 = vmatpush.msra.mxu0 %v4840
    %4914 = vmatpush.msra.mxu0 %v4839
    %4915 = vmatpush.msra.mxu0 %v4838
    %4916 = vmatpush.msra.mxu0 %v4837
    %4917 = vmatpush.msra.mxu0 %v4836
    %4918 = vmatpush.msra.mxu0 %v4835
    %4919 = vmatpush.msra.mxu0 %v4834
    %4920 = vmatpush.msra.mxu0 %v4833
    %4921 = vmatpush.msra.mxu0 %v4832
    %4922 = vmatpush.msra.mxu0 %v4831
    %4923 = vmatpush.msra.mxu0 %v4830
    %4924 = vmatpush.msra.mxu0 %v4829
    %4925 = vmatmul.f32.gmra.mxu0 %v4780
    %v4926 = vpop.f32.mrf.mxu0
    %v4927 = vadd.f32 %v4907, %v4926
    %4928 = vdwg.mxu0
    %vm4929 = vcmask 197632
    %4930 = vst.msk [vmem:[#allocation4] sm:$0x3] %vm4929, %v4927
    // Predicated region
    $region42: #{cnn_forward.1} parent=1 // pred_check
      _
    $region43: #{cnn_forward.1} parent=1 // pred_check_branch
      %4932 = sbr.rel (0) target = $region45
    $region44: #{cnn_forward.1} parent=1 // pred_region
      %4934 = vsyncadd [#allocation5], 0
      %s4936 = sshll.u32 [#allocation4], 4
      %s4937 = int_to_ptr.vmem [resolvable:$true] %s4936
      %s4938 = sshll.u32 %s10, 4
      %s4939 = int_to_ptr.hbm [resolvable:$true] %s4938
      %4941 = dma.vmem_to_hbm [thread:$0]  %s4937, 32, %s4939, [#allocation5]
    $region45: #{cnn_forward.1} parent=1 // pred_fallthru
      _
    // Predicated region
    $region46: #{cnn_forward.1} parent=1 // pred_check
      _
    $region47: #{cnn_forward.1} parent=1 // pred_check_branch
      %4943 = sbr.rel (0) target = $region49
    $region48: #{cnn_forward.1} parent=1 // pred_region
      %4945 = dma.done [#allocation5], 32
    $region49: #{cnn_forward.1} parent=1 // pred_fallthru
      _
    %4946 = vsyncpa [#allocation5], 1

</llo_original>
